<compile_context>
chip_gen: v5e
topology: v5e:2x2
jax: 0.10.0
libtpu: 0.0.40
codegen_flags: <defaults>
</compile_context>

<pallas_src>
import functools
import math

import jax
import jax.numpy as jnp
from jax.experimental import pallas as pl
from jax.experimental.pallas import tpu as pltpu

NUM_CLASSES = (3, 2, 3)   # (mask, gender, age)
NCP = 128                 # class dim padded to a full 128-lane tile


# -----------------------------------------------------------------------------
# Kernel: one full classifier head per grid step
#   L x (3x3 "same" conv + bias + ReLU)  ->  global average pool  ->  FC
# -----------------------------------------------------------------------------
def head_kernel(x_ref, cw_ref, cb_ref, fw_ref, fb_ref, o_ref, pad_ref,
                *, B, H, W, C, L):
    # x_ref  : (B, H, W, C)       bf16  backbone feature map (same for all heads)
    # cw_ref : (1, L, 9*C, C)     bf16  im2col conv weights (tap-major rows)
    # cb_ref : (1, L, 1, C)       f32   conv biases
    # fw_ref : (1, C, NCP)        f32   FC weight, classes zero-padded to NCP
    # fb_ref : (1, 1, NCP)        f32   FC bias,   classes zero-padded to NCP
    # o_ref  : (1, B, NCP)        f32   padded logits for this head
    # pad_ref: (B, H+2, W+2, C)   f32   VMEM halo-padded activation scratch

    # In-kernel halo padding: zero the scratch (halo stays zero), copy interior.
    pad_ref[...] = jnp.zeros_like(pad_ref)
    pad_ref[:, 1:H + 1, 1:W + 1, :] = x_ref[...].astype(jnp.float32)

    inv_hw = 1.0 / float(H * W)
    acc = None
    for l in range(L):
        # im2col: 9 statically-shifted patches concatenated along channels,
        # then a single MXU matmul with K = 9*C and M = B*H*W.
        cols = [pad_ref[:, dy:dy + H, dx:dx + W, :]
                for dy in range(3) for dx in range(3)]
        lhs = jnp.concatenate(cols, axis=-1).reshape(B * H * W, 9 * C)
        acc = jnp.dot(lhs.astype(jnp.bfloat16), cw_ref[0, l],
                      preferred_element_type=jnp.float32)            # (B*H*W, C)
        acc = jnp.maximum(acc + cb_ref[0, l], 0.0)                    # bias + ReLU
        if l < L - 1:
            # Write back into the interior for the next layer (halo stays 0).
            pad_ref[:, 1:H + 1, 1:W + 1, :] = acc.reshape(B, H, W, C)

    # Fused global-average-pool + FC on the last layer's f32 activations.
    pooled = acc.reshape(B, H * W, C).sum(axis=1) * inv_hw            # (B, C)
    logits = jnp.dot(pooled, fw_ref[0], preferred_element_type=jnp.float32)
    o_ref[0] = logits + fb_ref[0]                                     # (B, NCP)


def fused_heads(x_nhwc_bf16, cw, cb, fw, fb):
    """x: (B,H,W,C) bf16; cw: (NH,L,9C,C) bf16; cb: (NH,L,1,C); fw: (NH,C,NCP);
    fb: (NH,1,NCP)  ->  (NH, B, NCP) f32 padded logits."""
    B, H, W, C = x_nhwc_bf16.shape
    NH, L, K9C, _ = cw.shape
    kern = functools.partial(head_kernel, B=B, H=H, W=W, C=C, L=L)
    return pl.pallas_call(
        kern,
        out_shape=jax.ShapeDtypeStruct((NH, B, NCP), jnp.float32),
        grid=(NH,),
        in_specs=[
            pl.BlockSpec((B, H, W, C), lambda h: (0, 0, 0, 0)),
            pl.BlockSpec((1, L, K9C, C), lambda h: (h, 0, 0, 0)),
            pl.BlockSpec((1, L, 1, C), lambda h: (h, 0, 0, 0)),
            pl.BlockSpec((1, C, NCP), lambda h: (h, 0, 0)),
            pl.BlockSpec((1, 1, NCP), lambda h: (h, 0, 0)),
        ],
        out_specs=pl.BlockSpec((1, B, NCP), lambda h: (h, 0, 0)),
        scratch_shapes=[pltpu.VMEM((B, H + 2, W + 2, C), jnp.float32)],
        compiler_params=pltpu.CompilerParams(
            dimension_semantics=("parallel",)),   # head axis -> v7x megacore
    )(x_nhwc_bf16, cw, cb, fw, fb)


# -----------------------------------------------------------------------------
# Parameter construction (mirrors the PyTorch init) and model wrapper
# -----------------------------------------------------------------------------
def make_head_params(key, in_channels, num_classes, num_layers=3):
    C = in_channels
    keys = jax.random.split(key, 2 * num_layers + 1)
    std = math.sqrt(2.0 / (3 * 3 * C))        # conv weight: normal(0, sqrt(2/n))
    b_bound = 1.0 / math.sqrt(C * 9)          # nn.Conv2d default bias init
    conv_w, conv_b = [], []
    for l in range(num_layers):
        w = std * jax.random.normal(keys[2 * l], (3, 3, C, C), jnp.float32)
        conv_w.append(w.reshape(9 * C, C))    # tap-major im2col layout
        conv_b.append(jax.random.uniform(keys[2 * l + 1], (C,), jnp.float32,
                                         -b_bound, b_bound))
    limit = math.sqrt(6.0 / (C + num_classes))        # xavier_uniform_
    fc_w = jax.random.uniform(keys[-1], (C, num_classes), jnp.float32,
                              -limit, limit)
    fc_b = jnp.full((num_classes,), 0.01, jnp.float32)
    return dict(conv_w=jnp.stack(conv_w),     # (L, 9C, C)
                conv_b=jnp.stack(conv_b),     # (L, C)
                fc_w=fc_w, fc_b=fc_b)


def stack_heads(head_params):
    cw = jnp.stack([p["conv_w"] for p in head_params]).astype(jnp.bfloat16)
    cb = jnp.stack([p["conv_b"] for p in head_params])[:, :, None, :]
    fw = jnp.stack([jnp.pad(p["fc_w"], ((0, 0), (0, NCP - p["fc_w"].shape[1])))
                    for p in head_params])
    fb = jnp.stack([jnp.pad(p["fc_b"], (0, NCP - p["fc_b"].shape[0]))[None, :]
                    for p in head_params])
    return cw, cb, fw, fb


def custom_model_forward(features_nchw, cw, cb, fw, fb):
    # PyTorch backbone features are NCHW -> NHWC bf16 for the TPU kernel.
    x = jnp.transpose(features_nchw, (0, 2, 3, 1)).astype(jnp.bfloat16)
    out = fused_heads(x, cw, cb, fw, fb)              # (3, B, NCP) f32
    mask = out[0, :, :NUM_CLASSES[0]]
    gender = out[1, :, :NUM_CLASSES[1]]
    age = out[2, :, :NUM_CLASSES[2]]
    return mask, gender, age


if __name__ == "__main__":
    # Small synthetic shapes: batch=2, channels=32 (stand-in for 1280),
    # spatial=8x8 backbone feature map.
    B, C, H, W = 2, 32, 8, 8

    root = jax.random.PRNGKey(0)
    k_feat, k_mask, k_gender, k_age = jax.random.split(root, 4)

    features = jax.random.normal(k_feat, (B, C, H, W), jnp.float32)  # NCHW

    heads = [
        make_head_params(k_mask, C, num_classes=NUM_CLASSES[0]),
        make_head_params(k_gender, C, num_classes=NUM_CLASSES[1]),
        make_head_params(k_age, C, num_classes=NUM_CLASSES[2]),
    ]
    cw, cb, fw, fb = stack_heads(heads)

    fwd = jax.jit(custom_model_forward)
    mask, gender, age = fwd(features, cw, cb, fw, fb)
    jax.block_until_ready((mask, gender, age))

    assert mask.shape == (B, 3)
    assert gender.shape == (B, 2)
    assert age.shape == (B, 3)
    print("KERNEL_OK")
</pallas_src>

<mosaic_0001>
module attributes {stable_mosaic.version = 11 : i64} {
  func.func @head_kernel(%arg0: i32, %arg1: memref<2x8x8x32xbf16, #tpu.memory_space<vmem>>, %arg2: memref<1x3x288x32xbf16, #tpu.memory_space<vmem>>, %arg3: memref<1x3x1x32xf32, #tpu.memory_space<vmem>>, %arg4: memref<1x32x128xf32, #tpu.memory_space<vmem>>, %arg5: memref<1x1x128xf32, #tpu.memory_space<vmem>>, %arg6: memref<1x2x128xf32, #tpu.memory_space<vmem>>, %arg7: memref<2x10x10x32xf32, #tpu.memory_space<vmem>>) attributes {dimension_semantics = [#tpu.dimension_semantics<parallel>], iteration_bounds = array<i64: 3>, scalar_prefetch = 0 : i64, scratch_operands = 1 : i64, tpu.core_type = #tpu.core_type<tc>, window_params = [{pipeline_mode = #tpu.pipeline_mode<synchronous>, transform_indices = @transform_0, window_bounds = array<i64: 2, 8, 8, 32>}, {transform_indices = @transform_1, window_bounds = array<i64: 1, 3, 288, 32>}, {transform_indices = @transform_2, window_bounds = array<i64: 1, 3, 1, 32>}, {transform_indices = @transform_3, window_bounds = array<i64: 1, 32, 128>}, {transform_indices = @transform_4, window_bounds = array<i64: 1, 1, 128>}, {transform_indices = @transform_5, window_bounds = array<i64: 1, 2, 128>}]} {
    %cst = arith.constant 0.000000e+00 : f32
    %0 = vector.broadcast %cst : f32 to vector<2x10x10x32xf32>
    %c0 = arith.constant 0 : index
    %c0_0 = arith.constant 0 : index
    %c0_1 = arith.constant 0 : index
    %c0_2 = arith.constant 0 : index
    %1 = vector.load %arg7[%c0, %c0_0, %c0_1, %c0_2] : memref<2x10x10x32xf32, #tpu.memory_space<vmem>>, vector<2x10x10x32xf32>
    tpu.vector_store %arg7[%c0, %c0_0, %c0_1, %c0_2], %0 {strides = array<i32>} : memref<2x10x10x32xf32, #tpu.memory_space<vmem>>, vector<2x10x10x32xf32>,
    %c0_3 = arith.constant 0 : index
    %c0_4 = arith.constant 0 : index
    %c0_5 = arith.constant 0 : index
    %c0_6 = arith.constant 0 : index
    %2 = vector.load %arg1[%c0_3, %c0_4, %c0_5, %c0_6] : memref<2x8x8x32xbf16, #tpu.memory_space<vmem>>, vector<2x8x8x32xbf16>
    %3 = arith.extf %2 : vector<2x8x8x32xbf16> to vector<2x8x8x32xf32>
    %c0_7 = arith.constant 0 : index
    %c1 = arith.constant 1 : index
    %c1_8 = arith.constant 1 : index
    %c0_9 = arith.constant 0 : index
    %4 = vector.load %arg7[%c0_7, %c1, %c1_8, %c0_9] : memref<2x10x10x32xf32, #tpu.memory_space<vmem>>, vector<2x8x8x32xf32>
    tpu.vector_store %arg7[%c0_7, %c1, %c1_8, %c0_9], %3 {strides = array<i32>} : memref<2x10x10x32xf32, #tpu.memory_space<vmem>>, vector<2x8x8x32xf32>,
    %c0_10 = arith.constant 0 : index
    %c0_11 = arith.constant 0 : index
    %c0_12 = arith.constant 0 : index
    %c0_13 = arith.constant 0 : index
    %5 = vector.load %arg7[%c0_10, %c0_11, %c0_12, %c0_13] : memref<2x10x10x32xf32, #tpu.memory_space<vmem>>, vector<2x8x8x32xf32>
    %c0_14 = arith.constant 0 : index
    %c0_15 = arith.constant 0 : index
    %c1_16 = arith.constant 1 : index
    %c0_17 = arith.constant 0 : index
    %6 = vector.load %arg7[%c0_14, %c0_15, %c1_16, %c0_17] : memref<2x10x10x32xf32, #tpu.memory_space<vmem>>, vector<2x8x8x32xf32>
    %c0_18 = arith.constant 0 : index
    %c0_19 = arith.constant 0 : index
    %c2 = arith.constant 2 : index
    %c0_20 = arith.constant 0 : index
    %7 = vector.load %arg7[%c0_18, %c0_19, %c2, %c0_20] : memref<2x10x10x32xf32, #tpu.memory_space<vmem>>, vector<2x8x8x32xf32>
    %c0_21 = arith.constant 0 : index
    %c1_22 = arith.constant 1 : index
    %c0_23 = arith.constant 0 : index
    %c0_24 = arith.constant 0 : index
    %8 = vector.load %arg7[%c0_21, %c1_22, %c0_23, %c0_24] : memref<2x10x10x32xf32, #tpu.memory_space<vmem>>, vector<2x8x8x32xf32>
    %c0_25 = arith.constant 0 : index
    %c1_26 = arith.constant 1 : index
    %c1_27 = arith.constant 1 : index
    %c0_28 = arith.constant 0 : index
    %9 = vector.load %arg7[%c0_25, %c1_26, %c1_27, %c0_28] : memref<2x10x10x32xf32, #tpu.memory_space<vmem>>, vector<2x8x8x32xf32>
    %c0_29 = arith.constant 0 : index
    %c1_30 = arith.constant 1 : index
    %c2_31 = arith.constant 2 : index
    %c0_32 = arith.constant 0 : index
    %10 = vector.load %arg7[%c0_29, %c1_30, %c2_31, %c0_32] : memref<2x10x10x32xf32, #tpu.memory_space<vmem>>, vector<2x8x8x32xf32>
    %c0_33 = arith.constant 0 : index
    %c2_34 = arith.constant 2 : index
    %c0_35 = arith.constant 0 : index
    %c0_36 = arith.constant 0 : index
    %11 = vector.load %arg7[%c0_33, %c2_34, %c0_35, %c0_36] : memref<2x10x10x32xf32, #tpu.memory_space<vmem>>, vector<2x8x8x32xf32>
    %c0_37 = arith.constant 0 : index
    %c2_38 = arith.constant 2 : index
    %c1_39 = arith.constant 1 : index
    %c0_40 = arith.constant 0 : index
    %12 = vector.load %arg7[%c0_37, %c2_38, %c1_39, %c0_40] : memref<2x10x10x32xf32, #tpu.memory_space<vmem>>, vector<2x8x8x32xf32>
    %c0_41 = arith.constant 0 : index
    %c2_42 = arith.constant 2 : index
    %c2_43 = arith.constant 2 : index
    %c0_44 = arith.constant 0 : index
    %13 = vector.load %arg7[%c0_41, %c2_42, %c2_43, %c0_44] : memref<2x10x10x32xf32, #tpu.memory_space<vmem>>, vector<2x8x8x32xf32>
    %14 = tpu.concatenate %5, %6, %7, %8, %9, %10, %11, %12, %13 in 3 : vector<2x8x8x32xf32>, vector<2x8x8x32xf32>, vector<2x8x8x32xf32>, vector<2x8x8x32xf32>, vector<2x8x8x32xf32>, vector<2x8x8x32xf32>, vector<2x8x8x32xf32>, vector<2x8x8x32xf32>, vector<2x8x8x32xf32> -> vector<2x8x8x288xf32>
    %15 = vector.shape_cast %14 : vector<2x8x8x288xf32> to vector<128x288xf32>
    %16 = arith.truncf %15 : vector<128x288xf32> to vector<128x288xbf16>
    %c0_45 = arith.constant 0 : index
    %c0_46 = arith.constant 0 : index
    %c0_47 = arith.constant 0 : index
    %c0_48 = arith.constant 0 : index
    %17 = vector.load %arg2[%c0_45, %c0_46, %c0_47, %c0_48] : memref<1x3x288x32xbf16, #tpu.memory_space<vmem>>, vector<1x1x288x32xbf16>
    %18 = vector.shape_cast %17 : vector<1x1x288x32xbf16> to vector<288x32xbf16>
    %cst_49 = arith.constant dense<0.000000e+00> : vector<128x32xf32>
    %19 = tpu.matmul %16, %18, %cst_49 {dimension_numbers = #tpu.dot_dimension_numbers<[1], [0], [0], [1], [0, 0, 1, 1], [], []>} : vector<128x288xbf16>, vector<288x32xbf16>, vector<128x32xf32> -> vector<128x32xf32>
    %c0_50 = arith.constant 0 : index
    %c0_51 = arith.constant 0 : index
    %c0_52 = arith.constant 0 : index
    %c0_53 = arith.constant 0 : index
    %20 = vector.load %arg3[%c0_50, %c0_51, %c0_52, %c0_53] : memref<1x3x1x32xf32, #tpu.memory_space<vmem>>, vector<1x1x1x32xf32>
    %21 = vector.shape_cast %20 : vector<1x1x1x32xf32> to vector<1x32xf32>
    %22 = vector.broadcast %21 : vector<1x32xf32> to vector<128x32xf32>
    %23 = arith.addf %19, %22 : vector<128x32xf32>
    %cst_54 = arith.constant 0.000000e+00 : f32
    %24 = vector.broadcast %cst_54 : f32 to vector<128x32xf32>
    %25 = arith.maximumf %23, %24 : vector<128x32xf32>
    %26 = vector.shape_cast %25 : vector<128x32xf32> to vector<2x8x8x32xf32>
    %c0_55 = arith.constant 0 : index
    %c1_56 = arith.constant 1 : index
    %c1_57 = arith.constant 1 : index
    %c0_58 = arith.constant 0 : index
    %27 = vector.load %arg7[%c0_55, %c1_56, %c1_57, %c0_58] : memref<2x10x10x32xf32, #tpu.memory_space<vmem>>, vector<2x8x8x32xf32>
    tpu.vector_store %arg7[%c0_55, %c1_56, %c1_57, %c0_58], %26 {strides = array<i32>} : memref<2x10x10x32xf32, #tpu.memory_space<vmem>>, vector<2x8x8x32xf32>,
    %c0_59 = arith.constant 0 : index
    %c0_60 = arith.constant 0 : index
    %c0_61 = arith.constant 0 : index
    %c0_62 = arith.constant 0 : index
    %28 = vector.load %arg7[%c0_59, %c0_60, %c0_61, %c0_62] : memref<2x10x10x32xf32, #tpu.memory_space<vmem>>, vector<2x8x8x32xf32>
    %c0_63 = arith.constant 0 : index
    %c0_64 = arith.constant 0 : index
    %c1_65 = arith.constant 1 : index
    %c0_66 = arith.constant 0 : index
    %29 = vector.load %arg7[%c0_63, %c0_64, %c1_65, %c0_66] : memref<2x10x10x32xf32, #tpu.memory_space<vmem>>, vector<2x8x8x32xf32>
    %c0_67 = arith.constant 0 : index
    %c0_68 = arith.constant 0 : index
    %c2_69 = arith.constant 2 : index
    %c0_70 = arith.constant 0 : index
    %30 = vector.load %arg7[%c0_67, %c0_68, %c2_69, %c0_70] : memref<2x10x10x32xf32, #tpu.memory_space<vmem>>, vector<2x8x8x32xf32>
    %c0_71 = arith.constant 0 : index
    %c1_72 = arith.constant 1 : index
    %c0_73 = arith.constant 0 : index
    %c0_74 = arith.constant 0 : index
    %31 = vector.load %arg7[%c0_71, %c1_72, %c0_73, %c0_74] : memref<2x10x10x32xf32, #tpu.memory_space<vmem>>, vector<2x8x8x32xf32>
    %c0_75 = arith.constant 0 : index
    %c1_76 = arith.constant 1 : index
    %c1_77 = arith.constant 1 : index
    %c0_78 = arith.constant 0 : index
    %32 = vector.load %arg7[%c0_75, %c1_76, %c1_77, %c0_78] : memref<2x10x10x32xf32, #tpu.memory_space<vmem>>, vector<2x8x8x32xf32>
    %c0_79 = arith.constant 0 : index
    %c1_80 = arith.constant 1 : index
    %c2_81 = arith.constant 2 : index
    %c0_82 = arith.constant 0 : index
    %33 = vector.load %arg7[%c0_79, %c1_80, %c2_81, %c0_82] : memref<2x10x10x32xf32, #tpu.memory_space<vmem>>, vector<2x8x8x32xf32>
    %c0_83 = arith.constant 0 : index
    %c2_84 = arith.constant 2 : index
    %c0_85 = arith.constant 0 : index
    %c0_86 = arith.constant 0 : index
    %34 = vector.load %arg7[%c0_83, %c2_84, %c0_85, %c0_86] : memref<2x10x10x32xf32, #tpu.memory_space<vmem>>, vector<2x8x8x32xf32>
    %c0_87 = arith.constant 0 : index
    %c2_88 = arith.constant 2 : index
    %c1_89 = arith.constant 1 : index
    %c0_90 = arith.constant 0 : index
    %35 = vector.load %arg7[%c0_87, %c2_88, %c1_89, %c0_90] : memref<2x10x10x32xf32, #tpu.memory_space<vmem>>, vector<2x8x8x32xf32>
    %c0_91 = arith.constant 0 : index
    %c2_92 = arith.constant 2 : index
    %c2_93 = arith.constant 2 : index
    %c0_94 = arith.constant 0 : index
    %36 = vector.load %arg7[%c0_91, %c2_92, %c2_93, %c0_94] : memref<2x10x10x32xf32, #tpu.memory_space<vmem>>, vector<2x8x8x32xf32>
    %37 = tpu.concatenate %28, %29, %30, %31, %32, %33, %34, %35, %36 in 3 : vector<2x8x8x32xf32>, vector<2x8x8x32xf32>, vector<2x8x8x32xf32>, vector<2x8x8x32xf32>, vector<2x8x8x32xf32>, vector<2x8x8x32xf32>, vector<2x8x8x32xf32>, vector<2x8x8x32xf32>, vector<2x8x8x32xf32> -> vector<2x8x8x288xf32>
    %38 = vector.shape_cast %37 : vector<2x8x8x288xf32> to vector<128x288xf32>
    %39 = arith.truncf %38 : vector<128x288xf32> to vector<128x288xbf16>
    %c0_95 = arith.constant 0 : index
    %c1_96 = arith.constant 1 : index
    %c0_97 = arith.constant 0 : index
    %c0_98 = arith.constant 0 : index
    %40 = vector.load %arg2[%c0_95, %c1_96, %c0_97, %c0_98] : memref<1x3x288x32xbf16, #tpu.memory_space<vmem>>, vector<1x1x288x32xbf16>
    %41 = vector.shape_cast %40 : vector<1x1x288x32xbf16> to vector<288x32xbf16>
    %cst_99 = arith.constant dense<0.000000e+00> : vector<128x32xf32>
    %42 = tpu.matmul %39, %41, %cst_99 {dimension_numbers = #tpu.dot_dimension_numbers<[1], [0], [0], [1], [0, 0, 1, 1], [], []>} : vector<128x288xbf16>, vector<288x32xbf16>, vector<128x32xf32> -> vector<128x32xf32>
    %c0_100 = arith.constant 0 : index
    %c1_101 = arith.constant 1 : index
    %c0_102 = arith.constant 0 : index
    %c0_103 = arith.constant 0 : index
    %43 = vector.load %arg3[%c0_100, %c1_101, %c0_102, %c0_103] : memref<1x3x1x32xf32, #tpu.memory_space<vmem>>, vector<1x1x1x32xf32>
    %44 = vector.shape_cast %43 : vector<1x1x1x32xf32> to vector<1x32xf32>
    %45 = vector.broadcast %44 : vector<1x32xf32> to vector<128x32xf32>
    %46 = arith.addf %42, %45 : vector<128x32xf32>
    %cst_104 = arith.constant 0.000000e+00 : f32
    %47 = vector.broadcast %cst_104 : f32 to vector<128x32xf32>
    %48 = arith.maximumf %46, %47 : vector<128x32xf32>
    %49 = vector.shape_cast %48 : vector<128x32xf32> to vector<2x8x8x32xf32>
    %c0_105 = arith.constant 0 : index
    %c1_106 = arith.constant 1 : index
    %c1_107 = arith.constant 1 : index
    %c0_108 = arith.constant 0 : index
    %50 = vector.load %arg7[%c0_105, %c1_106, %c1_107, %c0_108] : memref<2x10x10x32xf32, #tpu.memory_space<vmem>>, vector<2x8x8x32xf32>
    tpu.vector_store %arg7[%c0_105, %c1_106, %c1_107, %c0_108], %49 {strides = array<i32>} : memref<2x10x10x32xf32, #tpu.memory_space<vmem>>, vector<2x8x8x32xf32>,
    %c0_109 = arith.constant 0 : index
    %c0_110 = arith.constant 0 : index
    %c0_111 = arith.constant 0 : index
    %c0_112 = arith.constant 0 : index
    %51 = vector.load %arg7[%c0_109, %c0_110, %c0_111, %c0_112] : memref<2x10x10x32xf32, #tpu.memory_space<vmem>>, vector<2x8x8x32xf32>
    %c0_113 = arith.constant 0 : index
    %c0_114 = arith.constant 0 : index
    %c1_115 = arith.constant 1 : index
    %c0_116 = arith.constant 0 : index
    %52 = vector.load %arg7[%c0_113, %c0_114, %c1_115, %c0_116] : memref<2x10x10x32xf32, #tpu.memory_space<vmem>>, vector<2x8x8x32xf32>
    %c0_117 = arith.constant 0 : index
    %c0_118 = arith.constant 0 : index
    %c2_119 = arith.constant 2 : index
    %c0_120 = arith.constant 0 : index
    %53 = vector.load %arg7[%c0_117, %c0_118, %c2_119, %c0_120] : memref<2x10x10x32xf32, #tpu.memory_space<vmem>>, vector<2x8x8x32xf32>
    %c0_121 = arith.constant 0 : index
    %c1_122 = arith.constant 1 : index
    %c0_123 = arith.constant 0 : index
    %c0_124 = arith.constant 0 : index
    %54 = vector.load %arg7[%c0_121, %c1_122, %c0_123, %c0_124] : memref<2x10x10x32xf32, #tpu.memory_space<vmem>>, vector<2x8x8x32xf32>
    %c0_125 = arith.constant 0 : index
    %c1_126 = arith.constant 1 : index
    %c1_127 = arith.constant 1 : index
    %c0_128 = arith.constant 0 : index
    %55 = vector.load %arg7[%c0_125, %c1_126, %c1_127, %c0_128] : memref<2x10x10x32xf32, #tpu.memory_space<vmem>>, vector<2x8x8x32xf32>
    %c0_129 = arith.constant 0 : index
    %c1_130 = arith.constant 1 : index
    %c2_131 = arith.constant 2 : index
    %c0_132 = arith.constant 0 : index
    %56 = vector.load %arg7[%c0_129, %c1_130, %c2_131, %c0_132] : memref<2x10x10x32xf32, #tpu.memory_space<vmem>>, vector<2x8x8x32xf32>
    %c0_133 = arith.constant 0 : index
    %c2_134 = arith.constant 2 : index
    %c0_135 = arith.constant 0 : index
    %c0_136 = arith.constant 0 : index
    %57 = vector.load %arg7[%c0_133, %c2_134, %c0_135, %c0_136] : memref<2x10x10x32xf32, #tpu.memory_space<vmem>>, vector<2x8x8x32xf32>
    %c0_137 = arith.constant 0 : index
    %c2_138 = arith.constant 2 : index
    %c1_139 = arith.constant 1 : index
    %c0_140 = arith.constant 0 : index
    %58 = vector.load %arg7[%c0_137, %c2_138, %c1_139, %c0_140] : memref<2x10x10x32xf32, #tpu.memory_space<vmem>>, vector<2x8x8x32xf32>
    %c0_141 = arith.constant 0 : index
    %c2_142 = arith.constant 2 : index
    %c2_143 = arith.constant 2 : index
    %c0_144 = arith.constant 0 : index
    %59 = vector.load %arg7[%c0_141, %c2_142, %c2_143, %c0_144] : memref<2x10x10x32xf32, #tpu.memory_space<vmem>>, vector<2x8x8x32xf32>
    %60 = tpu.concatenate %51, %52, %53, %54, %55, %56, %57, %58, %59 in 3 : vector<2x8x8x32xf32>, vector<2x8x8x32xf32>, vector<2x8x8x32xf32>, vector<2x8x8x32xf32>, vector<2x8x8x32xf32>, vector<2x8x8x32xf32>, vector<2x8x8x32xf32>, vector<2x8x8x32xf32>, vector<2x8x8x32xf32> -> vector<2x8x8x288xf32>
    %61 = vector.shape_cast %60 : vector<2x8x8x288xf32> to vector<128x288xf32>
    %62 = arith.truncf %61 : vector<128x288xf32> to vector<128x288xbf16>
    %c0_145 = arith.constant 0 : index
    %c2_146 = arith.constant 2 : index
    %c0_147 = arith.constant 0 : index
    %c0_148 = arith.constant 0 : index
    %63 = vector.load %arg2[%c0_145, %c2_146, %c0_147, %c0_148] : memref<1x3x288x32xbf16, #tpu.memory_space<vmem>>, vector<1x1x288x32xbf16>
    %64 = vector.shape_cast %63 : vector<1x1x288x32xbf16> to vector<288x32xbf16>
    %cst_149 = arith.constant dense<0.000000e+00> : vector<128x32xf32>
    %65 = tpu.matmul %62, %64, %cst_149 {dimension_numbers = #tpu.dot_dimension_numbers<[1], [0], [0], [1], [0, 0, 1, 1], [], []>} : vector<128x288xbf16>, vector<288x32xbf16>, vector<128x32xf32> -> vector<128x32xf32>
    %c0_150 = arith.constant 0 : index
    %c2_151 = arith.constant 2 : index
    %c0_152 = arith.constant 0 : index
    %c0_153 = arith.constant 0 : index
    %66 = vector.load %arg3[%c0_150, %c2_151, %c0_152, %c0_153] : memref<1x3x1x32xf32, #tpu.memory_space<vmem>>, vector<1x1x1x32xf32>
    %67 = vector.shape_cast %66 : vector<1x1x1x32xf32> to vector<1x32xf32>
    %68 = vector.broadcast %67 : vector<1x32xf32> to vector<128x32xf32>
    %69 = arith.addf %65, %68 : vector<128x32xf32>
    %cst_154 = arith.constant 0.000000e+00 : f32
    %70 = vector.broadcast %cst_154 : f32 to vector<128x32xf32>
    %71 = arith.maximumf %69, %70 : vector<128x32xf32>
    %72 = vector.shape_cast %71 : vector<128x32xf32> to vector<2x64x32xf32>
    %cst_155 = arith.constant dense<0.000000e+00> : vector<2x32xf32>
    %73 = vector.multi_reduction <add>, %72, %cst_155 [1] : vector<2x64x32xf32> to vector<2x32xf32>
    %cst_156 = arith.constant 1.562500e-02 : f32
    %74 = vector.broadcast %cst_156 : f32 to vector<2x32xf32>
    %75 = arith.mulf %73, %74 : vector<2x32xf32>
    %c0_157 = arith.constant 0 : index
    %c0_158 = arith.constant 0 : index
    %c0_159 = arith.constant 0 : index
    %76 = vector.load %arg4[%c0_157, %c0_158, %c0_159] : memref<1x32x128xf32, #tpu.memory_space<vmem>>, vector<1x32x128xf32>
    %77 = vector.shape_cast %76 : vector<1x32x128xf32> to vector<32x128xf32>
    %cst_160 = arith.constant dense<0.000000e+00> : vector<2x128xf32>
    %78 = tpu.matmul %75, %77, %cst_160 {dimension_numbers = #tpu.dot_dimension_numbers<[1], [0], [0], [1], [0, 0, 1, 1], [], []>} : vector<2x32xf32>, vector<32x128xf32>, vector<2x128xf32> -> vector<2x128xf32>
    %c0_161 = arith.constant 0 : index
    %c0_162 = arith.constant 0 : index
    %c0_163 = arith.constant 0 : index
    %79 = vector.load %arg5[%c0_161, %c0_162, %c0_163] : memref<1x1x128xf32, #tpu.memory_space<vmem>>, vector<1x1x128xf32>
    %80 = vector.shape_cast %79 : vector<1x1x128xf32> to vector<1x128xf32>
    %81 = vector.broadcast %80 : vector<1x128xf32> to vector<2x128xf32>
    %82 = arith.addf %78, %81 : vector<2x128xf32>
    %c0_164 = arith.constant 0 : index
    %c0_165 = arith.constant 0 : index
    %c0_166 = arith.constant 0 : index
    %83 = vector.load %arg6[%c0_164, %c0_165, %c0_166] : memref<1x2x128xf32, #tpu.memory_space<vmem>>, vector<1x2x128xf32>
    %84 = vector.shape_cast %83 : vector<1x2x128xf32> to vector<2x128xf32>
    %85 = vector.shape_cast %82 : vector<2x128xf32> to vector<1x2x128xf32>
    tpu.vector_store %arg6[%c0_164, %c0_165, %c0_166], %85 {strides = array<i32>} : memref<1x2x128xf32, #tpu.memory_space<vmem>>, vector<1x2x128xf32>,
    return
  }
  func.func @transform_0(%arg0: i32) -> (i32, i32, i32, i32) {
    %c0_i32 = arith.constant 0 : i32
    %c0_i32_0 = arith.constant 0 : i32
    %c0_i32_1 = arith.constant 0 : i32
    %c0_i32_2 = arith.constant 0 : i32
    %c0_i32_3 = arith.constant 0 : i32
    return %c0_i32, %c0_i32_0, %c0_i32_1, %c0_i32_2 : i32, i32, i32, i32
  }
  func.func @transform_1(%arg0: i32) -> (i32, i32, i32, i32) {
    %c0_i32 = arith.constant 0 : i32
    %c0_i32_0 = arith.constant 0 : i32
    %c0_i32_1 = arith.constant 0 : i32
    %c0_i32_2 = arith.constant 0 : i32
    return %arg0, %c0_i32, %c0_i32_0, %c0_i32_1 : i32, i32, i32, i32
  }
  func.func @transform_2(%arg0: i32) -> (i32, i32, i32, i32) {
    %c0_i32 = arith.constant 0 : i32
    %c0_i32_0 = arith.constant 0 : i32
    %c0_i32_1 = arith.constant 0 : i32
    %c0_i32_2 = arith.constant 0 : i32
    return %arg0, %c0_i32, %c0_i32_0, %c0_i32_1 : i32, i32, i32, i32
  }
  func.func @transform_3(%arg0: i32) -> (i32, i32, i32) {
    %c0_i32 = arith.constant 0 : i32
    %c0_i32_0 = arith.constant 0 : i32
    %c0_i32_1 = arith.constant 0 : i32
    return %arg0, %c0_i32, %c0_i32_0 : i32, i32, i32
  }
  func.func @transform_4(%arg0: i32) -> (i32, i32, i32) {
    %c0_i32 = arith.constant 0 : i32
    %c0_i32_0 = arith.constant 0 : i32
    %c0_i32_1 = arith.constant 0 : i32
    return %arg0, %c0_i32, %c0_i32_0 : i32, i32, i32
  }
  func.func @transform_5(%arg0: i32) -> (i32, i32, i32) {
    %c0_i32 = arith.constant 0 : i32
    %c0_i32_0 = arith.constant 0 : i32
    %c0_i32_1 = arith.constant 0 : i32
    return %arg0, %c0_i32, %c0_i32_0 : i32, i32, i32
  }
}

</mosaic_0001>

<llo_original>
// kernel: custom_model_forward.1
$region0: #{custom_model_forward.1}
  #allocation0 [shape = 'u32[]', space=smem, size = 0x4, offset = 0x4, fixed_abs, tag = 'smem constant byte address 0x4 - core index']
  #allocation1 [shape = 'u32[72,128]{1,0:T(1,128)}', space=vmem, size = 0x9000, scoped, tag = 'internal scratch']
  #allocation2 [shape = 'f32[2,10,10,32]{3,2,1,0:T(8,128)}', space=vmem, size = 0x28000, scoped, tag = 'scratch operand']
  %s0 = inlined_call_operand.vmem [shape: bf16[2,8,8,32], index: 0, kind: input, shape index: {}]
  %s1 = inlined_call_operand.vmem [shape: bf16[3,3,288,32], index: 1, kind: input, shape index: {}]
  %s2 = inlined_call_operand.vmem [shape: f32[3,3,1,32], index: 2, kind: input, shape index: {}]
  %s3 = inlined_call_operand.vmem [shape: f32[3,32,128], index: 3, kind: input, shape index: {}]
  %s4 = inlined_call_operand.vmem [shape: f32[3,1,128], index: 4, kind: input, shape index: {}]
  %s5 = inlined_call_operand.vmem [shape: f32[3,2,128], index: 5, kind: output, shape index: {}]
  %s6 = sld [smem:[#allocation0]]
  $region53: #{custom_model_forward.1} parent=0
    _
  %s8 = ssub.s32 1, %s6
  %s9 = scalar_select 0, %s8, %s6
  loop: start=0, step=1, limit=5
  $region2: #{custom_model_forward.1} parent=0 // loop_pre_header
    _
  $region3: #{custom_model_forward.1} parent=0 // loop_header
    %s11 = sphi 0, %s15
    %p12 = scmp.ge.s32.totalorder %s11, 5
    %s19 = sphi 0, %s19
    %s21 = sphi 0, %s19
    %s22 = sphi 0, %s21
    %s36 = sphi 0, %s22
    %s42 = sphi 0, %s44
    %s45 = sphi 0, %s42
    %s46 = sphi 0, %s45
    %s62 = sphi 0, %s46
    %s68 = sphi 0, %s70
    %s71 = sphi 0, %s68
    %s72 = sphi 0, %s71
    %s88 = sphi 0, %s72
    %s94 = sphi 0, %s96
    %s97 = sphi 0, %s94
    %s98 = sphi 0, %s97
    %s114 = sphi 0, %s98
    %s120 = sphi 0, %s122
    %s123 = sphi 0, %s120
    %s124 = sphi 0, %s123
    %s140 = sphi 0, %s124
    %s146 = sphi 0, %s148
    %s149 = sphi 0, %s146
    %s150 = sphi 0, %s149
    %s166 = sphi 0, %s150
  $region4: #{custom_model_forward.1} parent=0 // loop_header_branch
    %14 = sbr.rel (%p12) target = $region8
  $region5: #{custom_model_forward.1} parent=0 // loop_body
    %s16 = ssub.s32 %s11, 1
    %s17 = ssub.s32 %s11, 2
    %s18 = sadd.s32 %s11, 1
    %s20 = sadd.s32 %s19, 1
    %p23 = scmp.eq.s32.totalorder %s11, 2
    %p24 = scmp.ne.s32.totalorder %s19, %s21
    %p25 = scmp.eq.s32.totalorder %s11, 0
    %p26 = por %p24, %p25
    %p27 = scmp.ne.s32.totalorder %s19, %s21
    %p28 = scmp.eq.s32.totalorder %s16, 2
    %p29 = por %p27, %p28
    %p30 = scmp.ne.s32.totalorder %s21, %s22
    %p31 = scmp.eq.s32.totalorder %s16, 0
    %p32 = por %p30, %p31
    %p33 = scmp.ne.s32.totalorder %s21, %s22
    %p34 = scmp.eq.s32.totalorder %s17, 2
    %p35 = por %p33, %p34
    %p37 = scmp.ne.s32.totalorder %s22, %s36
    %p38 = scmp.eq.s32.totalorder %s17, 0
    %p39 = por %p37, %p38
    %s40 = ssub.s32 %s11, %s18
    %p41 = scmp.eq.s32.totalorder %s40, 0
    %s43 = sadd.s32 %s42, 1
    %s44 = scalar_select %p41, %s42, %s43
    %p47 = pneg %p41
    %p48 = scmp.eq.s32.totalorder %s11, 2
    %p49 = por %p47, %p48
    %p50 = scmp.ne.s32.totalorder %s42, %s45
    %p51 = scmp.eq.s32.totalorder %s11, 0
    %p52 = por %p50, %p51
    %p53 = scmp.ne.s32.totalorder %s42, %s45
    %p54 = scmp.eq.s32.totalorder %s16, 2
    %p55 = por %p53, %p54
    %p56 = scmp.ne.s32.totalorder %s45, %s46
    %p57 = scmp.eq.s32.totalorder %s16, 0
    %p58 = por %p56, %p57
    %p59 = scmp.ne.s32.totalorder %s45, %s46
    %p60 = scmp.eq.s32.totalorder %s17, 2
    %p61 = por %p59, %p60
    %p63 = scmp.ne.s32.totalorder %s46, %s62
    %p64 = scmp.eq.s32.totalorder %s17, 0
    %p65 = por %p63, %p64
    %s66 = ssub.s32 %s11, %s18
    %p67 = scmp.eq.s32.totalorder %s66, 0
    %s69 = sadd.s32 %s68, 1
    %s70 = scalar_select %p67, %s68, %s69
    %p73 = pneg %p67
    %p74 = scmp.eq.s32.totalorder %s11, 2
    %p75 = por %p73, %p74
    %p76 = scmp.ne.s32.totalorder %s68, %s71
    %p77 = scmp.eq.s32.totalorder %s11, 0
    %p78 = por %p76, %p77
    %p79 = scmp.ne.s32.totalorder %s68, %s71
    %p80 = scmp.eq.s32.totalorder %s16, 2
    %p81 = por %p79, %p80
    %p82 = scmp.ne.s32.totalorder %s71, %s72
    %p83 = scmp.eq.s32.totalorder %s16, 0
    %p84 = por %p82, %p83
    %p85 = scmp.ne.s32.totalorder %s71, %s72
    %p86 = scmp.eq.s32.totalorder %s17, 2
    %p87 = por %p85, %p86
    %p89 = scmp.ne.s32.totalorder %s72, %s88
    %p90 = scmp.eq.s32.totalorder %s17, 0
    %p91 = por %p89, %p90
    %s92 = ssub.s32 %s11, %s18
    %p93 = scmp.eq.s32.totalorder %s92, 0
    %s95 = sadd.s32 %s94, 1
    %s96 = scalar_select %p93, %s94, %s95
    %p99 = pneg %p93
    %p100 = scmp.eq.s32.totalorder %s11, 2
    %p101 = por %p99, %p100
    %p102 = scmp.ne.s32.totalorder %s94, %s97
    %p103 = scmp.eq.s32.totalorder %s11, 0
    %p104 = por %p102, %p103
    %p105 = scmp.ne.s32.totalorder %s94, %s97
    %p106 = scmp.eq.s32.totalorder %s16, 2
    %p107 = por %p105, %p106
    %p108 = scmp.ne.s32.totalorder %s97, %s98
    %p109 = scmp.eq.s32.totalorder %s16, 0
    %p110 = por %p108, %p109
    %p111 = scmp.ne.s32.totalorder %s97, %s98
    %p112 = scmp.eq.s32.totalorder %s17, 2
    %p113 = por %p111, %p112
    %p115 = scmp.ne.s32.totalorder %s98, %s114
    %p116 = scmp.eq.s32.totalorder %s17, 0
    %p117 = por %p115, %p116
    %s118 = ssub.s32 %s11, %s18
    %p119 = scmp.eq.s32.totalorder %s118, 0
    %s121 = sadd.s32 %s120, 1
    %s122 = scalar_select %p119, %s120, %s121
    %p125 = pneg %p119
    %p126 = scmp.eq.s32.totalorder %s11, 2
    %p127 = por %p125, %p126
    %p128 = scmp.ne.s32.totalorder %s120, %s123
    %p129 = scmp.eq.s32.totalorder %s11, 0
    %p130 = por %p128, %p129
    %p131 = scmp.ne.s32.totalorder %s120, %s123
    %p132 = scmp.eq.s32.totalorder %s16, 2
    %p133 = por %p131, %p132
    %p134 = scmp.ne.s32.totalorder %s123, %s124
    %p135 = scmp.eq.s32.totalorder %s16, 0
    %p136 = por %p134, %p135
    %p137 = scmp.ne.s32.totalorder %s123, %s124
    %p138 = scmp.eq.s32.totalorder %s17, 2
    %p139 = por %p137, %p138
    %p141 = scmp.ne.s32.totalorder %s124, %s140
    %p142 = scmp.eq.s32.totalorder %s17, 0
    %p143 = por %p141, %p142
    %s144 = ssub.s32 %s11, %s18
    %p145 = scmp.eq.s32.totalorder %s144, 0
    %s147 = sadd.s32 %s146, 1
    %s148 = scalar_select %p145, %s146, %s147
    %p151 = pneg %p145
    %p152 = scmp.eq.s32.totalorder %s11, 2
    %p153 = por %p151, %p152
    %p154 = scmp.ne.s32.totalorder %s146, %s149
    %p155 = scmp.eq.s32.totalorder %s11, 0
    %p156 = por %p154, %p155
    %p157 = scmp.ne.s32.totalorder %s146, %s149
    %p158 = scmp.eq.s32.totalorder %s16, 2
    %p159 = por %p157, %p158
    %p160 = scmp.ne.s32.totalorder %s149, %s150
    %p161 = scmp.eq.s32.totalorder %s16, 0
    %p162 = por %p160, %p161
    %p163 = scmp.ne.s32.totalorder %s149, %s150
    %p164 = scmp.eq.s32.totalorder %s17, 2
    %p165 = por %p163, %p164
    %p167 = scmp.ne.s32.totalorder %s150, %s166
    %p168 = scmp.eq.s32.totalorder %s17, 0
    %p169 = por %p167, %p168
    %p170 = scmp.le.s32.totalorder 1, %s11
    %p171 = scmp.lt.s32.totalorder %s11, 4
    %p172 = pnand %p170, %p171
    %p173 = pneg %p172
    // Predicated region
    $region9: #{custom_model_forward.1} parent=5 // pred_check
      _
    $region10: #{custom_model_forward.1} parent=5 // pred_check_branch
      %175 = sbr.rel (%p172) target = $region12
    $region11: #{custom_model_forward.1} parent=5 // pred_region
      %s176 = ssub.s32 %s11, 1
      // Predicated region
      $region13: #{custom_model_forward.1} parent=11 // pred_check
        %p177 = pneg %p32
      $region14: #{custom_model_forward.1} parent=11 // pred_check_branch
        %179 = sbr.rel (%p177) target = $region16
      $region15: #{custom_model_forward.1} parent=11 // pred_region
        _
      $region16: #{custom_model_forward.1} parent=11 // pred_fallthru
        _
    $region12: #{custom_model_forward.1} parent=5 // pred_fallthru
      _
    %p180 = scmp.lt.s32.totalorder %s11, 3
    // Predicated region
    $region17: #{custom_model_forward.1} parent=5 // pred_check
      %p181 = pneg %p180
    $region18: #{custom_model_forward.1} parent=5 // pred_check_branch
      %183 = sbr.rel (%p181) target = $region20
    $region19: #{custom_model_forward.1} parent=5 // pred_region
      // Predicated region
      $region21: #{custom_model_forward.1} parent=19 // pred_check
        %p184 = pneg %p52
      $region22: #{custom_model_forward.1} parent=19 // pred_check_branch
        %186 = sbr.rel (%p184) target = $region24
      $region23: #{custom_model_forward.1} parent=19 // pred_region
        %p187 = scmp.lt.s32.totalorder %s11, 2
        %s188 = scalar_select %p187, %s11, 2
        %s189 = smul.addr %s188, 108
        %s190 = smul.addr %s189, 4
        %s191 = scalar_lea.vmem %s1, %s190
      $region24: #{custom_model_forward.1} parent=19 // pred_fallthru
        _
      // Predicated region
      $region25: #{custom_model_forward.1} parent=19 // pred_check
        %p192 = pneg %p78
      $region26: #{custom_model_forward.1} parent=19 // pred_check_branch
        %194 = sbr.rel (%p192) target = $region28
      $region27: #{custom_model_forward.1} parent=19 // pred_region
        %p195 = scmp.lt.s32.totalorder %s11, 2
        %s196 = scalar_select %p195, %s11, 2
        %s197 = smul.addr %s196, 3
        %s198 = scalar_lea.vmem %s2, %s197
      $region28: #{custom_model_forward.1} parent=19 // pred_fallthru
        _
      // Predicated region
      $region29: #{custom_model_forward.1} parent=19 // pred_check
        %p199 = pneg %p104
      $region30: #{custom_model_forward.1} parent=19 // pred_check_branch
        %201 = sbr.rel (%p199) target = $region32
      $region31: #{custom_model_forward.1} parent=19 // pred_region
        %p202 = scmp.lt.s32.totalorder %s11, 2
        %s203 = scalar_select %p202, %s11, 2
        %s204 = smul.addr %s203, 4
        %s205 = smul.addr %s204, 8
        %s206 = scalar_lea.vmem %s3, %s205
      $region32: #{custom_model_forward.1} parent=19 // pred_fallthru
        _
      // Predicated region
      $region33: #{custom_model_forward.1} parent=19 // pred_check
        %p207 = pneg %p130
      $region34: #{custom_model_forward.1} parent=19 // pred_check_branch
        %209 = sbr.rel (%p207) target = $region36
      $region35: #{custom_model_forward.1} parent=19 // pred_region
        %p210 = scmp.lt.s32.totalorder %s11, 2
        %s211 = scalar_select %p210, %s11, 2
        %s212 = scalar_lea.vmem %s4, %s211
      $region36: #{custom_model_forward.1} parent=19 // pred_fallthru
        _
    $region20: #{custom_model_forward.1} parent=5 // pred_fallthru
      _
    %p213 = scmp.le.s32.totalorder 1, %s11
    %p214 = scmp.lt.s32.totalorder %s11, 4
    %p215 = pnand %p213, %p214
    %p216 = pneg %p215
    // Predicated region
    $region37: #{custom_model_forward.1} parent=5 // pred_check
      _
    $region38: #{custom_model_forward.1} parent=5 // pred_check_branch
      %218 = sbr.rel (%p215) target = $region40
    $region39: #{custom_model_forward.1} parent=5 // pred_region
      %s219 = ssub.s32 %s11, 1
      %p220 = pneg %p32
      %p221 = pneg %p29
      %p222 = scmp.lt.s32.totalorder %s16, 2
      %s223 = scalar_select %p222, %s16, 2
      %s224 = smul.addr %s223, 108
      %s225 = smul.addr %s224, 4
      %s226 = scalar_lea.vmem %s1, %s225
      %p227 = pneg %p58
      %p228 = pneg %p55
      %p229 = scmp.lt.s32.totalorder %s16, 2
      %s230 = scalar_select %p229, %s16, 2
      %s231 = smul.addr %s230, 3
      %s232 = scalar_lea.vmem %s2, %s231
      %p233 = pneg %p84
      %p234 = pneg %p81
      %p235 = scmp.lt.s32.totalorder %s16, 2
      %s236 = scalar_select %p235, %s16, 2
      %s237 = smul.addr %s236, 4
      %s238 = smul.addr %s237, 8
      %s239 = scalar_lea.vmem %s3, %s238
      %p240 = pneg %p110
      %p241 = pneg %p107
      %p242 = scmp.lt.s32.totalorder %s16, 2
      %s243 = scalar_select %p242, %s16, 2
      %s244 = scalar_lea.vmem %s4, %s243
      %p245 = pneg %p136
      %p246 = pneg %p133
      %p247 = pneg %p162
      %p248 = pneg %p159
      %p249 = scmp.lt.s32.totalorder %s16, 2
      %s250 = scalar_select %p249, %s16, 2
      %s251 = smul.addr %s250, 2
      %s252 = scalar_lea.vmem %s5, %s251
      %p253 = scmp.lt.s32.totalorder %s16, 2
      %s254 = scalar_select %p253, %s16, 2
      %s255 = smul.addr %s254, 108
      %s256 = smul.addr %s255, 4
      %s257 = scalar_lea.vmem %s1, %s256
      %p258 = scmp.lt.s32.totalorder %s16, 2
      %s259 = scalar_select %p258, %s16, 2
      %s260 = smul.addr %s259, 3
      %s261 = scalar_lea.vmem %s2, %s260
      %p262 = scmp.lt.s32.totalorder %s16, 2
      %s263 = scalar_select %p262, %s16, 2
      %s264 = smul.addr %s263, 4
      %s265 = smul.addr %s264, 8
      %s266 = scalar_lea.vmem %s3, %s265
      %p267 = scmp.lt.s32.totalorder %s16, 2
      %s268 = scalar_select %p267, %s16, 2
      %s269 = scalar_lea.vmem %s4, %s268
      %p270 = scmp.lt.s32.totalorder %s16, 2
      %s271 = scalar_select %p270, %s16, 2
      %s272 = smul.addr %s271, 2
      %s273 = scalar_lea.vmem %s5, %s272
      %vm275 = vcmask 261120
      %276 = vst.msk [vmem:[#allocation2] sm:$0xff] %vm275, 0.0
      %vm277 = vcmask 254976
      %278 = vst.msk [vmem:[#allocation2 + $0x8] sm:$0x3] %vm277, 0.0
      %279 = vst.msk [vmem:[#allocation2 + $0x10] sm:$0xff] %vm275, 0.0
      %280 = vst.msk [vmem:[#allocation2 + $0x18] sm:$0x3] %vm277, 0.0
      %281 = vst.msk [vmem:[#allocation2 + $0x20] sm:$0xff] %vm275, 0.0
      %282 = vst.msk [vmem:[#allocation2 + $0x28] sm:$0x3] %vm277, 0.0
      %283 = vst.msk [vmem:[#allocation2 + $0x30] sm:$0xff] %vm275, 0.0
      %284 = vst.msk [vmem:[#allocation2 + $0x38] sm:$0x3] %vm277, 0.0
      %285 = vst.msk [vmem:[#allocation2 + $0x40] sm:$0xff] %vm275, 0.0
      %286 = vst.msk [vmem:[#allocation2 + $0x48] sm:$0x3] %vm277, 0.0
      %287 = vst.msk [vmem:[#allocation2 + $0x50] sm:$0xff] %vm275, 0.0
      %288 = vst.msk [vmem:[#allocation2 + $0x58] sm:$0x3] %vm277, 0.0
      %289 = vst.msk [vmem:[#allocation2 + $0x60] sm:$0xff] %vm275, 0.0
      %290 = vst.msk [vmem:[#allocation2 + $0x68] sm:$0x3] %vm277, 0.0
      %291 = vst.msk [vmem:[#allocation2 + $0x70] sm:$0xff] %vm275, 0.0
      %292 = vst.msk [vmem:[#allocation2 + $0x78] sm:$0x3] %vm277, 0.0
      %293 = vst.msk [vmem:[#allocation2 + $0x80] sm:$0xff] %vm275, 0.0
      %294 = vst.msk [vmem:[#allocation2 + $0x88] sm:$0x3] %vm277, 0.0
      %295 = vst.msk [vmem:[#allocation2 + $0x90] sm:$0xff] %vm275, 0.0
      %296 = vst.msk [vmem:[#allocation2 + $0x98] sm:$0x3] %vm277, 0.0
      %297 = vst.msk [vmem:[#allocation2 + $0xa0] sm:$0xff] %vm275, 0.0
      %298 = vst.msk [vmem:[#allocation2 + $0xa8] sm:$0x3] %vm277, 0.0
      %299 = vst.msk [vmem:[#allocation2 + $0xb0] sm:$0xff] %vm275, 0.0
      %300 = vst.msk [vmem:[#allocation2 + $0xb8] sm:$0x3] %vm277, 0.0
      %301 = vst.msk [vmem:[#allocation2 + $0xc0] sm:$0xff] %vm275, 0.0
      %302 = vst.msk [vmem:[#allocation2 + $0xc8] sm:$0x3] %vm277, 0.0
      %303 = vst.msk [vmem:[#allocation2 + $0xd0] sm:$0xff] %vm275, 0.0
      %304 = vst.msk [vmem:[#allocation2 + $0xd8] sm:$0x3] %vm277, 0.0
      %305 = vst.msk [vmem:[#allocation2 + $0xe0] sm:$0xff] %vm275, 0.0
      %306 = vst.msk [vmem:[#allocation2 + $0xe8] sm:$0x3] %vm277, 0.0
      %307 = vst.msk [vmem:[#allocation2 + $0xf0] sm:$0xff] %vm275, 0.0
      %308 = vst.msk [vmem:[#allocation2 + $0xf8] sm:$0x3] %vm277, 0.0
      %309 = vst.msk [vmem:[#allocation2 + $0x100] sm:$0xff] %vm275, 0.0
      %310 = vst.msk [vmem:[#allocation2 + $0x108] sm:$0x3] %vm277, 0.0
      %311 = vst.msk [vmem:[#allocation2 + $0x110] sm:$0xff] %vm275, 0.0
      %312 = vst.msk [vmem:[#allocation2 + $0x118] sm:$0x3] %vm277, 0.0
      %313 = vst.msk [vmem:[#allocation2 + $0x120] sm:$0xff] %vm275, 0.0
      %314 = vst.msk [vmem:[#allocation2 + $0x128] sm:$0x3] %vm277, 0.0
      %315 = vst.msk [vmem:[#allocation2 + $0x130] sm:$0xff] %vm275, 0.0
      %316 = vst.msk [vmem:[#allocation2 + $0x138] sm:$0x3] %vm277, 0.0
      %v317 = vld [vmem:[%s0] sm:$0xf]
      %v318 = vld [vmem:[%s0 + $0x4] sm:$0xf]
      %v319 = vld [vmem:[%s0 + $0x8] sm:$0xf]
      %v320 = vld [vmem:[%s0 + $0xc] sm:$0xf]
      %v321 = vld [vmem:[%s0 + $0x10] sm:$0xf]
      %v322 = vld [vmem:[%s0 + $0x14] sm:$0xf]
      %v323 = vld [vmem:[%s0 + $0x18] sm:$0xf]
      %v324 = vld [vmem:[%s0 + $0x1c] sm:$0xf]
      %v325 = vld [vmem:[%s0 + $0x20] sm:$0xf]
      %v326 = vld [vmem:[%s0 + $0x24] sm:$0xf]
      %v327 = vld [vmem:[%s0 + $0x28] sm:$0xf]
      %v328 = vld [vmem:[%s0 + $0x2c] sm:$0xf]
      %v329 = vld [vmem:[%s0 + $0x30] sm:$0xf]
      %v330 = vld [vmem:[%s0 + $0x34] sm:$0xf]
      %v331 = vld [vmem:[%s0 + $0x38] sm:$0xf]
      %v332 = vld [vmem:[%s0 + $0x3c] sm:$0xf]
      %v333 = vunpack.c.l.bf16 %v317
      %v334 = vunpack.c.l.bf16 %v318
      %v335 = vunpack.c.l.bf16 %v319
      %v336 = vunpack.c.l.bf16 %v320
      %v337 = vunpack.c.l.bf16 %v321
      %v338 = vunpack.c.l.bf16 %v322
      %v339 = vunpack.c.l.bf16 %v323
      %v340 = vunpack.c.l.bf16 %v324
      %v341 = vunpack.c.l.bf16 %v325
      %v342 = vunpack.c.l.bf16 %v326
      %v343 = vunpack.c.l.bf16 %v327
      %v344 = vunpack.c.l.bf16 %v328
      %v345 = vunpack.c.l.bf16 %v329
      %v346 = vunpack.c.l.bf16 %v330
      %v347 = vunpack.c.l.bf16 %v331
      %v348 = vunpack.c.l.bf16 %v332
      %s349 = scalar_lea.vmem [#allocation2], 16
      %350 = vst.msk [vmem:[%s349 + $0x1] sm:$0xff] %vm275, %v333
      %351 = vst.msk [vmem:[%s349 + $0x11] sm:$0xff] %vm275, %v334
      %352 = vst.msk [vmem:[%s349 + $0x21] sm:$0xff] %vm275, %v335
      %353 = vst.msk [vmem:[%s349 + $0x31] sm:$0xff] %vm275, %v336
      %354 = vst.msk [vmem:[%s349 + $0x41] sm:$0xff] %vm275, %v337
      %355 = vst.msk [vmem:[%s349 + $0x51] sm:$0xff] %vm275, %v338
      %356 = vst.msk [vmem:[%s349 + $0x61] sm:$0xff] %vm275, %v339
      %357 = vst.msk [vmem:[%s349 + $0x71] sm:$0xff] %vm275, %v340
      %358 = vst.msk [vmem:[%s349 + $0xa1] sm:$0xff] %vm275, %v341
      %359 = vst.msk [vmem:[%s349 + $0xb1] sm:$0xff] %vm275, %v342
      %360 = vst.msk [vmem:[%s349 + $0xc1] sm:$0xff] %vm275, %v343
      %361 = vst.msk [vmem:[%s349 + $0xd1] sm:$0xff] %vm275, %v344
      %362 = vst.msk [vmem:[%s349 + $0xe1] sm:$0xff] %vm275, %v345
      %363 = vst.msk [vmem:[%s349 + $0xf1] sm:$0xff] %vm275, %v346
      %364 = vst.msk [vmem:[%s349 + $0x101] sm:$0xff] %vm275, %v347
      %365 = vst.msk [vmem:[%s349 + $0x111] sm:$0xff] %vm275, %v348
      %v366 = vld [vmem:[#allocation2] sm:$0xff]
      %v367 = vld [vmem:[#allocation2 + $0x10] sm:$0xff]
      %v368 = vld [vmem:[#allocation2 + $0x20] sm:$0xff]
      %v369 = vld [vmem:[#allocation2 + $0x30] sm:$0xff]
      %v370 = vld [vmem:[#allocation2 + $0x40] sm:$0xff]
      %v371 = vld [vmem:[#allocation2 + $0x50] sm:$0xff]
      %v372 = vld [vmem:[#allocation2 + $0x60] sm:$0xff]
      %v373 = vld [vmem:[#allocation2 + $0x70] sm:$0xff]
      %v374 = vld [vmem:[#allocation2 + $0xa0] sm:$0xff]
      %v375 = vld [vmem:[#allocation2 + $0xb0] sm:$0xff]
      %v376 = vld [vmem:[#allocation2 + $0xc0] sm:$0xff]
      %v377 = vld [vmem:[#allocation2 + $0xd0] sm:$0xff]
      %v378 = vld [vmem:[#allocation2 + $0xe0] sm:$0xff]
      %v379 = vld [vmem:[#allocation2 + $0xf0] sm:$0xff]
      %v380 = vld [vmem:[#allocation2 + $0x100] sm:$0xff]
      %v381 = vld [vmem:[#allocation2 + $0x110] sm:$0xff]
      %v382 = vld [vmem:[#allocation2 + $0x1] sm:$0xff]
      %v383 = vld [vmem:[#allocation2 + $0x11] sm:$0xff]
      %v384 = vld [vmem:[#allocation2 + $0x21] sm:$0xff]
      %v385 = vld [vmem:[#allocation2 + $0x31] sm:$0xff]
      %v386 = vld [vmem:[#allocation2 + $0x41] sm:$0xff]
      %v387 = vld [vmem:[#allocation2 + $0x51] sm:$0xff]
      %v388 = vld [vmem:[#allocation2 + $0x61] sm:$0xff]
      %v389 = vld [vmem:[#allocation2 + $0x71] sm:$0xff]
      %v390 = vld [vmem:[#allocation2 + $0xa1] sm:$0xff]
      %v391 = vld [vmem:[#allocation2 + $0xb1] sm:$0xff]
      %v392 = vld [vmem:[#allocation2 + $0xc1] sm:$0xff]
      %v393 = vld [vmem:[#allocation2 + $0xd1] sm:$0xff]
      %v394 = vld [vmem:[#allocation2 + $0xe1] sm:$0xff]
      %v395 = vld [vmem:[#allocation2 + $0xf1] sm:$0xff]
      %v396 = vld [vmem:[#allocation2 + $0x101] sm:$0xff]
      %v397 = vld [vmem:[#allocation2 + $0x111] sm:$0xff]
      %v398 = vld [vmem:[#allocation2 + $0x2] sm:$0xff]
      %v399 = vld [vmem:[#allocation2 + $0x12] sm:$0xff]
      %v400 = vld [vmem:[#allocation2 + $0x22] sm:$0xff]
      %v401 = vld [vmem:[#allocation2 + $0x32] sm:$0xff]
      %v402 = vld [vmem:[#allocation2 + $0x42] sm:$0xff]
      %v403 = vld [vmem:[#allocation2 + $0x52] sm:$0xff]
      %v404 = vld [vmem:[#allocation2 + $0x62] sm:$0xff]
      %v405 = vld [vmem:[#allocation2 + $0x72] sm:$0xff]
      %v406 = vld [vmem:[#allocation2 + $0xa2] sm:$0xff]
      %v407 = vld [vmem:[#allocation2 + $0xb2] sm:$0xff]
      %v408 = vld [vmem:[#allocation2 + $0xc2] sm:$0xff]
      %v409 = vld [vmem:[#allocation2 + $0xd2] sm:$0xff]
      %v410 = vld [vmem:[#allocation2 + $0xe2] sm:$0xff]
      %v411 = vld [vmem:[#allocation2 + $0xf2] sm:$0xff]
      %v412 = vld [vmem:[#allocation2 + $0x102] sm:$0xff]
      %v413 = vld [vmem:[#allocation2 + $0x112] sm:$0xff]
      %v414 = vld [vmem:[%s349] sm:$0xff]
      %v415 = vld [vmem:[%s349 + $0x10] sm:$0xff]
      %v416 = vld [vmem:[%s349 + $0x20] sm:$0xff]
      %v417 = vld [vmem:[%s349 + $0x30] sm:$0xff]
      %v418 = vld [vmem:[%s349 + $0x40] sm:$0xff]
      %v419 = vld [vmem:[%s349 + $0x50] sm:$0xff]
      %v420 = vld [vmem:[%s349 + $0x60] sm:$0xff]
      %v421 = vld [vmem:[%s349 + $0x70] sm:$0xff]
      %v422 = vld [vmem:[%s349 + $0xa0] sm:$0xff]
      %v423 = vld [vmem:[%s349 + $0xb0] sm:$0xff]
      %v424 = vld [vmem:[%s349 + $0xc0] sm:$0xff]
      %v425 = vld [vmem:[%s349 + $0xd0] sm:$0xff]
      %v426 = vld [vmem:[%s349 + $0xe0] sm:$0xff]
      %v427 = vld [vmem:[%s349 + $0xf0] sm:$0xff]
      %v428 = vld [vmem:[%s349 + $0x100] sm:$0xff]
      %v429 = vld [vmem:[%s349 + $0x110] sm:$0xff]
      %v430 = vld [vmem:[%s349 + $0x1] sm:$0xff]
      %v431 = vld [vmem:[%s349 + $0x11] sm:$0xff]
      %v432 = vld [vmem:[%s349 + $0x21] sm:$0xff]
      %v433 = vld [vmem:[%s349 + $0x31] sm:$0xff]
      %v434 = vld [vmem:[%s349 + $0x41] sm:$0xff]
      %v435 = vld [vmem:[%s349 + $0x51] sm:$0xff]
      %v436 = vld [vmem:[%s349 + $0x61] sm:$0xff]
      %v437 = vld [vmem:[%s349 + $0x71] sm:$0xff]
      %v438 = vld [vmem:[%s349 + $0xa1] sm:$0xff]
      %v439 = vld [vmem:[%s349 + $0xb1] sm:$0xff]
      %v440 = vld [vmem:[%s349 + $0xc1] sm:$0xff]
      %v441 = vld [vmem:[%s349 + $0xd1] sm:$0xff]
      %v442 = vld [vmem:[%s349 + $0xe1] sm:$0xff]
      %v443 = vld [vmem:[%s349 + $0xf1] sm:$0xff]
      %v444 = vld [vmem:[%s349 + $0x101] sm:$0xff]
      %v445 = vld [vmem:[%s349 + $0x111] sm:$0xff]
      %v446 = vld [vmem:[%s349 + $0x2] sm:$0xff]
      %v447 = vld [vmem:[%s349 + $0x12] sm:$0xff]
      %v448 = vld [vmem:[%s349 + $0x22] sm:$0xff]
      %v449 = vld [vmem:[%s349 + $0x32] sm:$0xff]
      %v450 = vld [vmem:[%s349 + $0x42] sm:$0xff]
      %v451 = vld [vmem:[%s349 + $0x52] sm:$0xff]
      %v452 = vld [vmem:[%s349 + $0x62] sm:$0xff]
      %v453 = vld [vmem:[%s349 + $0x72] sm:$0xff]
      %v454 = vld [vmem:[%s349 + $0xa2] sm:$0xff]
      %v455 = vld [vmem:[%s349 + $0xb2] sm:$0xff]
      %v456 = vld [vmem:[%s349 + $0xc2] sm:$0xff]
      %v457 = vld [vmem:[%s349 + $0xd2] sm:$0xff]
      %v458 = vld [vmem:[%s349 + $0xe2] sm:$0xff]
      %v459 = vld [vmem:[%s349 + $0xf2] sm:$0xff]
      %v460 = vld [vmem:[%s349 + $0x102] sm:$0xff]
      %v461 = vld [vmem:[%s349 + $0x112] sm:$0xff]
      %s462 = scalar_lea.vmem [#allocation2], 32
      %v463 = vld [vmem:[%s462] sm:$0xff]
      %v464 = vld [vmem:[%s462 + $0x10] sm:$0xff]
      %v465 = vld [vmem:[%s462 + $0x20] sm:$0xff]
      %v466 = vld [vmem:[%s462 + $0x30] sm:$0xff]
      %v467 = vld [vmem:[%s462 + $0x40] sm:$0xff]
      %v468 = vld [vmem:[%s462 + $0x50] sm:$0xff]
      %v469 = vld [vmem:[%s462 + $0x60] sm:$0xff]
      %v470 = vld [vmem:[%s462 + $0x70] sm:$0xff]
      %v471 = vld [vmem:[%s462 + $0xa0] sm:$0xff]
      %v472 = vld [vmem:[%s462 + $0xb0] sm:$0xff]
      %v473 = vld [vmem:[%s462 + $0xc0] sm:$0xff]
      %v474 = vld [vmem:[%s462 + $0xd0] sm:$0xff]
      %v475 = vld [vmem:[%s462 + $0xe0] sm:$0xff]
      %v476 = vld [vmem:[%s462 + $0xf0] sm:$0xff]
      %v477 = vld [vmem:[%s462 + $0x100] sm:$0xff]
      %v478 = vld [vmem:[%s462 + $0x110] sm:$0xff]
      %v479 = vld [vmem:[%s462 + $0x1] sm:$0xff]
      %v480 = vld [vmem:[%s462 + $0x11] sm:$0xff]
      %v481 = vld [vmem:[%s462 + $0x21] sm:$0xff]
      %v482 = vld [vmem:[%s462 + $0x31] sm:$0xff]
      %v483 = vld [vmem:[%s462 + $0x41] sm:$0xff]
      %v484 = vld [vmem:[%s462 + $0x51] sm:$0xff]
      %v485 = vld [vmem:[%s462 + $0x61] sm:$0xff]
      %v486 = vld [vmem:[%s462 + $0x71] sm:$0xff]
      %v487 = vld [vmem:[%s462 + $0xa1] sm:$0xff]
      %v488 = vld [vmem:[%s462 + $0xb1] sm:$0xff]
      %v489 = vld [vmem:[%s462 + $0xc1] sm:$0xff]
      %v490 = vld [vmem:[%s462 + $0xd1] sm:$0xff]
      %v491 = vld [vmem:[%s462 + $0xe1] sm:$0xff]
      %v492 = vld [vmem:[%s462 + $0xf1] sm:$0xff]
      %v493 = vld [vmem:[%s462 + $0x101] sm:$0xff]
      %v494 = vld [vmem:[%s462 + $0x111] sm:$0xff]
      %v495 = vld [vmem:[%s462 + $0x2] sm:$0xff]
      %v496 = vld [vmem:[%s462 + $0x12] sm:$0xff]
      %v497 = vld [vmem:[%s462 + $0x22] sm:$0xff]
      %v498 = vld [vmem:[%s462 + $0x32] sm:$0xff]
      %v499 = vld [vmem:[%s462 + $0x42] sm:$0xff]
      %v500 = vld [vmem:[%s462 + $0x52] sm:$0xff]
      %v501 = vld [vmem:[%s462 + $0x62] sm:$0xff]
      %v502 = vld [vmem:[%s462 + $0x72] sm:$0xff]
      %v503 = vld [vmem:[%s462 + $0xa2] sm:$0xff]
      %v504 = vld [vmem:[%s462 + $0xb2] sm:$0xff]
      %v505 = vld [vmem:[%s462 + $0xc2] sm:$0xff]
      %v506 = vld [vmem:[%s462 + $0xd2] sm:$0xff]
      %v507 = vld [vmem:[%s462 + $0xe2] sm:$0xff]
      %v508 = vld [vmem:[%s462 + $0xf2] sm:$0xff]
      %v509 = vld [vmem:[%s462 + $0x102] sm:$0xff]
      %v510 = vld [vmem:[%s462 + $0x112] sm:$0xff]
      %527 = vrot.lane.b32.xlu0 %v382, 32
      %v528 = vpop.permute.xlu0 %527
      %529 = vrot.lane.b32.xlu0 %v383, 32
      %v530 = vpop.permute.xlu0 %529
      %531 = vrot.lane.b32.xlu0 %v384, 32
      %v532 = vpop.permute.xlu0 %531
      %533 = vrot.lane.b32.xlu0 %v385, 32
      %v534 = vpop.permute.xlu0 %533
      %535 = vrot.lane.b32.xlu0 %v386, 32
      %v536 = vpop.permute.xlu0 %535
      %537 = vrot.lane.b32.xlu0 %v387, 32
      %v538 = vpop.permute.xlu0 %537
      %539 = vrot.lane.b32.xlu0 %v388, 32
      %v540 = vpop.permute.xlu0 %539
      %541 = vrot.lane.b32.xlu0 %v389, 32
      %v542 = vpop.permute.xlu0 %541
      %543 = vrot.lane.b32.xlu0 %v390, 32
      %v544 = vpop.permute.xlu0 %543
      %545 = vrot.lane.b32.xlu0 %v391, 32
      %v546 = vpop.permute.xlu0 %545
      %547 = vrot.lane.b32.xlu0 %v392, 32
      %v548 = vpop.permute.xlu0 %547
      %549 = vrot.lane.b32.xlu0 %v393, 32
      %v550 = vpop.permute.xlu0 %549
      %551 = vrot.lane.b32.xlu0 %v394, 32
      %v552 = vpop.permute.xlu0 %551
      %553 = vrot.lane.b32.xlu0 %v395, 32
      %v554 = vpop.permute.xlu0 %553
      %555 = vrot.lane.b32.xlu0 %v396, 32
      %v556 = vpop.permute.xlu0 %555
      %557 = vrot.lane.b32.xlu0 %v397, 32
      %v558 = vpop.permute.xlu0 %557
      %591 = vrot.lane.b32.xlu0 %v398, 64
      %v592 = vpop.permute.xlu0 %591
      %593 = vrot.lane.b32.xlu0 %v399, 64
      %v594 = vpop.permute.xlu0 %593
      %595 = vrot.lane.b32.xlu0 %v400, 64
      %v596 = vpop.permute.xlu0 %595
      %597 = vrot.lane.b32.xlu0 %v401, 64
      %v598 = vpop.permute.xlu0 %597
      %599 = vrot.lane.b32.xlu0 %v402, 64
      %v600 = vpop.permute.xlu0 %599
      %601 = vrot.lane.b32.xlu0 %v403, 64
      %v602 = vpop.permute.xlu0 %601
      %603 = vrot.lane.b32.xlu0 %v404, 64
      %v604 = vpop.permute.xlu0 %603
      %605 = vrot.lane.b32.xlu0 %v405, 64
      %v606 = vpop.permute.xlu0 %605
      %607 = vrot.lane.b32.xlu0 %v406, 64
      %v608 = vpop.permute.xlu0 %607
      %609 = vrot.lane.b32.xlu0 %v407, 64
      %v610 = vpop.permute.xlu0 %609
      %611 = vrot.lane.b32.xlu0 %v408, 64
      %v612 = vpop.permute.xlu0 %611
      %613 = vrot.lane.b32.xlu0 %v409, 64
      %v614 = vpop.permute.xlu0 %613
      %615 = vrot.lane.b32.xlu0 %v410, 64
      %v616 = vpop.permute.xlu0 %615
      %617 = vrot.lane.b32.xlu0 %v411, 64
      %v618 = vpop.permute.xlu0 %617
      %619 = vrot.lane.b32.xlu0 %v412, 64
      %v620 = vpop.permute.xlu0 %619
      %621 = vrot.lane.b32.xlu0 %v413, 64
      %v622 = vpop.permute.xlu0 %621
      %655 = vrot.lane.b32.xlu0 %v414, 96
      %v656 = vpop.permute.xlu0 %655
      %657 = vrot.lane.b32.xlu0 %v415, 96
      %v658 = vpop.permute.xlu0 %657
      %659 = vrot.lane.b32.xlu0 %v416, 96
      %v660 = vpop.permute.xlu0 %659
      %661 = vrot.lane.b32.xlu0 %v417, 96
      %v662 = vpop.permute.xlu0 %661
      %663 = vrot.lane.b32.xlu0 %v418, 96
      %v664 = vpop.permute.xlu0 %663
      %665 = vrot.lane.b32.xlu0 %v419, 96
      %v666 = vpop.permute.xlu0 %665
      %667 = vrot.lane.b32.xlu0 %v420, 96
      %v668 = vpop.permute.xlu0 %667
      %669 = vrot.lane.b32.xlu0 %v421, 96
      %v670 = vpop.permute.xlu0 %669
      %671 = vrot.lane.b32.xlu0 %v422, 96
      %v672 = vpop.permute.xlu0 %671
      %673 = vrot.lane.b32.xlu0 %v423, 96
      %v674 = vpop.permute.xlu0 %673
      %675 = vrot.lane.b32.xlu0 %v424, 96
      %v676 = vpop.permute.xlu0 %675
      %677 = vrot.lane.b32.xlu0 %v425, 96
      %v678 = vpop.permute.xlu0 %677
      %679 = vrot.lane.b32.xlu0 %v426, 96
      %v680 = vpop.permute.xlu0 %679
      %681 = vrot.lane.b32.xlu0 %v427, 96
      %v682 = vpop.permute.xlu0 %681
      %683 = vrot.lane.b32.xlu0 %v428, 96
      %v684 = vpop.permute.xlu0 %683
      %685 = vrot.lane.b32.xlu0 %v429, 96
      %v686 = vpop.permute.xlu0 %685
      %719 = vrot.lane.b32.xlu0 %v446, 32
      %v720 = vpop.permute.xlu0 %719
      %721 = vrot.lane.b32.xlu0 %v447, 32
      %v722 = vpop.permute.xlu0 %721
      %723 = vrot.lane.b32.xlu0 %v448, 32
      %v724 = vpop.permute.xlu0 %723
      %725 = vrot.lane.b32.xlu0 %v449, 32
      %v726 = vpop.permute.xlu0 %725
      %727 = vrot.lane.b32.xlu0 %v450, 32
      %v728 = vpop.permute.xlu0 %727
      %729 = vrot.lane.b32.xlu0 %v451, 32
      %v730 = vpop.permute.xlu0 %729
      %731 = vrot.lane.b32.xlu0 %v452, 32
      %v732 = vpop.permute.xlu0 %731
      %733 = vrot.lane.b32.xlu0 %v453, 32
      %v734 = vpop.permute.xlu0 %733
      %735 = vrot.lane.b32.xlu0 %v454, 32
      %v736 = vpop.permute.xlu0 %735
      %737 = vrot.lane.b32.xlu0 %v455, 32
      %v738 = vpop.permute.xlu0 %737
      %739 = vrot.lane.b32.xlu0 %v456, 32
      %v740 = vpop.permute.xlu0 %739
      %741 = vrot.lane.b32.xlu0 %v457, 32
      %v742 = vpop.permute.xlu0 %741
      %743 = vrot.lane.b32.xlu0 %v458, 32
      %v744 = vpop.permute.xlu0 %743
      %745 = vrot.lane.b32.xlu0 %v459, 32
      %v746 = vpop.permute.xlu0 %745
      %747 = vrot.lane.b32.xlu0 %v460, 32
      %v748 = vpop.permute.xlu0 %747
      %749 = vrot.lane.b32.xlu0 %v461, 32
      %v750 = vpop.permute.xlu0 %749
      %783 = vrot.lane.b32.xlu0 %v463, 64
      %v784 = vpop.permute.xlu0 %783
      %785 = vrot.lane.b32.xlu0 %v464, 64
      %v786 = vpop.permute.xlu0 %785
      %787 = vrot.lane.b32.xlu0 %v465, 64
      %v788 = vpop.permute.xlu0 %787
      %789 = vrot.lane.b32.xlu0 %v466, 64
      %v790 = vpop.permute.xlu0 %789
      %791 = vrot.lane.b32.xlu0 %v467, 64
      %v792 = vpop.permute.xlu0 %791
      %793 = vrot.lane.b32.xlu0 %v468, 64
      %v794 = vpop.permute.xlu0 %793
      %795 = vrot.lane.b32.xlu0 %v469, 64
      %v796 = vpop.permute.xlu0 %795
      %797 = vrot.lane.b32.xlu0 %v470, 64
      %v798 = vpop.permute.xlu0 %797
      %799 = vrot.lane.b32.xlu0 %v471, 64
      %v800 = vpop.permute.xlu0 %799
      %801 = vrot.lane.b32.xlu0 %v472, 64
      %v802 = vpop.permute.xlu0 %801
      %803 = vrot.lane.b32.xlu0 %v473, 64
      %v804 = vpop.permute.xlu0 %803
      %805 = vrot.lane.b32.xlu0 %v474, 64
      %v806 = vpop.permute.xlu0 %805
      %807 = vrot.lane.b32.xlu0 %v475, 64
      %v808 = vpop.permute.xlu0 %807
      %809 = vrot.lane.b32.xlu0 %v476, 64
      %v810 = vpop.permute.xlu0 %809
      %811 = vrot.lane.b32.xlu0 %v477, 64
      %v812 = vpop.permute.xlu0 %811
      %813 = vrot.lane.b32.xlu0 %v478, 64
      %v814 = vpop.permute.xlu0 %813
      %847 = vrot.lane.b32.xlu0 %v479, 96
      %v848 = vpop.permute.xlu0 %847
      %849 = vrot.lane.b32.xlu0 %v480, 96
      %v850 = vpop.permute.xlu0 %849
      %851 = vrot.lane.b32.xlu0 %v481, 96
      %v852 = vpop.permute.xlu0 %851
      %853 = vrot.lane.b32.xlu0 %v482, 96
      %v854 = vpop.permute.xlu0 %853
      %855 = vrot.lane.b32.xlu0 %v483, 96
      %v856 = vpop.permute.xlu0 %855
      %857 = vrot.lane.b32.xlu0 %v484, 96
      %v858 = vpop.permute.xlu0 %857
      %859 = vrot.lane.b32.xlu0 %v485, 96
      %v860 = vpop.permute.xlu0 %859
      %861 = vrot.lane.b32.xlu0 %v486, 96
      %v862 = vpop.permute.xlu0 %861
      %863 = vrot.lane.b32.xlu0 %v487, 96
      %v864 = vpop.permute.xlu0 %863
      %865 = vrot.lane.b32.xlu0 %v488, 96
      %v866 = vpop.permute.xlu0 %865
      %867 = vrot.lane.b32.xlu0 %v489, 96
      %v868 = vpop.permute.xlu0 %867
      %869 = vrot.lane.b32.xlu0 %v490, 96
      %v870 = vpop.permute.xlu0 %869
      %871 = vrot.lane.b32.xlu0 %v491, 96
      %v872 = vpop.permute.xlu0 %871
      %873 = vrot.lane.b32.xlu0 %v492, 96
      %v874 = vpop.permute.xlu0 %873
      %875 = vrot.lane.b32.xlu0 %v493, 96
      %v876 = vpop.permute.xlu0 %875
      %877 = vrot.lane.b32.xlu0 %v494, 96
      %v878 = vpop.permute.xlu0 %877
      %v895 = vsel %vm275, %v366, %v528
      %v896 = vsel %vm275, %v367, %v530
      %v897 = vsel %vm275, %v368, %v532
      %v898 = vsel %vm275, %v369, %v534
      %v899 = vsel %vm275, %v370, %v536
      %v900 = vsel %vm275, %v371, %v538
      %v901 = vsel %vm275, %v372, %v540
      %v902 = vsel %vm275, %v373, %v542
      %v903 = vsel %vm275, %v374, %v544
      %v904 = vsel %vm275, %v375, %v546
      %v905 = vsel %vm275, %v376, %v548
      %v906 = vsel %vm275, %v377, %v550
      %v907 = vsel %vm275, %v378, %v552
      %v908 = vsel %vm275, %v379, %v554
      %v909 = vsel %vm275, %v380, %v556
      %v910 = vsel %vm275, %v381, %v558
      %vm911 = vcmask 523264
      %v912 = vsel %vm911, %v895, %v592
      %v913 = vsel %vm911, %v896, %v594
      %v914 = vsel %vm911, %v897, %v596
      %v915 = vsel %vm911, %v898, %v598
      %v916 = vsel %vm911, %v899, %v600
      %v917 = vsel %vm911, %v900, %v602
      %v918 = vsel %vm911, %v901, %v604
      %v919 = vsel %vm911, %v902, %v606
      %v920 = vsel %vm911, %v903, %v608
      %v921 = vsel %vm911, %v904, %v610
      %v922 = vsel %vm911, %v905, %v612
      %v923 = vsel %vm911, %v906, %v614
      %v924 = vsel %vm911, %v907, %v616
      %v925 = vsel %vm911, %v908, %v618
      %v926 = vsel %vm911, %v909, %v620
      %v927 = vsel %vm911, %v910, %v622
      %vm928 = vcmask 785408
      %v929 = vsel %vm928, %v912, %v656
      %v930 = vsel %vm928, %v913, %v658
      %v931 = vsel %vm928, %v914, %v660
      %v932 = vsel %vm928, %v915, %v662
      %v933 = vsel %vm928, %v916, %v664
      %v934 = vsel %vm928, %v917, %v666
      %v935 = vsel %vm928, %v918, %v668
      %v936 = vsel %vm928, %v919, %v670
      %v937 = vsel %vm928, %v920, %v672
      %v938 = vsel %vm928, %v921, %v674
      %v939 = vsel %vm928, %v922, %v676
      %v940 = vsel %vm928, %v923, %v678
      %v941 = vsel %vm928, %v924, %v680
      %v942 = vsel %vm928, %v925, %v682
      %v943 = vsel %vm928, %v926, %v684
      %v944 = vsel %vm928, %v927, %v686
      %v945 = vsel %vm275, %v430, %v720
      %v946 = vsel %vm275, %v431, %v722
      %v947 = vsel %vm275, %v432, %v724
      %v948 = vsel %vm275, %v433, %v726
      %v949 = vsel %vm275, %v434, %v728
      %v950 = vsel %vm275, %v435, %v730
      %v951 = vsel %vm275, %v436, %v732
      %v952 = vsel %vm275, %v437, %v734
      %v953 = vsel %vm275, %v438, %v736
      %v954 = vsel %vm275, %v439, %v738
      %v955 = vsel %vm275, %v440, %v740
      %v956 = vsel %vm275, %v441, %v742
      %v957 = vsel %vm275, %v442, %v744
      %v958 = vsel %vm275, %v443, %v746
      %v959 = vsel %vm275, %v444, %v748
      %v960 = vsel %vm275, %v445, %v750
      %v961 = vsel %vm911, %v945, %v784
      %v962 = vsel %vm911, %v946, %v786
      %v963 = vsel %vm911, %v947, %v788
      %v964 = vsel %vm911, %v948, %v790
      %v965 = vsel %vm911, %v949, %v792
      %v966 = vsel %vm911, %v950, %v794
      %v967 = vsel %vm911, %v951, %v796
      %v968 = vsel %vm911, %v952, %v798
      %v969 = vsel %vm911, %v953, %v800
      %v970 = vsel %vm911, %v954, %v802
      %v971 = vsel %vm911, %v955, %v804
      %v972 = vsel %vm911, %v956, %v806
      %v973 = vsel %vm911, %v957, %v808
      %v974 = vsel %vm911, %v958, %v810
      %v975 = vsel %vm911, %v959, %v812
      %v976 = vsel %vm911, %v960, %v814
      %v977 = vsel %vm928, %v961, %v848
      %v978 = vsel %vm928, %v962, %v850
      %v979 = vsel %vm928, %v963, %v852
      %v980 = vsel %vm928, %v964, %v854
      %v981 = vsel %vm928, %v965, %v856
      %v982 = vsel %vm928, %v966, %v858
      %v983 = vsel %vm928, %v967, %v860
      %v984 = vsel %vm928, %v968, %v862
      %v985 = vsel %vm928, %v969, %v864
      %v986 = vsel %vm928, %v970, %v866
      %v987 = vsel %vm928, %v971, %v868
      %v988 = vsel %vm928, %v972, %v870
      %v989 = vsel %vm928, %v973, %v872
      %v990 = vsel %vm928, %v974, %v874
      %v991 = vsel %vm928, %v975, %v876
      %v992 = vsel %vm928, %v976, %v878
      %v993 = vpack.c.bf16 %v930, %v929
      %v994 = vpack.c.bf16 %v978, %v977
      %v995 = vpack.c.bf16 %v496, %v495
      %v996 = vpack.c.bf16 %v932, %v931
      %v997 = vpack.c.bf16 %v980, %v979
      %v998 = vpack.c.bf16 %v498, %v497
      %v999 = vpack.c.bf16 %v934, %v933
      %v1000 = vpack.c.bf16 %v982, %v981
      %v1001 = vpack.c.bf16 %v500, %v499
      %v1002 = vpack.c.bf16 %v936, %v935
      %v1003 = vpack.c.bf16 %v984, %v983
      %v1004 = vpack.c.bf16 %v502, %v501
      %v1005 = vpack.c.bf16 %v938, %v937
      %v1006 = vpack.c.bf16 %v986, %v985
      %v1007 = vpack.c.bf16 %v504, %v503
      %v1008 = vpack.c.bf16 %v940, %v939
      %v1009 = vpack.c.bf16 %v988, %v987
      %v1010 = vpack.c.bf16 %v506, %v505
      %v1011 = vpack.c.bf16 %v942, %v941
      %v1012 = vpack.c.bf16 %v990, %v989
      %v1013 = vpack.c.bf16 %v508, %v507
      %v1014 = vpack.c.bf16 %v944, %v943
      %v1015 = vpack.c.bf16 %v992, %v991
      %v1016 = vpack.c.bf16 %v510, %v509
      %v1017 = vld [vmem:[%s257] sm:$0xf]
      %v1018 = vld [vmem:[%s257 + $0x4] sm:$0xf]
      %v1019 = vld [vmem:[%s257 + $0x8] sm:$0xf]
      %v1020 = vld [vmem:[%s257 + $0xc] sm:$0xf]
      %v1021 = vld [vmem:[%s257 + $0x10] sm:$0xf]
      %v1022 = vld [vmem:[%s257 + $0x14] sm:$0xf]
      %v1023 = vld [vmem:[%s257 + $0x18] sm:$0xf]
      %v1024 = vld [vmem:[%s257 + $0x1c] sm:$0xf]
      %v1025 = vld [vmem:[%s257 + $0x20] sm:$0xf]
      %v1026 = vld [vmem:[%s257 + $0x24] sm:$0xf]
      %v1027 = vld [vmem:[%s257 + $0x28] sm:$0xf]
      %v1028 = vld [vmem:[%s257 + $0x2c] sm:$0xf]
      %v1029 = vld [vmem:[%s257 + $0x30] sm:$0xf]
      %v1030 = vld [vmem:[%s257 + $0x34] sm:$0xf]
      %v1031 = vld [vmem:[%s257 + $0x38] sm:$0xf]
      %v1032 = vld [vmem:[%s257 + $0x3c] sm:$0xf]
      %v1033 = vld [vmem:[%s257 + $0x40] sm:$0xf]
      %v1034 = vld [vmem:[%s257 + $0x44] sm:$0xf]
      %v1035 = vld [vmem:[%s257 + $0x48] sm:$0xf]
      %v1036 = vld [vmem:[%s257 + $0x4c] sm:$0xf]
      %v1037 = vld [vmem:[%s257 + $0x50] sm:$0xf]
      %v1038 = vld [vmem:[%s257 + $0x54] sm:$0xf]
      %v1039 = vld [vmem:[%s257 + $0x58] sm:$0xf]
      %v1040 = vld [vmem:[%s257 + $0x5c] sm:$0xf]
      %v1041 = vld [vmem:[%s257 + $0x60] sm:$0xf]
      %v1042 = vld [vmem:[%s257 + $0x64] sm:$0xf]
      %v1043 = vld [vmem:[%s257 + $0x68] sm:$0xf]
      %v1044 = vld [vmem:[%s257 + $0x6c] sm:$0xf]
      %v1045 = vld [vmem:[%s257 + $0x70] sm:$0xf]
      %v1046 = vld [vmem:[%s257 + $0x74] sm:$0xf]
      %v1047 = vld [vmem:[%s257 + $0x78] sm:$0xf]
      %v1048 = vld [vmem:[%s257 + $0x7c] sm:$0xf]
      %v1049 = vld [vmem:[%s257 + $0x80] sm:$0xf]
      %v1050 = vld [vmem:[%s257 + $0x84] sm:$0xf]
      %v1051 = vld [vmem:[%s257 + $0x88] sm:$0xf]
      %v1052 = vld [vmem:[%s257 + $0x8c] sm:$0xf]
      %v1053 = vld [vmem:[%s261] sm:$0x1]
      %v1055 = vperm.slane %v1053, 0
      %v1093 = vunpack.c.l.b16 %v1017
      %v1094 = vunpack.c.l.b16 %v1018
      %v1095 = vunpack.c.l.b16 %v1019
      %v1096 = vunpack.c.l.b16 %v1020
      %v1097 = vunpack.c.l.b16 %v1021
      %v1098 = vunpack.c.l.b16 %v1022
      %v1099 = vunpack.c.l.b16 %v1023
      %v1100 = vunpack.c.l.b16 %v1024
      %v1101 = vunpack.c.l.b16 %v1025
      %v1102 = vunpack.c.l.b16 %v1026
      %v1103 = vunpack.c.l.b16 %v1027
      %v1104 = vunpack.c.l.b16 %v1028
      %v1105 = vunpack.c.l.b16 %v1029
      %v1106 = vunpack.c.l.b16 %v1030
      %v1107 = vunpack.c.l.b16 %v1031
      %v1108 = vunpack.c.l.b16 %v1032
      %v1109 = vunpack.c.l.b16 %v1033
      %v1110 = vunpack.c.l.b16 %v1034
      %v1111 = vunpack.c.l.b16 %v1035
      %v1112 = vunpack.c.l.b16 %v1036
      %v1113 = vunpack.c.l.b16 %v1037
      %v1114 = vunpack.c.l.b16 %v1038
      %v1115 = vunpack.c.l.b16 %v1039
      %v1116 = vunpack.c.l.b16 %v1040
      %v1117 = vunpack.c.l.b16 %v1041
      %v1118 = vunpack.c.l.b16 %v1042
      %v1119 = vunpack.c.l.b16 %v1043
      %v1120 = vunpack.c.l.b16 %v1044
      %v1121 = vunpack.c.l.b16 %v1045
      %v1122 = vunpack.c.l.b16 %v1046
      %v1123 = vunpack.c.l.b16 %v1047
      %v1124 = vunpack.c.l.b16 %v1048
      %v1125 = vunpack.c.l.b16 %v1049
      %v1126 = vunpack.c.l.b16 %v1050
      %v1127 = vunpack.c.l.b16 %v1051
      %v1128 = vunpack.c.l.b16 %v1052
      %v1129 = vpack.c.b16 %v1094, %v1093
      %v1130 = vpack.c.b16 %v1096, %v1095
      %v1131 = vpack.c.b16 %v1098, %v1097
      %v1132 = vpack.c.b16 %v1100, %v1099
      %v1133 = vpack.c.b16 %v1102, %v1101
      %v1134 = vpack.c.b16 %v1104, %v1103
      %v1135 = vpack.c.b16 %v1106, %v1105
      %v1136 = vpack.c.b16 %v1108, %v1107
      %v1137 = vpack.c.b16 %v1110, %v1109
      %v1138 = vpack.c.b16 %v1112, %v1111
      %v1139 = vpack.c.b16 %v1114, %v1113
      %v1140 = vpack.c.b16 %v1116, %v1115
      %v1141 = vpack.c.b16 %v1118, %v1117
      %v1142 = vpack.c.b16 %v1120, %v1119
      %v1143 = vpack.c.b16 %v1122, %v1121
      %v1144 = vpack.c.b16 %v1124, %v1123
      %v1145 = vpack.c.b16 %v1126, %v1125
      %v1146 = vpack.c.b16 %v1128, %v1127
      %v1166 = vsel %vm275, %v995, 0
      %v1169 = vsel %vm275, %v998, 0
      %v1172 = vsel %vm275, %v1001, 0
      %v1175 = vsel %vm275, %v1004, 0
      %v1178 = vsel %vm275, %v1007, 0
      %v1181 = vsel %vm275, %v1010, 0
      %v1184 = vsel %vm275, %v1013, 0
      %v1187 = vsel %vm275, %v1016, 0
      %1189 = vmatpush.bf16.msra.mxu0 %v1136
      %1190 = vmatpush.bf16.msra.mxu0 %v1135
      %1191 = vmatpush.bf16.msra.mxu0 %v1134
      %1192 = vmatpush.bf16.msra.mxu0 %v1133
      %1193 = vmatpush.bf16.msra.mxu0 %v1132
      %1194 = vmatpush.bf16.msra.mxu0 %v1131
      %1195 = vmatpush.bf16.msra.mxu0 %v1130
      %1196 = vmatpush.bf16.msra.mxu0 %v1129
      %1197 = vmatmul.bf16.gmra.mxu0 %v993
      %v1198 = vpop.f32.mrf.mxu0
      %v1199 = vadd.f32 %v1055, %v1198
      %v1200 = vpop.f32.mrf.mxu0
      %v1201 = vadd.f32 %v1055, %v1200
      %1202 = vmatmul.bf16.gmra.mxu0 %v996
      %v1203 = vpop.f32.mrf.mxu0
      %v1204 = vadd.f32 %v1055, %v1203
      %v1205 = vpop.f32.mrf.mxu0
      %v1206 = vadd.f32 %v1055, %v1205
      %1207 = vmatmul.bf16.gmra.mxu0 %v999
      %v1208 = vpop.f32.mrf.mxu0
      %v1209 = vadd.f32 %v1055, %v1208
      %v1210 = vpop.f32.mrf.mxu0
      %v1211 = vadd.f32 %v1055, %v1210
      %1212 = vmatmul.bf16.gmra.mxu0 %v1002
      %v1213 = vpop.f32.mrf.mxu0
      %v1214 = vadd.f32 %v1055, %v1213
      %v1215 = vpop.f32.mrf.mxu0
      %v1216 = vadd.f32 %v1055, %v1215
      %1217 = vmatmul.bf16.gmra.mxu0 %v1005
      %v1218 = vpop.f32.mrf.mxu0
      %v1219 = vadd.f32 %v1055, %v1218
      %v1220 = vpop.f32.mrf.mxu0
      %v1221 = vadd.f32 %v1055, %v1220
      %1222 = vmatmul.bf16.gmra.mxu0 %v1008
      %v1223 = vpop.f32.mrf.mxu0
      %v1224 = vadd.f32 %v1055, %v1223
      %v1225 = vpop.f32.mrf.mxu0
      %v1226 = vadd.f32 %v1055, %v1225
      %1227 = vmatmul.bf16.gmra.mxu0 %v1011
      %v1228 = vpop.f32.mrf.mxu0
      %v1229 = vadd.f32 %v1055, %v1228
      %v1230 = vpop.f32.mrf.mxu0
      %v1231 = vadd.f32 %v1055, %v1230
      %1232 = vmatmul.bf16.gmra.mxu0 %v1014
      %v1233 = vpop.f32.mrf.mxu0
      %v1234 = vadd.f32 %v1055, %v1233
      %v1235 = vpop.f32.mrf.mxu0
      %v1236 = vadd.f32 %v1055, %v1235
      %1237 = vdwg.mxu0
      %1238 = vmatpush.bf16.msra.mxu0 %v1144
      %1239 = vmatpush.bf16.msra.mxu0 %v1143
      %1240 = vmatpush.bf16.msra.mxu0 %v1142
      %1241 = vmatpush.bf16.msra.mxu0 %v1141
      %1242 = vmatpush.bf16.msra.mxu0 %v1140
      %1243 = vmatpush.bf16.msra.mxu0 %v1139
      %1244 = vmatpush.bf16.msra.mxu0 %v1138
      %1245 = vmatpush.bf16.msra.mxu0 %v1137
      %1246 = vmatmul.bf16.gmra.mxu0 %v994
      %v1247 = vpop.f32.mrf.mxu0
      %v1248 = vadd.f32 %v1199, %v1247
      %v1249 = vpop.f32.mrf.mxu0
      %v1250 = vadd.f32 %v1201, %v1249
      %1251 = vmatmul.bf16.gmra.mxu0 %v997
      %v1252 = vpop.f32.mrf.mxu0
      %v1253 = vadd.f32 %v1204, %v1252
      %v1254 = vpop.f32.mrf.mxu0
      %v1255 = vadd.f32 %v1206, %v1254
      %1256 = vmatmul.bf16.gmra.mxu0 %v1000
      %v1257 = vpop.f32.mrf.mxu0
      %v1258 = vadd.f32 %v1209, %v1257
      %v1259 = vpop.f32.mrf.mxu0
      %v1260 = vadd.f32 %v1211, %v1259
      %1261 = vmatmul.bf16.gmra.mxu0 %v1003
      %v1262 = vpop.f32.mrf.mxu0
      %v1263 = vadd.f32 %v1214, %v1262
      %v1264 = vpop.f32.mrf.mxu0
      %v1265 = vadd.f32 %v1216, %v1264
      %1266 = vmatmul.bf16.gmra.mxu0 %v1006
      %v1267 = vpop.f32.mrf.mxu0
      %v1268 = vadd.f32 %v1219, %v1267
      %v1269 = vpop.f32.mrf.mxu0
      %v1270 = vadd.f32 %v1221, %v1269
      %1271 = vmatmul.bf16.gmra.mxu0 %v1009
      %v1272 = vpop.f32.mrf.mxu0
      %v1273 = vadd.f32 %v1224, %v1272
      %v1274 = vpop.f32.mrf.mxu0
      %v1275 = vadd.f32 %v1226, %v1274
      %1276 = vmatmul.bf16.gmra.mxu0 %v1012
      %v1277 = vpop.f32.mrf.mxu0
      %v1278 = vadd.f32 %v1229, %v1277
      %v1279 = vpop.f32.mrf.mxu0
      %v1280 = vadd.f32 %v1231, %v1279
      %1281 = vmatmul.bf16.gmra.mxu0 %v1015
      %v1282 = vpop.f32.mrf.mxu0
      %v1283 = vadd.f32 %v1234, %v1282
      %v1284 = vpop.f32.mrf.mxu0
      %v1285 = vadd.f32 %v1236, %v1284
      %1286 = vdwg.mxu0
      %1287 = vmatpush.bf16.msra.mxu0 0
      %1288 = vmatpush.bf16.msra.mxu0 0
      %1289 = vmatpush.bf16.msra.mxu0 0
      %1290 = vmatpush.bf16.msra.mxu0 0
      %1291 = vmatpush.bf16.msra.mxu0 0
      %1292 = vmatpush.bf16.msra.mxu0 0
      %1293 = vmatpush.bf16.msra.mxu0 %v1146
      %1294 = vmatpush.bf16.msra.mxu0 %v1145
      %1295 = vmatmul.bf16.gmra.mxu0 %v1166
      %v1296 = vpop.f32.mrf.mxu0
      %v1297 = vadd.f32 %v1248, %v1296
      %v1298 = vpop.f32.mrf.mxu0
      %v1299 = vadd.f32 %v1250, %v1298
      %1300 = vmatmul.bf16.gmra.mxu0 %v1169
      %v1301 = vpop.f32.mrf.mxu0
      %v1302 = vadd.f32 %v1253, %v1301
      %v1303 = vpop.f32.mrf.mxu0
      %v1304 = vadd.f32 %v1255, %v1303
      %1305 = vmatmul.bf16.gmra.mxu0 %v1172
      %v1306 = vpop.f32.mrf.mxu0
      %v1307 = vadd.f32 %v1258, %v1306
      %v1308 = vpop.f32.mrf.mxu0
      %v1309 = vadd.f32 %v1260, %v1308
      %1310 = vmatmul.bf16.gmra.mxu0 %v1175
      %v1311 = vpop.f32.mrf.mxu0
      %v1312 = vadd.f32 %v1263, %v1311
      %v1313 = vpop.f32.mrf.mxu0
      %v1314 = vadd.f32 %v1265, %v1313
      %1315 = vmatmul.bf16.gmra.mxu0 %v1178
      %v1316 = vpop.f32.mrf.mxu0
      %v1317 = vadd.f32 %v1268, %v1316
      %v1318 = vpop.f32.mrf.mxu0
      %v1319 = vadd.f32 %v1270, %v1318
      %1320 = vmatmul.bf16.gmra.mxu0 %v1181
      %v1321 = vpop.f32.mrf.mxu0
      %v1322 = vadd.f32 %v1273, %v1321
      %v1323 = vpop.f32.mrf.mxu0
      %v1324 = vadd.f32 %v1275, %v1323
      %1325 = vmatmul.bf16.gmra.mxu0 %v1184
      %v1326 = vpop.f32.mrf.mxu0
      %v1327 = vadd.f32 %v1278, %v1326
      %v1328 = vpop.f32.mrf.mxu0
      %v1329 = vadd.f32 %v1280, %v1328
      %1330 = vmatmul.bf16.gmra.mxu0 %v1187
      %v1331 = vpop.f32.mrf.mxu0
      %v1332 = vadd.f32 %v1283, %v1331
      %v1333 = vpop.f32.mrf.mxu0
      %v1334 = vadd.f32 %v1285, %v1333
      %1335 = vdwg.mxu0
      %v1336 = vmax.f32 %v1297, 0.0
      %v1337 = vmax.f32 %v1299, 0.0
      %v1338 = vmax.f32 %v1302, 0.0
      %v1339 = vmax.f32 %v1304, 0.0
      %v1340 = vmax.f32 %v1307, 0.0
      %v1341 = vmax.f32 %v1309, 0.0
      %v1342 = vmax.f32 %v1312, 0.0
      %v1343 = vmax.f32 %v1314, 0.0
      %v1344 = vmax.f32 %v1317, 0.0
      %v1345 = vmax.f32 %v1319, 0.0
      %v1346 = vmax.f32 %v1322, 0.0
      %v1347 = vmax.f32 %v1324, 0.0
      %v1348 = vmax.f32 %v1327, 0.0
      %v1349 = vmax.f32 %v1329, 0.0
      %v1350 = vmax.f32 %v1332, 0.0
      %v1351 = vmax.f32 %v1334, 0.0
      %1352 = vst.msk [vmem:[%s349 + $0x1] sm:$0xff] %vm275, %v1336
      %1353 = vst.msk [vmem:[%s349 + $0x11] sm:$0xff] %vm275, %v1337
      %1354 = vst.msk [vmem:[%s349 + $0x21] sm:$0xff] %vm275, %v1338
      %1355 = vst.msk [vmem:[%s349 + $0x31] sm:$0xff] %vm275, %v1339
      %1356 = vst.msk [vmem:[%s349 + $0x41] sm:$0xff] %vm275, %v1340
      %1357 = vst.msk [vmem:[%s349 + $0x51] sm:$0xff] %vm275, %v1341
      %1358 = vst.msk [vmem:[%s349 + $0x61] sm:$0xff] %vm275, %v1342
      %1359 = vst.msk [vmem:[%s349 + $0x71] sm:$0xff] %vm275, %v1343
      %1360 = vst.msk [vmem:[%s349 + $0xa1] sm:$0xff] %vm275, %v1344
      %1361 = vst.msk [vmem:[%s349 + $0xb1] sm:$0xff] %vm275, %v1345
      %1362 = vst.msk [vmem:[%s349 + $0xc1] sm:$0xff] %vm275, %v1346
      %1363 = vst.msk [vmem:[%s349 + $0xd1] sm:$0xff] %vm275, %v1347
      %1364 = vst.msk [vmem:[%s349 + $0xe1] sm:$0xff] %vm275, %v1348
      %1365 = vst.msk [vmem:[%s349 + $0xf1] sm:$0xff] %vm275, %v1349
      %1366 = vst.msk [vmem:[%s349 + $0x101] sm:$0xff] %vm275, %v1350
      %1367 = vst.msk [vmem:[%s349 + $0x111] sm:$0xff] %vm275, %v1351
      %v1368 = vld [vmem:[#allocation2] sm:$0xff]
      %v1369 = vld [vmem:[#allocation2 + $0x10] sm:$0xff]
      %v1370 = vld [vmem:[#allocation2 + $0x20] sm:$0xff]
      %v1371 = vld [vmem:[#allocation2 + $0x30] sm:$0xff]
      %v1372 = vld [vmem:[#allocation2 + $0x40] sm:$0xff]
      %v1373 = vld [vmem:[#allocation2 + $0x50] sm:$0xff]
      %v1374 = vld [vmem:[#allocation2 + $0x60] sm:$0xff]
      %v1375 = vld [vmem:[#allocation2 + $0x70] sm:$0xff]
      %v1376 = vld [vmem:[#allocation2 + $0xa0] sm:$0xff]
      %v1377 = vld [vmem:[#allocation2 + $0xb0] sm:$0xff]
      %v1378 = vld [vmem:[#allocation2 + $0xc0] sm:$0xff]
      %v1379 = vld [vmem:[#allocation2 + $0xd0] sm:$0xff]
      %v1380 = vld [vmem:[#allocation2 + $0xe0] sm:$0xff]
      %v1381 = vld [vmem:[#allocation2 + $0xf0] sm:$0xff]
      %v1382 = vld [vmem:[#allocation2 + $0x100] sm:$0xff]
      %v1383 = vld [vmem:[#allocation2 + $0x110] sm:$0xff]
      %v1384 = vld [vmem:[#allocation2 + $0x1] sm:$0xff]
      %v1385 = vld [vmem:[#allocation2 + $0x11] sm:$0xff]
      %v1386 = vld [vmem:[#allocation2 + $0x21] sm:$0xff]
      %v1387 = vld [vmem:[#allocation2 + $0x31] sm:$0xff]
      %v1388 = vld [vmem:[#allocation2 + $0x41] sm:$0xff]
      %v1389 = vld [vmem:[#allocation2 + $0x51] sm:$0xff]
      %v1390 = vld [vmem:[#allocation2 + $0x61] sm:$0xff]
      %v1391 = vld [vmem:[#allocation2 + $0x71] sm:$0xff]
      %v1392 = vld [vmem:[#allocation2 + $0xa1] sm:$0xff]
      %v1393 = vld [vmem:[#allocation2 + $0xb1] sm:$0xff]
      %v1394 = vld [vmem:[#allocation2 + $0xc1] sm:$0xff]
      %v1395 = vld [vmem:[#allocation2 + $0xd1] sm:$0xff]
      %v1396 = vld [vmem:[#allocation2 + $0xe1] sm:$0xff]
      %v1397 = vld [vmem:[#allocation2 + $0xf1] sm:$0xff]
      %v1398 = vld [vmem:[#allocation2 + $0x101] sm:$0xff]
      %v1399 = vld [vmem:[#allocation2 + $0x111] sm:$0xff]
      %v1400 = vld [vmem:[#allocation2 + $0x2] sm:$0xff]
      %v1401 = vld [vmem:[#allocation2 + $0x12] sm:$0xff]
      %v1402 = vld [vmem:[#allocation2 + $0x22] sm:$0xff]
      %v1403 = vld [vmem:[#allocation2 + $0x32] sm:$0xff]
      %v1404 = vld [vmem:[#allocation2 + $0x42] sm:$0xff]
      %v1405 = vld [vmem:[#allocation2 + $0x52] sm:$0xff]
      %v1406 = vld [vmem:[#allocation2 + $0x62] sm:$0xff]
      %v1407 = vld [vmem:[#allocation2 + $0x72] sm:$0xff]
      %v1408 = vld [vmem:[#allocation2 + $0xa2] sm:$0xff]
      %v1409 = vld [vmem:[#allocation2 + $0xb2] sm:$0xff]
      %v1410 = vld [vmem:[#allocation2 + $0xc2] sm:$0xff]
      %v1411 = vld [vmem:[#allocation2 + $0xd2] sm:$0xff]
      %v1412 = vld [vmem:[#allocation2 + $0xe2] sm:$0xff]
      %v1413 = vld [vmem:[#allocation2 + $0xf2] sm:$0xff]
      %v1414 = vld [vmem:[#allocation2 + $0x102] sm:$0xff]
      %v1415 = vld [vmem:[#allocation2 + $0x112] sm:$0xff]
      %v1416 = vld [vmem:[%s349] sm:$0xff]
      %v1417 = vld [vmem:[%s349 + $0x10] sm:$0xff]
      %v1418 = vld [vmem:[%s349 + $0x20] sm:$0xff]
      %v1419 = vld [vmem:[%s349 + $0x30] sm:$0xff]
      %v1420 = vld [vmem:[%s349 + $0x40] sm:$0xff]
      %v1421 = vld [vmem:[%s349 + $0x50] sm:$0xff]
      %v1422 = vld [vmem:[%s349 + $0x60] sm:$0xff]
      %v1423 = vld [vmem:[%s349 + $0x70] sm:$0xff]
      %v1424 = vld [vmem:[%s349 + $0xa0] sm:$0xff]
      %v1425 = vld [vmem:[%s349 + $0xb0] sm:$0xff]
      %v1426 = vld [vmem:[%s349 + $0xc0] sm:$0xff]
      %v1427 = vld [vmem:[%s349 + $0xd0] sm:$0xff]
      %v1428 = vld [vmem:[%s349 + $0xe0] sm:$0xff]
      %v1429 = vld [vmem:[%s349 + $0xf0] sm:$0xff]
      %v1430 = vld [vmem:[%s349 + $0x100] sm:$0xff]
      %v1431 = vld [vmem:[%s349 + $0x110] sm:$0xff]
      %v1432 = vld [vmem:[%s349 + $0x1] sm:$0xff]
      %v1433 = vld [vmem:[%s349 + $0x11] sm:$0xff]
      %v1434 = vld [vmem:[%s349 + $0x21] sm:$0xff]
      %v1435 = vld [vmem:[%s349 + $0x31] sm:$0xff]
      %v1436 = vld [vmem:[%s349 + $0x41] sm:$0xff]
      %v1437 = vld [vmem:[%s349 + $0x51] sm:$0xff]
      %v1438 = vld [vmem:[%s349 + $0x61] sm:$0xff]
      %v1439 = vld [vmem:[%s349 + $0x71] sm:$0xff]
      %v1440 = vld [vmem:[%s349 + $0xa1] sm:$0xff]
      %v1441 = vld [vmem:[%s349 + $0xb1] sm:$0xff]
      %v1442 = vld [vmem:[%s349 + $0xc1] sm:$0xff]
      %v1443 = vld [vmem:[%s349 + $0xd1] sm:$0xff]
      %v1444 = vld [vmem:[%s349 + $0xe1] sm:$0xff]
      %v1445 = vld [vmem:[%s349 + $0xf1] sm:$0xff]
      %v1446 = vld [vmem:[%s349 + $0x101] sm:$0xff]
      %v1447 = vld [vmem:[%s349 + $0x111] sm:$0xff]
      %v1448 = vld [vmem:[%s349 + $0x2] sm:$0xff]
      %v1449 = vld [vmem:[%s349 + $0x12] sm:$0xff]
      %v1450 = vld [vmem:[%s349 + $0x22] sm:$0xff]
      %v1451 = vld [vmem:[%s349 + $0x32] sm:$0xff]
      %v1452 = vld [vmem:[%s349 + $0x42] sm:$0xff]
      %v1453 = vld [vmem:[%s349 + $0x52] sm:$0xff]
      %v1454 = vld [vmem:[%s349 + $0x62] sm:$0xff]
      %v1455 = vld [vmem:[%s349 + $0x72] sm:$0xff]
      %v1456 = vld [vmem:[%s349 + $0xa2] sm:$0xff]
      %v1457 = vld [vmem:[%s349 + $0xb2] sm:$0xff]
      %v1458 = vld [vmem:[%s349 + $0xc2] sm:$0xff]
      %v1459 = vld [vmem:[%s349 + $0xd2] sm:$0xff]
      %v1460 = vld [vmem:[%s349 + $0xe2] sm:$0xff]
      %v1461 = vld [vmem:[%s349 + $0xf2] sm:$0xff]
      %v1462 = vld [vmem:[%s349 + $0x102] sm:$0xff]
      %v1463 = vld [vmem:[%s349 + $0x112] sm:$0xff]
      %v1464 = vld [vmem:[%s462] sm:$0xff]
      %v1465 = vld [vmem:[%s462 + $0x10] sm:$0xff]
      %v1466 = vld [vmem:[%s462 + $0x20] sm:$0xff]
      %v1467 = vld [vmem:[%s462 + $0x30] sm:$0xff]
      %v1468 = vld [vmem:[%s462 + $0x40] sm:$0xff]
      %v1469 = vld [vmem:[%s462 + $0x50] sm:$0xff]
      %v1470 = vld [vmem:[%s462 + $0x60] sm:$0xff]
      %v1471 = vld [vmem:[%s462 + $0x70] sm:$0xff]
      %v1472 = vld [vmem:[%s462 + $0xa0] sm:$0xff]
      %v1473 = vld [vmem:[%s462 + $0xb0] sm:$0xff]
      %v1474 = vld [vmem:[%s462 + $0xc0] sm:$0xff]
      %v1475 = vld [vmem:[%s462 + $0xd0] sm:$0xff]
      %v1476 = vld [vmem:[%s462 + $0xe0] sm:$0xff]
      %v1477 = vld [vmem:[%s462 + $0xf0] sm:$0xff]
      %v1478 = vld [vmem:[%s462 + $0x100] sm:$0xff]
      %v1479 = vld [vmem:[%s462 + $0x110] sm:$0xff]
      %v1480 = vld [vmem:[%s462 + $0x1] sm:$0xff]
      %v1481 = vld [vmem:[%s462 + $0x11] sm:$0xff]
      %v1482 = vld [vmem:[%s462 + $0x21] sm:$0xff]
      %v1483 = vld [vmem:[%s462 + $0x31] sm:$0xff]
      %v1484 = vld [vmem:[%s462 + $0x41] sm:$0xff]
      %v1485 = vld [vmem:[%s462 + $0x51] sm:$0xff]
      %v1486 = vld [vmem:[%s462 + $0x61] sm:$0xff]
      %v1487 = vld [vmem:[%s462 + $0x71] sm:$0xff]
      %v1488 = vld [vmem:[%s462 + $0xa1] sm:$0xff]
      %v1489 = vld [vmem:[%s462 + $0xb1] sm:$0xff]
      %v1490 = vld [vmem:[%s462 + $0xc1] sm:$0xff]
      %v1491 = vld [vmem:[%s462 + $0xd1] sm:$0xff]
      %v1492 = vld [vmem:[%s462 + $0xe1] sm:$0xff]
      %v1493 = vld [vmem:[%s462 + $0xf1] sm:$0xff]
      %v1494 = vld [vmem:[%s462 + $0x101] sm:$0xff]
      %v1495 = vld [vmem:[%s462 + $0x111] sm:$0xff]
      %v1496 = vld [vmem:[%s462 + $0x2] sm:$0xff]
      %v1497 = vld [vmem:[%s462 + $0x12] sm:$0xff]
      %v1498 = vld [vmem:[%s462 + $0x22] sm:$0xff]
      %v1499 = vld [vmem:[%s462 + $0x32] sm:$0xff]
      %v1500 = vld [vmem:[%s462 + $0x42] sm:$0xff]
      %v1501 = vld [vmem:[%s462 + $0x52] sm:$0xff]
      %v1502 = vld [vmem:[%s462 + $0x62] sm:$0xff]
      %v1503 = vld [vmem:[%s462 + $0x72] sm:$0xff]
      %v1504 = vld [vmem:[%s462 + $0xa2] sm:$0xff]
      %v1505 = vld [vmem:[%s462 + $0xb2] sm:$0xff]
      %v1506 = vld [vmem:[%s462 + $0xc2] sm:$0xff]
      %v1507 = vld [vmem:[%s462 + $0xd2] sm:$0xff]
      %v1508 = vld [vmem:[%s462 + $0xe2] sm:$0xff]
      %v1509 = vld [vmem:[%s462 + $0xf2] sm:$0xff]
      %v1510 = vld [vmem:[%s462 + $0x102] sm:$0xff]
      %v1511 = vld [vmem:[%s462 + $0x112] sm:$0xff]
      %1528 = vrot.lane.b32.xlu0 %v1384, 32
      %v1529 = vpop.permute.xlu0 %1528
      %1530 = vrot.lane.b32.xlu0 %v1385, 32
      %v1531 = vpop.permute.xlu0 %1530
      %1532 = vrot.lane.b32.xlu0 %v1386, 32
      %v1533 = vpop.permute.xlu0 %1532
      %1534 = vrot.lane.b32.xlu0 %v1387, 32
      %v1535 = vpop.permute.xlu0 %1534
      %1536 = vrot.lane.b32.xlu0 %v1388, 32
      %v1537 = vpop.permute.xlu0 %1536
      %1538 = vrot.lane.b32.xlu0 %v1389, 32
      %v1539 = vpop.permute.xlu0 %1538
      %1540 = vrot.lane.b32.xlu0 %v1390, 32
      %v1541 = vpop.permute.xlu0 %1540
      %1542 = vrot.lane.b32.xlu0 %v1391, 32
      %v1543 = vpop.permute.xlu0 %1542
      %1544 = vrot.lane.b32.xlu0 %v1392, 32
      %v1545 = vpop.permute.xlu0 %1544
      %1546 = vrot.lane.b32.xlu0 %v1393, 32
      %v1547 = vpop.permute.xlu0 %1546
      %1548 = vrot.lane.b32.xlu0 %v1394, 32
      %v1549 = vpop.permute.xlu0 %1548
      %1550 = vrot.lane.b32.xlu0 %v1395, 32
      %v1551 = vpop.permute.xlu0 %1550
      %1552 = vrot.lane.b32.xlu0 %v1396, 32
      %v1553 = vpop.permute.xlu0 %1552
      %1554 = vrot.lane.b32.xlu0 %v1397, 32
      %v1555 = vpop.permute.xlu0 %1554
      %1556 = vrot.lane.b32.xlu0 %v1398, 32
      %v1557 = vpop.permute.xlu0 %1556
      %1558 = vrot.lane.b32.xlu0 %v1399, 32
      %v1559 = vpop.permute.xlu0 %1558
      %1592 = vrot.lane.b32.xlu0 %v1400, 64
      %v1593 = vpop.permute.xlu0 %1592
      %1594 = vrot.lane.b32.xlu0 %v1401, 64
      %v1595 = vpop.permute.xlu0 %1594
      %1596 = vrot.lane.b32.xlu0 %v1402, 64
      %v1597 = vpop.permute.xlu0 %1596
      %1598 = vrot.lane.b32.xlu0 %v1403, 64
      %v1599 = vpop.permute.xlu0 %1598
      %1600 = vrot.lane.b32.xlu0 %v1404, 64
      %v1601 = vpop.permute.xlu0 %1600
      %1602 = vrot.lane.b32.xlu0 %v1405, 64
      %v1603 = vpop.permute.xlu0 %1602
      %1604 = vrot.lane.b32.xlu0 %v1406, 64
      %v1605 = vpop.permute.xlu0 %1604
      %1606 = vrot.lane.b32.xlu0 %v1407, 64
      %v1607 = vpop.permute.xlu0 %1606
      %1608 = vrot.lane.b32.xlu0 %v1408, 64
      %v1609 = vpop.permute.xlu0 %1608
      %1610 = vrot.lane.b32.xlu0 %v1409, 64
      %v1611 = vpop.permute.xlu0 %1610
      %1612 = vrot.lane.b32.xlu0 %v1410, 64
      %v1613 = vpop.permute.xlu0 %1612
      %1614 = vrot.lane.b32.xlu0 %v1411, 64
      %v1615 = vpop.permute.xlu0 %1614
      %1616 = vrot.lane.b32.xlu0 %v1412, 64
      %v1617 = vpop.permute.xlu0 %1616
      %1618 = vrot.lane.b32.xlu0 %v1413, 64
      %v1619 = vpop.permute.xlu0 %1618
      %1620 = vrot.lane.b32.xlu0 %v1414, 64
      %v1621 = vpop.permute.xlu0 %1620
      %1622 = vrot.lane.b32.xlu0 %v1415, 64
      %v1623 = vpop.permute.xlu0 %1622
      %1656 = vrot.lane.b32.xlu0 %v1416, 96
      %v1657 = vpop.permute.xlu0 %1656
      %1658 = vrot.lane.b32.xlu0 %v1417, 96
      %v1659 = vpop.permute.xlu0 %1658
      %1660 = vrot.lane.b32.xlu0 %v1418, 96
      %v1661 = vpop.permute.xlu0 %1660
      %1662 = vrot.lane.b32.xlu0 %v1419, 96
      %v1663 = vpop.permute.xlu0 %1662
      %1664 = vrot.lane.b32.xlu0 %v1420, 96
      %v1665 = vpop.permute.xlu0 %1664
      %1666 = vrot.lane.b32.xlu0 %v1421, 96
      %v1667 = vpop.permute.xlu0 %1666
      %1668 = vrot.lane.b32.xlu0 %v1422, 96
      %v1669 = vpop.permute.xlu0 %1668
      %1670 = vrot.lane.b32.xlu0 %v1423, 96
      %v1671 = vpop.permute.xlu0 %1670
      %1672 = vrot.lane.b32.xlu0 %v1424, 96
      %v1673 = vpop.permute.xlu0 %1672
      %1674 = vrot.lane.b32.xlu0 %v1425, 96
      %v1675 = vpop.permute.xlu0 %1674
      %1676 = vrot.lane.b32.xlu0 %v1426, 96
      %v1677 = vpop.permute.xlu0 %1676
      %1678 = vrot.lane.b32.xlu0 %v1427, 96
      %v1679 = vpop.permute.xlu0 %1678
      %1680 = vrot.lane.b32.xlu0 %v1428, 96
      %v1681 = vpop.permute.xlu0 %1680
      %1682 = vrot.lane.b32.xlu0 %v1429, 96
      %v1683 = vpop.permute.xlu0 %1682
      %1684 = vrot.lane.b32.xlu0 %v1430, 96
      %v1685 = vpop.permute.xlu0 %1684
      %1686 = vrot.lane.b32.xlu0 %v1431, 96
      %v1687 = vpop.permute.xlu0 %1686
      %1720 = vrot.lane.b32.xlu0 %v1448, 32
      %v1721 = vpop.permute.xlu0 %1720
      %1722 = vrot.lane.b32.xlu0 %v1449, 32
      %v1723 = vpop.permute.xlu0 %1722
      %1724 = vrot.lane.b32.xlu0 %v1450, 32
      %v1725 = vpop.permute.xlu0 %1724
      %1726 = vrot.lane.b32.xlu0 %v1451, 32
      %v1727 = vpop.permute.xlu0 %1726
      %1728 = vrot.lane.b32.xlu0 %v1452, 32
      %v1729 = vpop.permute.xlu0 %1728
      %1730 = vrot.lane.b32.xlu0 %v1453, 32
      %v1731 = vpop.permute.xlu0 %1730
      %1732 = vrot.lane.b32.xlu0 %v1454, 32
      %v1733 = vpop.permute.xlu0 %1732
      %1734 = vrot.lane.b32.xlu0 %v1455, 32
      %v1735 = vpop.permute.xlu0 %1734
      %1736 = vrot.lane.b32.xlu0 %v1456, 32
      %v1737 = vpop.permute.xlu0 %1736
      %1738 = vrot.lane.b32.xlu0 %v1457, 32
      %v1739 = vpop.permute.xlu0 %1738
      %1740 = vrot.lane.b32.xlu0 %v1458, 32
      %v1741 = vpop.permute.xlu0 %1740
      %1742 = vrot.lane.b32.xlu0 %v1459, 32
      %v1743 = vpop.permute.xlu0 %1742
      %1744 = vrot.lane.b32.xlu0 %v1460, 32
      %v1745 = vpop.permute.xlu0 %1744
      %1746 = vrot.lane.b32.xlu0 %v1461, 32
      %v1747 = vpop.permute.xlu0 %1746
      %1748 = vrot.lane.b32.xlu0 %v1462, 32
      %v1749 = vpop.permute.xlu0 %1748
      %1750 = vrot.lane.b32.xlu0 %v1463, 32
      %v1751 = vpop.permute.xlu0 %1750
      %1784 = vrot.lane.b32.xlu0 %v1464, 64
      %v1785 = vpop.permute.xlu0 %1784
      %1786 = vrot.lane.b32.xlu0 %v1465, 64
      %v1787 = vpop.permute.xlu0 %1786
      %1788 = vrot.lane.b32.xlu0 %v1466, 64
      %v1789 = vpop.permute.xlu0 %1788
      %1790 = vrot.lane.b32.xlu0 %v1467, 64
      %v1791 = vpop.permute.xlu0 %1790
      %1792 = vrot.lane.b32.xlu0 %v1468, 64
      %v1793 = vpop.permute.xlu0 %1792
      %1794 = vrot.lane.b32.xlu0 %v1469, 64
      %v1795 = vpop.permute.xlu0 %1794
      %1796 = vrot.lane.b32.xlu0 %v1470, 64
      %v1797 = vpop.permute.xlu0 %1796
      %1798 = vrot.lane.b32.xlu0 %v1471, 64
      %v1799 = vpop.permute.xlu0 %1798
      %1800 = vrot.lane.b32.xlu0 %v1472, 64
      %v1801 = vpop.permute.xlu0 %1800
      %1802 = vrot.lane.b32.xlu0 %v1473, 64
      %v1803 = vpop.permute.xlu0 %1802
      %1804 = vrot.lane.b32.xlu0 %v1474, 64
      %v1805 = vpop.permute.xlu0 %1804
      %1806 = vrot.lane.b32.xlu0 %v1475, 64
      %v1807 = vpop.permute.xlu0 %1806
      %1808 = vrot.lane.b32.xlu0 %v1476, 64
      %v1809 = vpop.permute.xlu0 %1808
      %1810 = vrot.lane.b32.xlu0 %v1477, 64
      %v1811 = vpop.permute.xlu0 %1810
      %1812 = vrot.lane.b32.xlu0 %v1478, 64
      %v1813 = vpop.permute.xlu0 %1812
      %1814 = vrot.lane.b32.xlu0 %v1479, 64
      %v1815 = vpop.permute.xlu0 %1814
      %1848 = vrot.lane.b32.xlu0 %v1480, 96
      %v1849 = vpop.permute.xlu0 %1848
      %1850 = vrot.lane.b32.xlu0 %v1481, 96
      %v1851 = vpop.permute.xlu0 %1850
      %1852 = vrot.lane.b32.xlu0 %v1482, 96
      %v1853 = vpop.permute.xlu0 %1852
      %1854 = vrot.lane.b32.xlu0 %v1483, 96
      %v1855 = vpop.permute.xlu0 %1854
      %1856 = vrot.lane.b32.xlu0 %v1484, 96
      %v1857 = vpop.permute.xlu0 %1856
      %1858 = vrot.lane.b32.xlu0 %v1485, 96
      %v1859 = vpop.permute.xlu0 %1858
      %1860 = vrot.lane.b32.xlu0 %v1486, 96
      %v1861 = vpop.permute.xlu0 %1860
      %1862 = vrot.lane.b32.xlu0 %v1487, 96
      %v1863 = vpop.permute.xlu0 %1862
      %1864 = vrot.lane.b32.xlu0 %v1488, 96
      %v1865 = vpop.permute.xlu0 %1864
      %1866 = vrot.lane.b32.xlu0 %v1489, 96
      %v1867 = vpop.permute.xlu0 %1866
      %1868 = vrot.lane.b32.xlu0 %v1490, 96
      %v1869 = vpop.permute.xlu0 %1868
      %1870 = vrot.lane.b32.xlu0 %v1491, 96
      %v1871 = vpop.permute.xlu0 %1870
      %1872 = vrot.lane.b32.xlu0 %v1492, 96
      %v1873 = vpop.permute.xlu0 %1872
      %1874 = vrot.lane.b32.xlu0 %v1493, 96
      %v1875 = vpop.permute.xlu0 %1874
      %1876 = vrot.lane.b32.xlu0 %v1494, 96
      %v1877 = vpop.permute.xlu0 %1876
      %1878 = vrot.lane.b32.xlu0 %v1495, 96
      %v1879 = vpop.permute.xlu0 %1878
      %v1896 = vsel %vm275, %v1368, %v1529
      %v1897 = vsel %vm275, %v1369, %v1531
      %v1898 = vsel %vm275, %v1370, %v1533
      %v1899 = vsel %vm275, %v1371, %v1535
      %v1900 = vsel %vm275, %v1372, %v1537
      %v1901 = vsel %vm275, %v1373, %v1539
      %v1902 = vsel %vm275, %v1374, %v1541
      %v1903 = vsel %vm275, %v1375, %v1543
      %v1904 = vsel %vm275, %v1376, %v1545
      %v1905 = vsel %vm275, %v1377, %v1547
      %v1906 = vsel %vm275, %v1378, %v1549
      %v1907 = vsel %vm275, %v1379, %v1551
      %v1908 = vsel %vm275, %v1380, %v1553
      %v1909 = vsel %vm275, %v1381, %v1555
      %v1910 = vsel %vm275, %v1382, %v1557
      %v1911 = vsel %vm275, %v1383, %v1559
      %v1912 = vsel %vm911, %v1896, %v1593
      %v1913 = vsel %vm911, %v1897, %v1595
      %v1914 = vsel %vm911, %v1898, %v1597
      %v1915 = vsel %vm911, %v1899, %v1599
      %v1916 = vsel %vm911, %v1900, %v1601
      %v1917 = vsel %vm911, %v1901, %v1603
      %v1918 = vsel %vm911, %v1902, %v1605
      %v1919 = vsel %vm911, %v1903, %v1607
      %v1920 = vsel %vm911, %v1904, %v1609
      %v1921 = vsel %vm911, %v1905, %v1611
      %v1922 = vsel %vm911, %v1906, %v1613
      %v1923 = vsel %vm911, %v1907, %v1615
      %v1924 = vsel %vm911, %v1908, %v1617
      %v1925 = vsel %vm911, %v1909, %v1619
      %v1926 = vsel %vm911, %v1910, %v1621
      %v1927 = vsel %vm911, %v1911, %v1623
      %v1928 = vsel %vm928, %v1912, %v1657
      %v1929 = vsel %vm928, %v1913, %v1659
      %v1930 = vsel %vm928, %v1914, %v1661
      %v1931 = vsel %vm928, %v1915, %v1663
      %v1932 = vsel %vm928, %v1916, %v1665
      %v1933 = vsel %vm928, %v1917, %v1667
      %v1934 = vsel %vm928, %v1918, %v1669
      %v1935 = vsel %vm928, %v1919, %v1671
      %v1936 = vsel %vm928, %v1920, %v1673
      %v1937 = vsel %vm928, %v1921, %v1675
      %v1938 = vsel %vm928, %v1922, %v1677
      %v1939 = vsel %vm928, %v1923, %v1679
      %v1940 = vsel %vm928, %v1924, %v1681
      %v1941 = vsel %vm928, %v1925, %v1683
      %v1942 = vsel %vm928, %v1926, %v1685
      %v1943 = vsel %vm928, %v1927, %v1687
      %v1944 = vsel %vm275, %v1432, %v1721
      %v1945 = vsel %vm275, %v1433, %v1723
      %v1946 = vsel %vm275, %v1434, %v1725
      %v1947 = vsel %vm275, %v1435, %v1727
      %v1948 = vsel %vm275, %v1436, %v1729
      %v1949 = vsel %vm275, %v1437, %v1731
      %v1950 = vsel %vm275, %v1438, %v1733
      %v1951 = vsel %vm275, %v1439, %v1735
      %v1952 = vsel %vm275, %v1440, %v1737
      %v1953 = vsel %vm275, %v1441, %v1739
      %v1954 = vsel %vm275, %v1442, %v1741
      %v1955 = vsel %vm275, %v1443, %v1743
      %v1956 = vsel %vm275, %v1444, %v1745
      %v1957 = vsel %vm275, %v1445, %v1747
      %v1958 = vsel %vm275, %v1446, %v1749
      %v1959 = vsel %vm275, %v1447, %v1751
      %v1960 = vsel %vm911, %v1944, %v1785
      %v1961 = vsel %vm911, %v1945, %v1787
      %v1962 = vsel %vm911, %v1946, %v1789
      %v1963 = vsel %vm911, %v1947, %v1791
      %v1964 = vsel %vm911, %v1948, %v1793
      %v1965 = vsel %vm911, %v1949, %v1795
      %v1966 = vsel %vm911, %v1950, %v1797
      %v1967 = vsel %vm911, %v1951, %v1799
      %v1968 = vsel %vm911, %v1952, %v1801
      %v1969 = vsel %vm911, %v1953, %v1803
      %v1970 = vsel %vm911, %v1954, %v1805
      %v1971 = vsel %vm911, %v1955, %v1807
      %v1972 = vsel %vm911, %v1956, %v1809
      %v1973 = vsel %vm911, %v1957, %v1811
      %v1974 = vsel %vm911, %v1958, %v1813
      %v1975 = vsel %vm911, %v1959, %v1815
      %v1976 = vsel %vm928, %v1960, %v1849
      %v1977 = vsel %vm928, %v1961, %v1851
      %v1978 = vsel %vm928, %v1962, %v1853
      %v1979 = vsel %vm928, %v1963, %v1855
      %v1980 = vsel %vm928, %v1964, %v1857
      %v1981 = vsel %vm928, %v1965, %v1859
      %v1982 = vsel %vm928, %v1966, %v1861
      %v1983 = vsel %vm928, %v1967, %v1863
      %v1984 = vsel %vm928, %v1968, %v1865
      %v1985 = vsel %vm928, %v1969, %v1867
      %v1986 = vsel %vm928, %v1970, %v1869
      %v1987 = vsel %vm928, %v1971, %v1871
      %v1988 = vsel %vm928, %v1972, %v1873
      %v1989 = vsel %vm928, %v1973, %v1875
      %v1990 = vsel %vm928, %v1974, %v1877
      %v1991 = vsel %vm928, %v1975, %v1879
      %v1992 = vpack.c.bf16 %v1929, %v1928
      %v1993 = vpack.c.bf16 %v1977, %v1976
      %v1994 = vpack.c.bf16 %v1497, %v1496
      %v1995 = vpack.c.bf16 %v1931, %v1930
      %v1996 = vpack.c.bf16 %v1979, %v1978
      %v1997 = vpack.c.bf16 %v1499, %v1498
      %v1998 = vpack.c.bf16 %v1933, %v1932
      %v1999 = vpack.c.bf16 %v1981, %v1980
      %v2000 = vpack.c.bf16 %v1501, %v1500
      %v2001 = vpack.c.bf16 %v1935, %v1934
      %v2002 = vpack.c.bf16 %v1983, %v1982
      %v2003 = vpack.c.bf16 %v1503, %v1502
      %v2004 = vpack.c.bf16 %v1937, %v1936
      %v2005 = vpack.c.bf16 %v1985, %v1984
      %v2006 = vpack.c.bf16 %v1505, %v1504
      %v2007 = vpack.c.bf16 %v1939, %v1938
      %v2008 = vpack.c.bf16 %v1987, %v1986
      %v2009 = vpack.c.bf16 %v1507, %v1506
      %v2010 = vpack.c.bf16 %v1941, %v1940
      %v2011 = vpack.c.bf16 %v1989, %v1988
      %v2012 = vpack.c.bf16 %v1509, %v1508
      %v2013 = vpack.c.bf16 %v1943, %v1942
      %v2014 = vpack.c.bf16 %v1991, %v1990
      %v2015 = vpack.c.bf16 %v1511, %v1510
      %s2016 = scalar_lea.vmem %s257, 144
      %v2017 = vld [vmem:[%s2016] sm:$0xf]
      %v2018 = vld [vmem:[%s2016 + $0x4] sm:$0xf]
      %v2019 = vld [vmem:[%s2016 + $0x8] sm:$0xf]
      %v2020 = vld [vmem:[%s2016 + $0xc] sm:$0xf]
      %v2021 = vld [vmem:[%s2016 + $0x10] sm:$0xf]
      %v2022 = vld [vmem:[%s2016 + $0x14] sm:$0xf]
      %v2023 = vld [vmem:[%s2016 + $0x18] sm:$0xf]
      %v2024 = vld [vmem:[%s2016 + $0x1c] sm:$0xf]
      %v2025 = vld [vmem:[%s2016 + $0x20] sm:$0xf]
      %v2026 = vld [vmem:[%s2016 + $0x24] sm:$0xf]
      %v2027 = vld [vmem:[%s2016 + $0x28] sm:$0xf]
      %v2028 = vld [vmem:[%s2016 + $0x2c] sm:$0xf]
      %v2029 = vld [vmem:[%s2016 + $0x30] sm:$0xf]
      %v2030 = vld [vmem:[%s2016 + $0x34] sm:$0xf]
      %v2031 = vld [vmem:[%s2016 + $0x38] sm:$0xf]
      %v2032 = vld [vmem:[%s2016 + $0x3c] sm:$0xf]
      %v2033 = vld [vmem:[%s2016 + $0x40] sm:$0xf]
      %v2034 = vld [vmem:[%s2016 + $0x44] sm:$0xf]
      %v2035 = vld [vmem:[%s2016 + $0x48] sm:$0xf]
      %v2036 = vld [vmem:[%s2016 + $0x4c] sm:$0xf]
      %v2037 = vld [vmem:[%s2016 + $0x50] sm:$0xf]
      %v2038 = vld [vmem:[%s2016 + $0x54] sm:$0xf]
      %v2039 = vld [vmem:[%s2016 + $0x58] sm:$0xf]
      %v2040 = vld [vmem:[%s2016 + $0x5c] sm:$0xf]
      %v2041 = vld [vmem:[%s2016 + $0x60] sm:$0xf]
      %v2042 = vld [vmem:[%s2016 + $0x64] sm:$0xf]
      %v2043 = vld [vmem:[%s2016 + $0x68] sm:$0xf]
      %v2044 = vld [vmem:[%s2016 + $0x6c] sm:$0xf]
      %v2045 = vld [vmem:[%s2016 + $0x70] sm:$0xf]
      %v2046 = vld [vmem:[%s2016 + $0x74] sm:$0xf]
      %v2047 = vld [vmem:[%s2016 + $0x78] sm:$0xf]
      %v2048 = vld [vmem:[%s2016 + $0x7c] sm:$0xf]
      %v2049 = vld [vmem:[%s2016 + $0x80] sm:$0xf]
      %v2050 = vld [vmem:[%s2016 + $0x84] sm:$0xf]
      %v2051 = vld [vmem:[%s2016 + $0x88] sm:$0xf]
      %v2052 = vld [vmem:[%s2016 + $0x8c] sm:$0xf]
      %s2053 = scalar_lea.vmem %s261, 1
      %v2054 = vld [vmem:[%s2053] sm:$0x1]
      %v2056 = vperm.slane %v2054, 0
      %v2094 = vunpack.c.l.b16 %v2017
      %v2095 = vunpack.c.l.b16 %v2018
      %v2096 = vunpack.c.l.b16 %v2019
      %v2097 = vunpack.c.l.b16 %v2020
      %v2098 = vunpack.c.l.b16 %v2021
      %v2099 = vunpack.c.l.b16 %v2022
      %v2100 = vunpack.c.l.b16 %v2023
      %v2101 = vunpack.c.l.b16 %v2024
      %v2102 = vunpack.c.l.b16 %v2025
      %v2103 = vunpack.c.l.b16 %v2026
      %v2104 = vunpack.c.l.b16 %v2027
      %v2105 = vunpack.c.l.b16 %v2028
      %v2106 = vunpack.c.l.b16 %v2029
      %v2107 = vunpack.c.l.b16 %v2030
      %v2108 = vunpack.c.l.b16 %v2031
      %v2109 = vunpack.c.l.b16 %v2032
      %v2110 = vunpack.c.l.b16 %v2033
      %v2111 = vunpack.c.l.b16 %v2034
      %v2112 = vunpack.c.l.b16 %v2035
      %v2113 = vunpack.c.l.b16 %v2036
      %v2114 = vunpack.c.l.b16 %v2037
      %v2115 = vunpack.c.l.b16 %v2038
      %v2116 = vunpack.c.l.b16 %v2039
      %v2117 = vunpack.c.l.b16 %v2040
      %v2118 = vunpack.c.l.b16 %v2041
      %v2119 = vunpack.c.l.b16 %v2042
      %v2120 = vunpack.c.l.b16 %v2043
      %v2121 = vunpack.c.l.b16 %v2044
      %v2122 = vunpack.c.l.b16 %v2045
      %v2123 = vunpack.c.l.b16 %v2046
      %v2124 = vunpack.c.l.b16 %v2047
      %v2125 = vunpack.c.l.b16 %v2048
      %v2126 = vunpack.c.l.b16 %v2049
      %v2127 = vunpack.c.l.b16 %v2050
      %v2128 = vunpack.c.l.b16 %v2051
      %v2129 = vunpack.c.l.b16 %v2052
      %v2130 = vpack.c.b16 %v2095, %v2094
      %v2131 = vpack.c.b16 %v2097, %v2096
      %v2132 = vpack.c.b16 %v2099, %v2098
      %v2133 = vpack.c.b16 %v2101, %v2100
      %v2134 = vpack.c.b16 %v2103, %v2102
      %v2135 = vpack.c.b16 %v2105, %v2104
      %v2136 = vpack.c.b16 %v2107, %v2106
      %v2137 = vpack.c.b16 %v2109, %v2108
      %v2138 = vpack.c.b16 %v2111, %v2110
      %v2139 = vpack.c.b16 %v2113, %v2112
      %v2140 = vpack.c.b16 %v2115, %v2114
      %v2141 = vpack.c.b16 %v2117, %v2116
      %v2142 = vpack.c.b16 %v2119, %v2118
      %v2143 = vpack.c.b16 %v2121, %v2120
      %v2144 = vpack.c.b16 %v2123, %v2122
      %v2145 = vpack.c.b16 %v2125, %v2124
      %v2146 = vpack.c.b16 %v2127, %v2126
      %v2147 = vpack.c.b16 %v2129, %v2128
      %v2167 = vsel %vm275, %v1994, 0
      %v2170 = vsel %vm275, %v1997, 0
      %v2173 = vsel %vm275, %v2000, 0
      %v2176 = vsel %vm275, %v2003, 0
      %v2179 = vsel %vm275, %v2006, 0
      %v2182 = vsel %vm275, %v2009, 0
      %v2185 = vsel %vm275, %v2012, 0
      %v2188 = vsel %vm275, %v2015, 0
      %2190 = vmatpush.bf16.msra.mxu0 %v2137
      %2191 = vmatpush.bf16.msra.mxu0 %v2136
      %2192 = vmatpush.bf16.msra.mxu0 %v2135
      %2193 = vmatpush.bf16.msra.mxu0 %v2134
      %2194 = vmatpush.bf16.msra.mxu0 %v2133
      %2195 = vmatpush.bf16.msra.mxu0 %v2132
      %2196 = vmatpush.bf16.msra.mxu0 %v2131
      %2197 = vmatpush.bf16.msra.mxu0 %v2130
      %2198 = vmatmul.bf16.gmra.mxu0 %v1992
      %v2199 = vpop.f32.mrf.mxu0
      %v2200 = vadd.f32 %v2056, %v2199
      %v2201 = vpop.f32.mrf.mxu0
      %v2202 = vadd.f32 %v2056, %v2201
      %2203 = vmatmul.bf16.gmra.mxu0 %v1995
      %v2204 = vpop.f32.mrf.mxu0
      %v2205 = vadd.f32 %v2056, %v2204
      %v2206 = vpop.f32.mrf.mxu0
      %v2207 = vadd.f32 %v2056, %v2206
      %2208 = vmatmul.bf16.gmra.mxu0 %v1998
      %v2209 = vpop.f32.mrf.mxu0
      %v2210 = vadd.f32 %v2056, %v2209
      %v2211 = vpop.f32.mrf.mxu0
      %v2212 = vadd.f32 %v2056, %v2211
      %2213 = vmatmul.bf16.gmra.mxu0 %v2001
      %v2214 = vpop.f32.mrf.mxu0
      %v2215 = vadd.f32 %v2056, %v2214
      %v2216 = vpop.f32.mrf.mxu0
      %v2217 = vadd.f32 %v2056, %v2216
      %2218 = vmatmul.bf16.gmra.mxu0 %v2004
      %v2219 = vpop.f32.mrf.mxu0
      %v2220 = vadd.f32 %v2056, %v2219
      %v2221 = vpop.f32.mrf.mxu0
      %v2222 = vadd.f32 %v2056, %v2221
      %2223 = vmatmul.bf16.gmra.mxu0 %v2007
      %v2224 = vpop.f32.mrf.mxu0
      %v2225 = vadd.f32 %v2056, %v2224
      %v2226 = vpop.f32.mrf.mxu0
      %v2227 = vadd.f32 %v2056, %v2226
      %2228 = vmatmul.bf16.gmra.mxu0 %v2010
      %v2229 = vpop.f32.mrf.mxu0
      %v2230 = vadd.f32 %v2056, %v2229
      %v2231 = vpop.f32.mrf.mxu0
      %v2232 = vadd.f32 %v2056, %v2231
      %2233 = vmatmul.bf16.gmra.mxu0 %v2013
      %v2234 = vpop.f32.mrf.mxu0
      %v2235 = vadd.f32 %v2056, %v2234
      %v2236 = vpop.f32.mrf.mxu0
      %v2237 = vadd.f32 %v2056, %v2236
      %2238 = vdwg.mxu0
      %2239 = vmatpush.bf16.msra.mxu0 %v2145
      %2240 = vmatpush.bf16.msra.mxu0 %v2144
      %2241 = vmatpush.bf16.msra.mxu0 %v2143
      %2242 = vmatpush.bf16.msra.mxu0 %v2142
      %2243 = vmatpush.bf16.msra.mxu0 %v2141
      %2244 = vmatpush.bf16.msra.mxu0 %v2140
      %2245 = vmatpush.bf16.msra.mxu0 %v2139
      %2246 = vmatpush.bf16.msra.mxu0 %v2138
      %2247 = vmatmul.bf16.gmra.mxu0 %v1993
      %v2248 = vpop.f32.mrf.mxu0
      %v2249 = vadd.f32 %v2200, %v2248
      %v2250 = vpop.f32.mrf.mxu0
      %v2251 = vadd.f32 %v2202, %v2250
      %2252 = vmatmul.bf16.gmra.mxu0 %v1996
      %v2253 = vpop.f32.mrf.mxu0
      %v2254 = vadd.f32 %v2205, %v2253
      %v2255 = vpop.f32.mrf.mxu0
      %v2256 = vadd.f32 %v2207, %v2255
      %2257 = vmatmul.bf16.gmra.mxu0 %v1999
      %v2258 = vpop.f32.mrf.mxu0
      %v2259 = vadd.f32 %v2210, %v2258
      %v2260 = vpop.f32.mrf.mxu0
      %v2261 = vadd.f32 %v2212, %v2260
      %2262 = vmatmul.bf16.gmra.mxu0 %v2002
      %v2263 = vpop.f32.mrf.mxu0
      %v2264 = vadd.f32 %v2215, %v2263
      %v2265 = vpop.f32.mrf.mxu0
      %v2266 = vadd.f32 %v2217, %v2265
      %2267 = vmatmul.bf16.gmra.mxu0 %v2005
      %v2268 = vpop.f32.mrf.mxu0
      %v2269 = vadd.f32 %v2220, %v2268
      %v2270 = vpop.f32.mrf.mxu0
      %v2271 = vadd.f32 %v2222, %v2270
      %2272 = vmatmul.bf16.gmra.mxu0 %v2008
      %v2273 = vpop.f32.mrf.mxu0
      %v2274 = vadd.f32 %v2225, %v2273
      %v2275 = vpop.f32.mrf.mxu0
      %v2276 = vadd.f32 %v2227, %v2275
      %2277 = vmatmul.bf16.gmra.mxu0 %v2011
      %v2278 = vpop.f32.mrf.mxu0
      %v2279 = vadd.f32 %v2230, %v2278
      %v2280 = vpop.f32.mrf.mxu0
      %v2281 = vadd.f32 %v2232, %v2280
      %2282 = vmatmul.bf16.gmra.mxu0 %v2014
      %v2283 = vpop.f32.mrf.mxu0
      %v2284 = vadd.f32 %v2235, %v2283
      %v2285 = vpop.f32.mrf.mxu0
      %v2286 = vadd.f32 %v2237, %v2285
      %2287 = vdwg.mxu0
      %2288 = vmatpush.bf16.msra.mxu0 0
      %2289 = vmatpush.bf16.msra.mxu0 0
      %2290 = vmatpush.bf16.msra.mxu0 0
      %2291 = vmatpush.bf16.msra.mxu0 0
      %2292 = vmatpush.bf16.msra.mxu0 0
      %2293 = vmatpush.bf16.msra.mxu0 0
      %2294 = vmatpush.bf16.msra.mxu0 %v2147
      %2295 = vmatpush.bf16.msra.mxu0 %v2146
      %2296 = vmatmul.bf16.gmra.mxu0 %v2167
      %v2297 = vpop.f32.mrf.mxu0
      %v2298 = vadd.f32 %v2249, %v2297
      %v2299 = vpop.f32.mrf.mxu0
      %v2300 = vadd.f32 %v2251, %v2299
      %2301 = vmatmul.bf16.gmra.mxu0 %v2170
      %v2302 = vpop.f32.mrf.mxu0
      %v2303 = vadd.f32 %v2254, %v2302
      %v2304 = vpop.f32.mrf.mxu0
      %v2305 = vadd.f32 %v2256, %v2304
      %2306 = vmatmul.bf16.gmra.mxu0 %v2173
      %v2307 = vpop.f32.mrf.mxu0
      %v2308 = vadd.f32 %v2259, %v2307
      %v2309 = vpop.f32.mrf.mxu0
      %v2310 = vadd.f32 %v2261, %v2309
      %2311 = vmatmul.bf16.gmra.mxu0 %v2176
      %v2312 = vpop.f32.mrf.mxu0
      %v2313 = vadd.f32 %v2264, %v2312
      %v2314 = vpop.f32.mrf.mxu0
      %v2315 = vadd.f32 %v2266, %v2314
      %2316 = vmatmul.bf16.gmra.mxu0 %v2179
      %v2317 = vpop.f32.mrf.mxu0
      %v2318 = vadd.f32 %v2269, %v2317
      %v2319 = vpop.f32.mrf.mxu0
      %v2320 = vadd.f32 %v2271, %v2319
      %2321 = vmatmul.bf16.gmra.mxu0 %v2182
      %v2322 = vpop.f32.mrf.mxu0
      %v2323 = vadd.f32 %v2274, %v2322
      %v2324 = vpop.f32.mrf.mxu0
      %v2325 = vadd.f32 %v2276, %v2324
      %2326 = vmatmul.bf16.gmra.mxu0 %v2185
      %v2327 = vpop.f32.mrf.mxu0
      %v2328 = vadd.f32 %v2279, %v2327
      %v2329 = vpop.f32.mrf.mxu0
      %v2330 = vadd.f32 %v2281, %v2329
      %2331 = vmatmul.bf16.gmra.mxu0 %v2188
      %v2332 = vpop.f32.mrf.mxu0
      %v2333 = vadd.f32 %v2284, %v2332
      %v2334 = vpop.f32.mrf.mxu0
      %v2335 = vadd.f32 %v2286, %v2334
      %2336 = vdwg.mxu0
      %v2337 = vmax.f32 %v2298, 0.0
      %v2338 = vmax.f32 %v2300, 0.0
      %v2339 = vmax.f32 %v2303, 0.0
      %v2340 = vmax.f32 %v2305, 0.0
      %v2341 = vmax.f32 %v2308, 0.0
      %v2342 = vmax.f32 %v2310, 0.0
      %v2343 = vmax.f32 %v2313, 0.0
      %v2344 = vmax.f32 %v2315, 0.0
      %v2345 = vmax.f32 %v2318, 0.0
      %v2346 = vmax.f32 %v2320, 0.0
      %v2347 = vmax.f32 %v2323, 0.0
      %v2348 = vmax.f32 %v2325, 0.0
      %v2349 = vmax.f32 %v2328, 0.0
      %v2350 = vmax.f32 %v2330, 0.0
      %v2351 = vmax.f32 %v2333, 0.0
      %v2352 = vmax.f32 %v2335, 0.0
      %2353 = vst.msk [vmem:[%s349 + $0x1] sm:$0xff] %vm275, %v2337
      %2354 = vst.msk [vmem:[%s349 + $0x11] sm:$0xff] %vm275, %v2338
      %2355 = vst.msk [vmem:[%s349 + $0x21] sm:$0xff] %vm275, %v2339
      %2356 = vst.msk [vmem:[%s349 + $0x31] sm:$0xff] %vm275, %v2340
      %2357 = vst.msk [vmem:[%s349 + $0x41] sm:$0xff] %vm275, %v2341
      %2358 = vst.msk [vmem:[%s349 + $0x51] sm:$0xff] %vm275, %v2342
      %2359 = vst.msk [vmem:[%s349 + $0x61] sm:$0xff] %vm275, %v2343
      %2360 = vst.msk [vmem:[%s349 + $0x71] sm:$0xff] %vm275, %v2344
      %2361 = vst.msk [vmem:[%s349 + $0xa1] sm:$0xff] %vm275, %v2345
      %2362 = vst.msk [vmem:[%s349 + $0xb1] sm:$0xff] %vm275, %v2346
      %2363 = vst.msk [vmem:[%s349 + $0xc1] sm:$0xff] %vm275, %v2347
      %2364 = vst.msk [vmem:[%s349 + $0xd1] sm:$0xff] %vm275, %v2348
      %2365 = vst.msk [vmem:[%s349 + $0xe1] sm:$0xff] %vm275, %v2349
      %2366 = vst.msk [vmem:[%s349 + $0xf1] sm:$0xff] %vm275, %v2350
      %2367 = vst.msk [vmem:[%s349 + $0x101] sm:$0xff] %vm275, %v2351
      %2368 = vst.msk [vmem:[%s349 + $0x111] sm:$0xff] %vm275, %v2352
      %v2369 = vld [vmem:[#allocation2] sm:$0xff]
      %v2370 = vld [vmem:[#allocation2 + $0x10] sm:$0xff]
      %v2371 = vld [vmem:[#allocation2 + $0x20] sm:$0xff]
      %v2372 = vld [vmem:[#allocation2 + $0x30] sm:$0xff]
      %v2373 = vld [vmem:[#allocation2 + $0x40] sm:$0xff]
      %v2374 = vld [vmem:[#allocation2 + $0x50] sm:$0xff]
      %v2375 = vld [vmem:[#allocation2 + $0x60] sm:$0xff]
      %v2376 = vld [vmem:[#allocation2 + $0x70] sm:$0xff]
      %v2377 = vld [vmem:[#allocation2 + $0xa0] sm:$0xff]
      %v2378 = vld [vmem:[#allocation2 + $0xb0] sm:$0xff]
      %v2379 = vld [vmem:[#allocation2 + $0xc0] sm:$0xff]
      %v2380 = vld [vmem:[#allocation2 + $0xd0] sm:$0xff]
      %v2381 = vld [vmem:[#allocation2 + $0xe0] sm:$0xff]
      %v2382 = vld [vmem:[#allocation2 + $0xf0] sm:$0xff]
      %v2383 = vld [vmem:[#allocation2 + $0x100] sm:$0xff]
      %v2384 = vld [vmem:[#allocation2 + $0x110] sm:$0xff]
      %v2385 = vld [vmem:[#allocation2 + $0x1] sm:$0xff]
      %v2386 = vld [vmem:[#allocation2 + $0x11] sm:$0xff]
      %v2387 = vld [vmem:[#allocation2 + $0x21] sm:$0xff]
      %v2388 = vld [vmem:[#allocation2 + $0x31] sm:$0xff]
      %v2389 = vld [vmem:[#allocation2 + $0x41] sm:$0xff]
      %v2390 = vld [vmem:[#allocation2 + $0x51] sm:$0xff]
      %v2391 = vld [vmem:[#allocation2 + $0x61] sm:$0xff]
      %v2392 = vld [vmem:[#allocation2 + $0x71] sm:$0xff]
      %v2393 = vld [vmem:[#allocation2 + $0xa1] sm:$0xff]
      %v2394 = vld [vmem:[#allocation2 + $0xb1] sm:$0xff]
      %v2395 = vld [vmem:[#allocation2 + $0xc1] sm:$0xff]
      %v2396 = vld [vmem:[#allocation2 + $0xd1] sm:$0xff]
      %v2397 = vld [vmem:[#allocation2 + $0xe1] sm:$0xff]
      %v2398 = vld [vmem:[#allocation2 + $0xf1] sm:$0xff]
      %v2399 = vld [vmem:[#allocation2 + $0x101] sm:$0xff]
      %v2400 = vld [vmem:[#allocation2 + $0x111] sm:$0xff]
      %v2401 = vld [vmem:[#allocation2 + $0x2] sm:$0xff]
      %v2402 = vld [vmem:[#allocation2 + $0x12] sm:$0xff]
      %v2403 = vld [vmem:[#allocation2 + $0x22] sm:$0xff]
      %v2404 = vld [vmem:[#allocation2 + $0x32] sm:$0xff]
      %v2405 = vld [vmem:[#allocation2 + $0x42] sm:$0xff]
      %v2406 = vld [vmem:[#allocation2 + $0x52] sm:$0xff]
      %v2407 = vld [vmem:[#allocation2 + $0x62] sm:$0xff]
      %v2408 = vld [vmem:[#allocation2 + $0x72] sm:$0xff]
      %v2409 = vld [vmem:[#allocation2 + $0xa2] sm:$0xff]
      %v2410 = vld [vmem:[#allocation2 + $0xb2] sm:$0xff]
      %v2411 = vld [vmem:[#allocation2 + $0xc2] sm:$0xff]
      %v2412 = vld [vmem:[#allocation2 + $0xd2] sm:$0xff]
      %v2413 = vld [vmem:[#allocation2 + $0xe2] sm:$0xff]
      %v2414 = vld [vmem:[#allocation2 + $0xf2] sm:$0xff]
      %v2415 = vld [vmem:[#allocation2 + $0x102] sm:$0xff]
      %v2416 = vld [vmem:[#allocation2 + $0x112] sm:$0xff]
      %v2417 = vld [vmem:[%s349] sm:$0xff]
      %v2418 = vld [vmem:[%s349 + $0x10] sm:$0xff]
      %v2419 = vld [vmem:[%s349 + $0x20] sm:$0xff]
      %v2420 = vld [vmem:[%s349 + $0x30] sm:$0xff]
      %v2421 = vld [vmem:[%s349 + $0x40] sm:$0xff]
      %v2422 = vld [vmem:[%s349 + $0x50] sm:$0xff]
      %v2423 = vld [vmem:[%s349 + $0x60] sm:$0xff]
      %v2424 = vld [vmem:[%s349 + $0x70] sm:$0xff]
      %v2425 = vld [vmem:[%s349 + $0xa0] sm:$0xff]
      %v2426 = vld [vmem:[%s349 + $0xb0] sm:$0xff]
      %v2427 = vld [vmem:[%s349 + $0xc0] sm:$0xff]
      %v2428 = vld [vmem:[%s349 + $0xd0] sm:$0xff]
      %v2429 = vld [vmem:[%s349 + $0xe0] sm:$0xff]
      %v2430 = vld [vmem:[%s349 + $0xf0] sm:$0xff]
      %v2431 = vld [vmem:[%s349 + $0x100] sm:$0xff]
      %v2432 = vld [vmem:[%s349 + $0x110] sm:$0xff]
      %v2433 = vld [vmem:[%s349 + $0x1] sm:$0xff]
      %v2434 = vld [vmem:[%s349 + $0x11] sm:$0xff]
      %v2435 = vld [vmem:[%s349 + $0x21] sm:$0xff]
      %v2436 = vld [vmem:[%s349 + $0x31] sm:$0xff]
      %v2437 = vld [vmem:[%s349 + $0x41] sm:$0xff]
      %v2438 = vld [vmem:[%s349 + $0x51] sm:$0xff]
      %v2439 = vld [vmem:[%s349 + $0x61] sm:$0xff]
      %v2440 = vld [vmem:[%s349 + $0x71] sm:$0xff]
      %v2441 = vld [vmem:[%s349 + $0xa1] sm:$0xff]
      %v2442 = vld [vmem:[%s349 + $0xb1] sm:$0xff]
      %v2443 = vld [vmem:[%s349 + $0xc1] sm:$0xff]
      %v2444 = vld [vmem:[%s349 + $0xd1] sm:$0xff]
      %v2445 = vld [vmem:[%s349 + $0xe1] sm:$0xff]
      %v2446 = vld [vmem:[%s349 + $0xf1] sm:$0xff]
      %v2447 = vld [vmem:[%s349 + $0x101] sm:$0xff]
      %v2448 = vld [vmem:[%s349 + $0x111] sm:$0xff]
      %v2449 = vld [vmem:[%s349 + $0x2] sm:$0xff]
      %v2450 = vld [vmem:[%s349 + $0x12] sm:$0xff]
      %v2451 = vld [vmem:[%s349 + $0x22] sm:$0xff]
      %v2452 = vld [vmem:[%s349 + $0x32] sm:$0xff]
      %v2453 = vld [vmem:[%s349 + $0x42] sm:$0xff]
      %v2454 = vld [vmem:[%s349 + $0x52] sm:$0xff]
      %v2455 = vld [vmem:[%s349 + $0x62] sm:$0xff]
      %v2456 = vld [vmem:[%s349 + $0x72] sm:$0xff]
      %v2457 = vld [vmem:[%s349 + $0xa2] sm:$0xff]
      %v2458 = vld [vmem:[%s349 + $0xb2] sm:$0xff]
      %v2459 = vld [vmem:[%s349 + $0xc2] sm:$0xff]
      %v2460 = vld [vmem:[%s349 + $0xd2] sm:$0xff]
      %v2461 = vld [vmem:[%s349 + $0xe2] sm:$0xff]
      %v2462 = vld [vmem:[%s349 + $0xf2] sm:$0xff]
      %v2463 = vld [vmem:[%s349 + $0x102] sm:$0xff]
      %v2464 = vld [vmem:[%s349 + $0x112] sm:$0xff]
      %v2465 = vld [vmem:[%s462] sm:$0xff]
      %v2466 = vld [vmem:[%s462 + $0x10] sm:$0xff]
      %v2467 = vld [vmem:[%s462 + $0x20] sm:$0xff]
      %v2468 = vld [vmem:[%s462 + $0x30] sm:$0xff]
      %v2469 = vld [vmem:[%s462 + $0x40] sm:$0xff]
      %v2470 = vld [vmem:[%s462 + $0x50] sm:$0xff]
      %v2471 = vld [vmem:[%s462 + $0x60] sm:$0xff]
      %v2472 = vld [vmem:[%s462 + $0x70] sm:$0xff]
      %v2473 = vld [vmem:[%s462 + $0xa0] sm:$0xff]
      %v2474 = vld [vmem:[%s462 + $0xb0] sm:$0xff]
      %v2475 = vld [vmem:[%s462 + $0xc0] sm:$0xff]
      %v2476 = vld [vmem:[%s462 + $0xd0] sm:$0xff]
      %v2477 = vld [vmem:[%s462 + $0xe0] sm:$0xff]
      %v2478 = vld [vmem:[%s462 + $0xf0] sm:$0xff]
      %v2479 = vld [vmem:[%s462 + $0x100] sm:$0xff]
      %v2480 = vld [vmem:[%s462 + $0x110] sm:$0xff]
      %v2481 = vld [vmem:[%s462 + $0x1] sm:$0xff]
      %v2482 = vld [vmem:[%s462 + $0x11] sm:$0xff]
      %v2483 = vld [vmem:[%s462 + $0x21] sm:$0xff]
      %v2484 = vld [vmem:[%s462 + $0x31] sm:$0xff]
      %v2485 = vld [vmem:[%s462 + $0x41] sm:$0xff]
      %v2486 = vld [vmem:[%s462 + $0x51] sm:$0xff]
      %v2487 = vld [vmem:[%s462 + $0x61] sm:$0xff]
      %v2488 = vld [vmem:[%s462 + $0x71] sm:$0xff]
      %v2489 = vld [vmem:[%s462 + $0xa1] sm:$0xff]
      %v2490 = vld [vmem:[%s462 + $0xb1] sm:$0xff]
      %v2491 = vld [vmem:[%s462 + $0xc1] sm:$0xff]
      %v2492 = vld [vmem:[%s462 + $0xd1] sm:$0xff]
      %v2493 = vld [vmem:[%s462 + $0xe1] sm:$0xff]
      %v2494 = vld [vmem:[%s462 + $0xf1] sm:$0xff]
      %v2495 = vld [vmem:[%s462 + $0x101] sm:$0xff]
      %v2496 = vld [vmem:[%s462 + $0x111] sm:$0xff]
      %v2497 = vld [vmem:[%s462 + $0x2] sm:$0xff]
      %v2498 = vld [vmem:[%s462 + $0x12] sm:$0xff]
      %v2499 = vld [vmem:[%s462 + $0x22] sm:$0xff]
      %v2500 = vld [vmem:[%s462 + $0x32] sm:$0xff]
      %v2501 = vld [vmem:[%s462 + $0x42] sm:$0xff]
      %v2502 = vld [vmem:[%s462 + $0x52] sm:$0xff]
      %v2503 = vld [vmem:[%s462 + $0x62] sm:$0xff]
      %v2504 = vld [vmem:[%s462 + $0x72] sm:$0xff]
      %v2505 = vld [vmem:[%s462 + $0xa2] sm:$0xff]
      %v2506 = vld [vmem:[%s462 + $0xb2] sm:$0xff]
      %v2507 = vld [vmem:[%s462 + $0xc2] sm:$0xff]
      %v2508 = vld [vmem:[%s462 + $0xd2] sm:$0xff]
      %v2509 = vld [vmem:[%s462 + $0xe2] sm:$0xff]
      %v2510 = vld [vmem:[%s462 + $0xf2] sm:$0xff]
      %v2511 = vld [vmem:[%s462 + $0x102] sm:$0xff]
      %v2512 = vld [vmem:[%s462 + $0x112] sm:$0xff]
      %2529 = vrot.lane.b32.xlu0 %v2385, 32
      %v2530 = vpop.permute.xlu0 %2529
      %2531 = vrot.lane.b32.xlu0 %v2386, 32
      %v2532 = vpop.permute.xlu0 %2531
      %2533 = vrot.lane.b32.xlu0 %v2387, 32
      %v2534 = vpop.permute.xlu0 %2533
      %2535 = vrot.lane.b32.xlu0 %v2388, 32
      %v2536 = vpop.permute.xlu0 %2535
      %2537 = vrot.lane.b32.xlu0 %v2389, 32
      %v2538 = vpop.permute.xlu0 %2537
      %2539 = vrot.lane.b32.xlu0 %v2390, 32
      %v2540 = vpop.permute.xlu0 %2539
      %2541 = vrot.lane.b32.xlu0 %v2391, 32
      %v2542 = vpop.permute.xlu0 %2541
      %2543 = vrot.lane.b32.xlu0 %v2392, 32
      %v2544 = vpop.permute.xlu0 %2543
      %2545 = vrot.lane.b32.xlu0 %v2393, 32
      %v2546 = vpop.permute.xlu0 %2545
      %2547 = vrot.lane.b32.xlu0 %v2394, 32
      %v2548 = vpop.permute.xlu0 %2547
      %2549 = vrot.lane.b32.xlu0 %v2395, 32
      %v2550 = vpop.permute.xlu0 %2549
      %2551 = vrot.lane.b32.xlu0 %v2396, 32
      %v2552 = vpop.permute.xlu0 %2551
      %2553 = vrot.lane.b32.xlu0 %v2397, 32
      %v2554 = vpop.permute.xlu0 %2553
      %2555 = vrot.lane.b32.xlu0 %v2398, 32
      %v2556 = vpop.permute.xlu0 %2555
      %2557 = vrot.lane.b32.xlu0 %v2399, 32
      %v2558 = vpop.permute.xlu0 %2557
      %2559 = vrot.lane.b32.xlu0 %v2400, 32
      %v2560 = vpop.permute.xlu0 %2559
      %2593 = vrot.lane.b32.xlu0 %v2401, 64
      %v2594 = vpop.permute.xlu0 %2593
      %2595 = vrot.lane.b32.xlu0 %v2402, 64
      %v2596 = vpop.permute.xlu0 %2595
      %2597 = vrot.lane.b32.xlu0 %v2403, 64
      %v2598 = vpop.permute.xlu0 %2597
      %2599 = vrot.lane.b32.xlu0 %v2404, 64
      %v2600 = vpop.permute.xlu0 %2599
      %2601 = vrot.lane.b32.xlu0 %v2405, 64
      %v2602 = vpop.permute.xlu0 %2601
      %2603 = vrot.lane.b32.xlu0 %v2406, 64
      %v2604 = vpop.permute.xlu0 %2603
      %2605 = vrot.lane.b32.xlu0 %v2407, 64
      %v2606 = vpop.permute.xlu0 %2605
      %2607 = vrot.lane.b32.xlu0 %v2408, 64
      %v2608 = vpop.permute.xlu0 %2607
      %2609 = vrot.lane.b32.xlu0 %v2409, 64
      %v2610 = vpop.permute.xlu0 %2609
      %2611 = vrot.lane.b32.xlu0 %v2410, 64
      %v2612 = vpop.permute.xlu0 %2611
      %2613 = vrot.lane.b32.xlu0 %v2411, 64
      %v2614 = vpop.permute.xlu0 %2613
      %2615 = vrot.lane.b32.xlu0 %v2412, 64
      %v2616 = vpop.permute.xlu0 %2615
      %2617 = vrot.lane.b32.xlu0 %v2413, 64
      %v2618 = vpop.permute.xlu0 %2617
      %2619 = vrot.lane.b32.xlu0 %v2414, 64
      %v2620 = vpop.permute.xlu0 %2619
      %2621 = vrot.lane.b32.xlu0 %v2415, 64
      %v2622 = vpop.permute.xlu0 %2621
      %2623 = vrot.lane.b32.xlu0 %v2416, 64
      %v2624 = vpop.permute.xlu0 %2623
      %2657 = vrot.lane.b32.xlu0 %v2417, 96
      %v2658 = vpop.permute.xlu0 %2657
      %2659 = vrot.lane.b32.xlu0 %v2418, 96
      %v2660 = vpop.permute.xlu0 %2659
      %2661 = vrot.lane.b32.xlu0 %v2419, 96
      %v2662 = vpop.permute.xlu0 %2661
      %2663 = vrot.lane.b32.xlu0 %v2420, 96
      %v2664 = vpop.permute.xlu0 %2663
      %2665 = vrot.lane.b32.xlu0 %v2421, 96
      %v2666 = vpop.permute.xlu0 %2665
      %2667 = vrot.lane.b32.xlu0 %v2422, 96
      %v2668 = vpop.permute.xlu0 %2667
      %2669 = vrot.lane.b32.xlu0 %v2423, 96
      %v2670 = vpop.permute.xlu0 %2669
      %2671 = vrot.lane.b32.xlu0 %v2424, 96
      %v2672 = vpop.permute.xlu0 %2671
      %2673 = vrot.lane.b32.xlu0 %v2425, 96
      %v2674 = vpop.permute.xlu0 %2673
      %2675 = vrot.lane.b32.xlu0 %v2426, 96
      %v2676 = vpop.permute.xlu0 %2675
      %2677 = vrot.lane.b32.xlu0 %v2427, 96
      %v2678 = vpop.permute.xlu0 %2677
      %2679 = vrot.lane.b32.xlu0 %v2428, 96
      %v2680 = vpop.permute.xlu0 %2679
      %2681 = vrot.lane.b32.xlu0 %v2429, 96
      %v2682 = vpop.permute.xlu0 %2681
      %2683 = vrot.lane.b32.xlu0 %v2430, 96
      %v2684 = vpop.permute.xlu0 %2683
      %2685 = vrot.lane.b32.xlu0 %v2431, 96
      %v2686 = vpop.permute.xlu0 %2685
      %2687 = vrot.lane.b32.xlu0 %v2432, 96
      %v2688 = vpop.permute.xlu0 %2687
      %2721 = vrot.lane.b32.xlu0 %v2449, 32
      %v2722 = vpop.permute.xlu0 %2721
      %2723 = vrot.lane.b32.xlu0 %v2450, 32
      %v2724 = vpop.permute.xlu0 %2723
      %2725 = vrot.lane.b32.xlu0 %v2451, 32
      %v2726 = vpop.permute.xlu0 %2725
      %2727 = vrot.lane.b32.xlu0 %v2452, 32
      %v2728 = vpop.permute.xlu0 %2727
      %2729 = vrot.lane.b32.xlu0 %v2453, 32
      %v2730 = vpop.permute.xlu0 %2729
      %2731 = vrot.lane.b32.xlu0 %v2454, 32
      %v2732 = vpop.permute.xlu0 %2731
      %2733 = vrot.lane.b32.xlu0 %v2455, 32
      %v2734 = vpop.permute.xlu0 %2733
      %2735 = vrot.lane.b32.xlu0 %v2456, 32
      %v2736 = vpop.permute.xlu0 %2735
      %2737 = vrot.lane.b32.xlu0 %v2457, 32
      %v2738 = vpop.permute.xlu0 %2737
      %2739 = vrot.lane.b32.xlu0 %v2458, 32
      %v2740 = vpop.permute.xlu0 %2739
      %2741 = vrot.lane.b32.xlu0 %v2459, 32
      %v2742 = vpop.permute.xlu0 %2741
      %2743 = vrot.lane.b32.xlu0 %v2460, 32
      %v2744 = vpop.permute.xlu0 %2743
      %2745 = vrot.lane.b32.xlu0 %v2461, 32
      %v2746 = vpop.permute.xlu0 %2745
      %2747 = vrot.lane.b32.xlu0 %v2462, 32
      %v2748 = vpop.permute.xlu0 %2747
      %2749 = vrot.lane.b32.xlu0 %v2463, 32
      %v2750 = vpop.permute.xlu0 %2749
      %2751 = vrot.lane.b32.xlu0 %v2464, 32
      %v2752 = vpop.permute.xlu0 %2751
      %2785 = vrot.lane.b32.xlu0 %v2465, 64
      %v2786 = vpop.permute.xlu0 %2785
      %2787 = vrot.lane.b32.xlu0 %v2466, 64
      %v2788 = vpop.permute.xlu0 %2787
      %2789 = vrot.lane.b32.xlu0 %v2467, 64
      %v2790 = vpop.permute.xlu0 %2789
      %2791 = vrot.lane.b32.xlu0 %v2468, 64
      %v2792 = vpop.permute.xlu0 %2791
      %2793 = vrot.lane.b32.xlu0 %v2469, 64
      %v2794 = vpop.permute.xlu0 %2793
      %2795 = vrot.lane.b32.xlu0 %v2470, 64
      %v2796 = vpop.permute.xlu0 %2795
      %2797 = vrot.lane.b32.xlu0 %v2471, 64
      %v2798 = vpop.permute.xlu0 %2797
      %2799 = vrot.lane.b32.xlu0 %v2472, 64
      %v2800 = vpop.permute.xlu0 %2799
      %2801 = vrot.lane.b32.xlu0 %v2473, 64
      %v2802 = vpop.permute.xlu0 %2801
      %2803 = vrot.lane.b32.xlu0 %v2474, 64
      %v2804 = vpop.permute.xlu0 %2803
      %2805 = vrot.lane.b32.xlu0 %v2475, 64
      %v2806 = vpop.permute.xlu0 %2805
      %2807 = vrot.lane.b32.xlu0 %v2476, 64
      %v2808 = vpop.permute.xlu0 %2807
      %2809 = vrot.lane.b32.xlu0 %v2477, 64
      %v2810 = vpop.permute.xlu0 %2809
      %2811 = vrot.lane.b32.xlu0 %v2478, 64
      %v2812 = vpop.permute.xlu0 %2811
      %2813 = vrot.lane.b32.xlu0 %v2479, 64
      %v2814 = vpop.permute.xlu0 %2813
      %2815 = vrot.lane.b32.xlu0 %v2480, 64
      %v2816 = vpop.permute.xlu0 %2815
      %2849 = vrot.lane.b32.xlu0 %v2481, 96
      %v2850 = vpop.permute.xlu0 %2849
      %2851 = vrot.lane.b32.xlu0 %v2482, 96
      %v2852 = vpop.permute.xlu0 %2851
      %2853 = vrot.lane.b32.xlu0 %v2483, 96
      %v2854 = vpop.permute.xlu0 %2853
      %2855 = vrot.lane.b32.xlu0 %v2484, 96
      %v2856 = vpop.permute.xlu0 %2855
      %2857 = vrot.lane.b32.xlu0 %v2485, 96
      %v2858 = vpop.permute.xlu0 %2857
      %2859 = vrot.lane.b32.xlu0 %v2486, 96
      %v2860 = vpop.permute.xlu0 %2859
      %2861 = vrot.lane.b32.xlu0 %v2487, 96
      %v2862 = vpop.permute.xlu0 %2861
      %2863 = vrot.lane.b32.xlu0 %v2488, 96
      %v2864 = vpop.permute.xlu0 %2863
      %2865 = vrot.lane.b32.xlu0 %v2489, 96
      %v2866 = vpop.permute.xlu0 %2865
      %2867 = vrot.lane.b32.xlu0 %v2490, 96
      %v2868 = vpop.permute.xlu0 %2867
      %2869 = vrot.lane.b32.xlu0 %v2491, 96
      %v2870 = vpop.permute.xlu0 %2869
      %2871 = vrot.lane.b32.xlu0 %v2492, 96
      %v2872 = vpop.permute.xlu0 %2871
      %2873 = vrot.lane.b32.xlu0 %v2493, 96
      %v2874 = vpop.permute.xlu0 %2873
      %2875 = vrot.lane.b32.xlu0 %v2494, 96
      %v2876 = vpop.permute.xlu0 %2875
      %2877 = vrot.lane.b32.xlu0 %v2495, 96
      %v2878 = vpop.permute.xlu0 %2877
      %2879 = vrot.lane.b32.xlu0 %v2496, 96
      %v2880 = vpop.permute.xlu0 %2879
      %v2897 = vsel %vm275, %v2369, %v2530
      %v2898 = vsel %vm275, %v2370, %v2532
      %v2899 = vsel %vm275, %v2371, %v2534
      %v2900 = vsel %vm275, %v2372, %v2536
      %v2901 = vsel %vm275, %v2373, %v2538
      %v2902 = vsel %vm275, %v2374, %v2540
      %v2903 = vsel %vm275, %v2375, %v2542
      %v2904 = vsel %vm275, %v2376, %v2544
      %v2905 = vsel %vm275, %v2377, %v2546
      %v2906 = vsel %vm275, %v2378, %v2548
      %v2907 = vsel %vm275, %v2379, %v2550
      %v2908 = vsel %vm275, %v2380, %v2552
      %v2909 = vsel %vm275, %v2381, %v2554
      %v2910 = vsel %vm275, %v2382, %v2556
      %v2911 = vsel %vm275, %v2383, %v2558
      %v2912 = vsel %vm275, %v2384, %v2560
      %v2913 = vsel %vm911, %v2897, %v2594
      %v2914 = vsel %vm911, %v2898, %v2596
      %v2915 = vsel %vm911, %v2899, %v2598
      %v2916 = vsel %vm911, %v2900, %v2600
      %v2917 = vsel %vm911, %v2901, %v2602
      %v2918 = vsel %vm911, %v2902, %v2604
      %v2919 = vsel %vm911, %v2903, %v2606
      %v2920 = vsel %vm911, %v2904, %v2608
      %v2921 = vsel %vm911, %v2905, %v2610
      %v2922 = vsel %vm911, %v2906, %v2612
      %v2923 = vsel %vm911, %v2907, %v2614
      %v2924 = vsel %vm911, %v2908, %v2616
      %v2925 = vsel %vm911, %v2909, %v2618
      %v2926 = vsel %vm911, %v2910, %v2620
      %v2927 = vsel %vm911, %v2911, %v2622
      %v2928 = vsel %vm911, %v2912, %v2624
      %v2929 = vsel %vm928, %v2913, %v2658
      %v2930 = vsel %vm928, %v2914, %v2660
      %v2931 = vsel %vm928, %v2915, %v2662
      %v2932 = vsel %vm928, %v2916, %v2664
      %v2933 = vsel %vm928, %v2917, %v2666
      %v2934 = vsel %vm928, %v2918, %v2668
      %v2935 = vsel %vm928, %v2919, %v2670
      %v2936 = vsel %vm928, %v2920, %v2672
      %v2937 = vsel %vm928, %v2921, %v2674
      %v2938 = vsel %vm928, %v2922, %v2676
      %v2939 = vsel %vm928, %v2923, %v2678
      %v2940 = vsel %vm928, %v2924, %v2680
      %v2941 = vsel %vm928, %v2925, %v2682
      %v2942 = vsel %vm928, %v2926, %v2684
      %v2943 = vsel %vm928, %v2927, %v2686
      %v2944 = vsel %vm928, %v2928, %v2688
      %v2945 = vsel %vm275, %v2433, %v2722
      %v2946 = vsel %vm275, %v2434, %v2724
      %v2947 = vsel %vm275, %v2435, %v2726
      %v2948 = vsel %vm275, %v2436, %v2728
      %v2949 = vsel %vm275, %v2437, %v2730
      %v2950 = vsel %vm275, %v2438, %v2732
      %v2951 = vsel %vm275, %v2439, %v2734
      %v2952 = vsel %vm275, %v2440, %v2736
      %v2953 = vsel %vm275, %v2441, %v2738
      %v2954 = vsel %vm275, %v2442, %v2740
      %v2955 = vsel %vm275, %v2443, %v2742
      %v2956 = vsel %vm275, %v2444, %v2744
      %v2957 = vsel %vm275, %v2445, %v2746
      %v2958 = vsel %vm275, %v2446, %v2748
      %v2959 = vsel %vm275, %v2447, %v2750
      %v2960 = vsel %vm275, %v2448, %v2752
      %v2961 = vsel %vm911, %v2945, %v2786
      %v2962 = vsel %vm911, %v2946, %v2788
      %v2963 = vsel %vm911, %v2947, %v2790
      %v2964 = vsel %vm911, %v2948, %v2792
      %v2965 = vsel %vm911, %v2949, %v2794
      %v2966 = vsel %vm911, %v2950, %v2796
      %v2967 = vsel %vm911, %v2951, %v2798
      %v2968 = vsel %vm911, %v2952, %v2800
      %v2969 = vsel %vm911, %v2953, %v2802
      %v2970 = vsel %vm911, %v2954, %v2804
      %v2971 = vsel %vm911, %v2955, %v2806
      %v2972 = vsel %vm911, %v2956, %v2808
      %v2973 = vsel %vm911, %v2957, %v2810
      %v2974 = vsel %vm911, %v2958, %v2812
      %v2975 = vsel %vm911, %v2959, %v2814
      %v2976 = vsel %vm911, %v2960, %v2816
      %v2977 = vsel %vm928, %v2961, %v2850
      %v2978 = vsel %vm928, %v2962, %v2852
      %v2979 = vsel %vm928, %v2963, %v2854
      %v2980 = vsel %vm928, %v2964, %v2856
      %v2981 = vsel %vm928, %v2965, %v2858
      %v2982 = vsel %vm928, %v2966, %v2860
      %v2983 = vsel %vm928, %v2967, %v2862
      %v2984 = vsel %vm928, %v2968, %v2864
      %v2985 = vsel %vm928, %v2969, %v2866
      %v2986 = vsel %vm928, %v2970, %v2868
      %v2987 = vsel %vm928, %v2971, %v2870
      %v2988 = vsel %vm928, %v2972, %v2872
      %v2989 = vsel %vm928, %v2973, %v2874
      %v2990 = vsel %vm928, %v2974, %v2876
      %v2991 = vsel %vm928, %v2975, %v2878
      %v2992 = vsel %vm928, %v2976, %v2880
      %v2993 = vpack.c.bf16 %v2930, %v2929
      %v2994 = vpack.c.bf16 %v2978, %v2977
      %v2995 = vpack.c.bf16 %v2498, %v2497
      %v2996 = vpack.c.bf16 %v2932, %v2931
      %v2997 = vpack.c.bf16 %v2980, %v2979
      %v2998 = vpack.c.bf16 %v2500, %v2499
      %v2999 = vpack.c.bf16 %v2934, %v2933
      %v3000 = vpack.c.bf16 %v2982, %v2981
      %v3001 = vpack.c.bf16 %v2502, %v2501
      %v3002 = vpack.c.bf16 %v2936, %v2935
      %v3003 = vpack.c.bf16 %v2984, %v2983
      %v3004 = vpack.c.bf16 %v2504, %v2503
      %v3005 = vpack.c.bf16 %v2938, %v2937
      %v3006 = vpack.c.bf16 %v2986, %v2985
      %v3007 = vpack.c.bf16 %v2506, %v2505
      %v3008 = vpack.c.bf16 %v2940, %v2939
      %v3009 = vpack.c.bf16 %v2988, %v2987
      %v3010 = vpack.c.bf16 %v2508, %v2507
      %v3011 = vpack.c.bf16 %v2942, %v2941
      %v3012 = vpack.c.bf16 %v2990, %v2989
      %v3013 = vpack.c.bf16 %v2510, %v2509
      %v3014 = vpack.c.bf16 %v2944, %v2943
      %v3015 = vpack.c.bf16 %v2992, %v2991
      %v3016 = vpack.c.bf16 %v2512, %v2511
      %s3017 = scalar_lea.vmem %s257, 288
      %v3018 = vld [vmem:[%s3017] sm:$0xf]
      %v3019 = vld [vmem:[%s3017 + $0x4] sm:$0xf]
      %v3020 = vld [vmem:[%s3017 + $0x8] sm:$0xf]
      %v3021 = vld [vmem:[%s3017 + $0xc] sm:$0xf]
      %v3022 = vld [vmem:[%s3017 + $0x10] sm:$0xf]
      %v3023 = vld [vmem:[%s3017 + $0x14] sm:$0xf]
      %v3024 = vld [vmem:[%s3017 + $0x18] sm:$0xf]
      %v3025 = vld [vmem:[%s3017 + $0x1c] sm:$0xf]
      %v3026 = vld [vmem:[%s3017 + $0x20] sm:$0xf]
      %v3027 = vld [vmem:[%s3017 + $0x24] sm:$0xf]
      %v3028 = vld [vmem:[%s3017 + $0x28] sm:$0xf]
      %v3029 = vld [vmem:[%s3017 + $0x2c] sm:$0xf]
      %v3030 = vld [vmem:[%s3017 + $0x30] sm:$0xf]
      %v3031 = vld [vmem:[%s3017 + $0x34] sm:$0xf]
      %v3032 = vld [vmem:[%s3017 + $0x38] sm:$0xf]
      %v3033 = vld [vmem:[%s3017 + $0x3c] sm:$0xf]
      %v3034 = vld [vmem:[%s3017 + $0x40] sm:$0xf]
      %v3035 = vld [vmem:[%s3017 + $0x44] sm:$0xf]
      %v3036 = vld [vmem:[%s3017 + $0x48] sm:$0xf]
      %v3037 = vld [vmem:[%s3017 + $0x4c] sm:$0xf]
      %v3038 = vld [vmem:[%s3017 + $0x50] sm:$0xf]
      %v3039 = vld [vmem:[%s3017 + $0x54] sm:$0xf]
      %v3040 = vld [vmem:[%s3017 + $0x58] sm:$0xf]
      %v3041 = vld [vmem:[%s3017 + $0x5c] sm:$0xf]
      %v3042 = vld [vmem:[%s3017 + $0x60] sm:$0xf]
      %v3043 = vld [vmem:[%s3017 + $0x64] sm:$0xf]
      %v3044 = vld [vmem:[%s3017 + $0x68] sm:$0xf]
      %v3045 = vld [vmem:[%s3017 + $0x6c] sm:$0xf]
      %v3046 = vld [vmem:[%s3017 + $0x70] sm:$0xf]
      %v3047 = vld [vmem:[%s3017 + $0x74] sm:$0xf]
      %v3048 = vld [vmem:[%s3017 + $0x78] sm:$0xf]
      %v3049 = vld [vmem:[%s3017 + $0x7c] sm:$0xf]
      %v3050 = vld [vmem:[%s3017 + $0x80] sm:$0xf]
      %v3051 = vld [vmem:[%s3017 + $0x84] sm:$0xf]
      %v3052 = vld [vmem:[%s3017 + $0x88] sm:$0xf]
      %v3053 = vld [vmem:[%s3017 + $0x8c] sm:$0xf]
      %s3054 = scalar_lea.vmem %s261, 2
      %v3055 = vld [vmem:[%s3054] sm:$0x1]
      %v3057 = vperm.slane %v3055, 0
      %v3095 = vunpack.c.l.b16 %v3018
      %v3096 = vunpack.c.l.b16 %v3019
      %v3097 = vunpack.c.l.b16 %v3020
      %v3098 = vunpack.c.l.b16 %v3021
      %v3099 = vunpack.c.l.b16 %v3022
      %v3100 = vunpack.c.l.b16 %v3023
      %v3101 = vunpack.c.l.b16 %v3024
      %v3102 = vunpack.c.l.b16 %v3025
      %v3103 = vunpack.c.l.b16 %v3026
      %v3104 = vunpack.c.l.b16 %v3027
      %v3105 = vunpack.c.l.b16 %v3028
      %v3106 = vunpack.c.l.b16 %v3029
      %v3107 = vunpack.c.l.b16 %v3030
      %v3108 = vunpack.c.l.b16 %v3031
      %v3109 = vunpack.c.l.b16 %v3032
      %v3110 = vunpack.c.l.b16 %v3033
      %v3111 = vunpack.c.l.b16 %v3034
      %v3112 = vunpack.c.l.b16 %v3035
      %v3113 = vunpack.c.l.b16 %v3036
      %v3114 = vunpack.c.l.b16 %v3037
      %v3115 = vunpack.c.l.b16 %v3038
      %v3116 = vunpack.c.l.b16 %v3039
      %v3117 = vunpack.c.l.b16 %v3040
      %v3118 = vunpack.c.l.b16 %v3041
      %v3119 = vunpack.c.l.b16 %v3042
      %v3120 = vunpack.c.l.b16 %v3043
      %v3121 = vunpack.c.l.b16 %v3044
      %v3122 = vunpack.c.l.b16 %v3045
      %v3123 = vunpack.c.l.b16 %v3046
      %v3124 = vunpack.c.l.b16 %v3047
      %v3125 = vunpack.c.l.b16 %v3048
      %v3126 = vunpack.c.l.b16 %v3049
      %v3127 = vunpack.c.l.b16 %v3050
      %v3128 = vunpack.c.l.b16 %v3051
      %v3129 = vunpack.c.l.b16 %v3052
      %v3130 = vunpack.c.l.b16 %v3053
      %v3131 = vpack.c.b16 %v3096, %v3095
      %v3132 = vpack.c.b16 %v3098, %v3097
      %v3133 = vpack.c.b16 %v3100, %v3099
      %v3134 = vpack.c.b16 %v3102, %v3101
      %v3135 = vpack.c.b16 %v3104, %v3103
      %v3136 = vpack.c.b16 %v3106, %v3105
      %v3137 = vpack.c.b16 %v3108, %v3107
      %v3138 = vpack.c.b16 %v3110, %v3109
      %v3139 = vpack.c.b16 %v3112, %v3111
      %v3140 = vpack.c.b16 %v3114, %v3113
      %v3141 = vpack.c.b16 %v3116, %v3115
      %v3142 = vpack.c.b16 %v3118, %v3117
      %v3143 = vpack.c.b16 %v3120, %v3119
      %v3144 = vpack.c.b16 %v3122, %v3121
      %v3145 = vpack.c.b16 %v3124, %v3123
      %v3146 = vpack.c.b16 %v3126, %v3125
      %v3147 = vpack.c.b16 %v3128, %v3127
      %v3148 = vpack.c.b16 %v3130, %v3129
      %v3168 = vsel %vm275, %v2995, 0
      %v3171 = vsel %vm275, %v2998, 0
      %v3174 = vsel %vm275, %v3001, 0
      %v3177 = vsel %vm275, %v3004, 0
      %v3180 = vsel %vm275, %v3007, 0
      %v3183 = vsel %vm275, %v3010, 0
      %v3186 = vsel %vm275, %v3013, 0
      %v3189 = vsel %vm275, %v3016, 0
      %3191 = vmatpush.bf16.msra.mxu0 %v3138
      %3192 = vmatpush.bf16.msra.mxu0 %v3137
      %3193 = vmatpush.bf16.msra.mxu0 %v3136
      %3194 = vmatpush.bf16.msra.mxu0 %v3135
      %3195 = vmatpush.bf16.msra.mxu0 %v3134
      %3196 = vmatpush.bf16.msra.mxu0 %v3133
      %3197 = vmatpush.bf16.msra.mxu0 %v3132
      %3198 = vmatpush.bf16.msra.mxu0 %v3131
      %3199 = vmatmul.bf16.gmra.mxu0 %v2993
      %v3200 = vpop.f32.mrf.mxu0
      %v3201 = vadd.f32 %v3057, %v3200
      %v3202 = vpop.f32.mrf.mxu0
      %v3203 = vadd.f32 %v3057, %v3202
      %3204 = vmatmul.bf16.gmra.mxu0 %v2996
      %v3205 = vpop.f32.mrf.mxu0
      %v3206 = vadd.f32 %v3057, %v3205
      %v3207 = vpop.f32.mrf.mxu0
      %v3208 = vadd.f32 %v3057, %v3207
      %3209 = vmatmul.bf16.gmra.mxu0 %v2999
      %v3210 = vpop.f32.mrf.mxu0
      %v3211 = vadd.f32 %v3057, %v3210
      %v3212 = vpop.f32.mrf.mxu0
      %v3213 = vadd.f32 %v3057, %v3212
      %3214 = vmatmul.bf16.gmra.mxu0 %v3002
      %v3215 = vpop.f32.mrf.mxu0
      %v3216 = vadd.f32 %v3057, %v3215
      %v3217 = vpop.f32.mrf.mxu0
      %v3218 = vadd.f32 %v3057, %v3217
      %3219 = vmatmul.bf16.gmra.mxu0 %v3005
      %v3220 = vpop.f32.mrf.mxu0
      %v3221 = vadd.f32 %v3057, %v3220
      %v3222 = vpop.f32.mrf.mxu0
      %v3223 = vadd.f32 %v3057, %v3222
      %3224 = vmatmul.bf16.gmra.mxu0 %v3008
      %v3225 = vpop.f32.mrf.mxu0
      %v3226 = vadd.f32 %v3057, %v3225
      %v3227 = vpop.f32.mrf.mxu0
      %v3228 = vadd.f32 %v3057, %v3227
      %3229 = vmatmul.bf16.gmra.mxu0 %v3011
      %v3230 = vpop.f32.mrf.mxu0
      %v3231 = vadd.f32 %v3057, %v3230
      %v3232 = vpop.f32.mrf.mxu0
      %v3233 = vadd.f32 %v3057, %v3232
      %3234 = vmatmul.bf16.gmra.mxu0 %v3014
      %v3235 = vpop.f32.mrf.mxu0
      %v3236 = vadd.f32 %v3057, %v3235
      %v3237 = vpop.f32.mrf.mxu0
      %v3238 = vadd.f32 %v3057, %v3237
      %3239 = vdwg.mxu0
      %3240 = vmatpush.bf16.msra.mxu0 %v3146
      %3241 = vmatpush.bf16.msra.mxu0 %v3145
      %3242 = vmatpush.bf16.msra.mxu0 %v3144
      %3243 = vmatpush.bf16.msra.mxu0 %v3143
      %3244 = vmatpush.bf16.msra.mxu0 %v3142
      %3245 = vmatpush.bf16.msra.mxu0 %v3141
      %3246 = vmatpush.bf16.msra.mxu0 %v3140
      %3247 = vmatpush.bf16.msra.mxu0 %v3139
      %3248 = vmatmul.bf16.gmra.mxu0 %v2994
      %v3249 = vpop.f32.mrf.mxu0
      %v3250 = vadd.f32 %v3201, %v3249
      %v3251 = vpop.f32.mrf.mxu0
      %v3252 = vadd.f32 %v3203, %v3251
      %3253 = vmatmul.bf16.gmra.mxu0 %v2997
      %v3254 = vpop.f32.mrf.mxu0
      %v3255 = vadd.f32 %v3206, %v3254
      %v3256 = vpop.f32.mrf.mxu0
      %v3257 = vadd.f32 %v3208, %v3256
      %3258 = vmatmul.bf16.gmra.mxu0 %v3000
      %v3259 = vpop.f32.mrf.mxu0
      %v3260 = vadd.f32 %v3211, %v3259
      %v3261 = vpop.f32.mrf.mxu0
      %v3262 = vadd.f32 %v3213, %v3261
      %3263 = vmatmul.bf16.gmra.mxu0 %v3003
      %v3264 = vpop.f32.mrf.mxu0
      %v3265 = vadd.f32 %v3216, %v3264
      %v3266 = vpop.f32.mrf.mxu0
      %v3267 = vadd.f32 %v3218, %v3266
      %3268 = vmatmul.bf16.gmra.mxu0 %v3006
      %v3269 = vpop.f32.mrf.mxu0
      %v3270 = vadd.f32 %v3221, %v3269
      %v3271 = vpop.f32.mrf.mxu0
      %v3272 = vadd.f32 %v3223, %v3271
      %3273 = vmatmul.bf16.gmra.mxu0 %v3009
      %v3274 = vpop.f32.mrf.mxu0
      %v3275 = vadd.f32 %v3226, %v3274
      %v3276 = vpop.f32.mrf.mxu0
      %v3277 = vadd.f32 %v3228, %v3276
      %3278 = vmatmul.bf16.gmra.mxu0 %v3012
      %v3279 = vpop.f32.mrf.mxu0
      %v3280 = vadd.f32 %v3231, %v3279
      %v3281 = vpop.f32.mrf.mxu0
      %v3282 = vadd.f32 %v3233, %v3281
      %3283 = vmatmul.bf16.gmra.mxu0 %v3015
      %v3284 = vpop.f32.mrf.mxu0
      %v3285 = vadd.f32 %v3236, %v3284
      %v3286 = vpop.f32.mrf.mxu0
      %v3287 = vadd.f32 %v3238, %v3286
      %3288 = vdwg.mxu0
      %3289 = vmatpush.bf16.msra.mxu0 0
      %3290 = vmatpush.bf16.msra.mxu0 0
      %3291 = vmatpush.bf16.msra.mxu0 0
      %3292 = vmatpush.bf16.msra.mxu0 0
      %3293 = vmatpush.bf16.msra.mxu0 0
      %3294 = vmatpush.bf16.msra.mxu0 0
      %3295 = vmatpush.bf16.msra.mxu0 %v3148
      %3296 = vmatpush.bf16.msra.mxu0 %v3147
      %3297 = vmatmul.bf16.gmra.mxu0 %v3168
      %v3298 = vpop.f32.mrf.mxu0
      %v3299 = vadd.f32 %v3250, %v3298
      %v3300 = vpop.f32.mrf.mxu0
      %v3301 = vadd.f32 %v3252, %v3300
      %3302 = vmatmul.bf16.gmra.mxu0 %v3171
      %v3303 = vpop.f32.mrf.mxu0
      %v3304 = vadd.f32 %v3255, %v3303
      %v3305 = vpop.f32.mrf.mxu0
      %v3306 = vadd.f32 %v3257, %v3305
      %3307 = vmatmul.bf16.gmra.mxu0 %v3174
      %v3308 = vpop.f32.mrf.mxu0
      %v3309 = vadd.f32 %v3260, %v3308
      %v3310 = vpop.f32.mrf.mxu0
      %v3311 = vadd.f32 %v3262, %v3310
      %3312 = vmatmul.bf16.gmra.mxu0 %v3177
      %v3313 = vpop.f32.mrf.mxu0
      %v3314 = vadd.f32 %v3265, %v3313
      %v3315 = vpop.f32.mrf.mxu0
      %v3316 = vadd.f32 %v3267, %v3315
      %3317 = vmatmul.bf16.gmra.mxu0 %v3180
      %v3318 = vpop.f32.mrf.mxu0
      %v3319 = vadd.f32 %v3270, %v3318
      %v3320 = vpop.f32.mrf.mxu0
      %v3321 = vadd.f32 %v3272, %v3320
      %3322 = vmatmul.bf16.gmra.mxu0 %v3183
      %v3323 = vpop.f32.mrf.mxu0
      %v3324 = vadd.f32 %v3275, %v3323
      %v3325 = vpop.f32.mrf.mxu0
      %v3326 = vadd.f32 %v3277, %v3325
      %3327 = vmatmul.bf16.gmra.mxu0 %v3186
      %v3328 = vpop.f32.mrf.mxu0
      %v3329 = vadd.f32 %v3280, %v3328
      %v3330 = vpop.f32.mrf.mxu0
      %v3331 = vadd.f32 %v3282, %v3330
      %3332 = vmatmul.bf16.gmra.mxu0 %v3189
      %v3333 = vpop.f32.mrf.mxu0
      %v3334 = vadd.f32 %v3285, %v3333
      %v3335 = vpop.f32.mrf.mxu0
      %v3336 = vadd.f32 %v3287, %v3335
      %3337 = vdwg.mxu0
      %v3338 = vmax.f32 %v3299, 0.0
      %v3339 = vmax.f32 %v3301, 0.0
      %v3340 = vmax.f32 %v3304, 0.0
      %v3341 = vmax.f32 %v3306, 0.0
      %v3342 = vmax.f32 %v3309, 0.0
      %v3343 = vmax.f32 %v3311, 0.0
      %v3344 = vmax.f32 %v3314, 0.0
      %v3345 = vmax.f32 %v3316, 0.0
      %v3346 = vmax.f32 %v3319, 0.0
      %v3347 = vmax.f32 %v3321, 0.0
      %v3348 = vmax.f32 %v3324, 0.0
      %v3349 = vmax.f32 %v3326, 0.0
      %v3350 = vmax.f32 %v3329, 0.0
      %v3351 = vmax.f32 %v3331, 0.0
      %v3352 = vmax.f32 %v3334, 0.0
      %v3353 = vmax.f32 %v3336, 0.0
      %v3354 = vsel %vm275, %v3338, 0.0
      %v3355 = vsel %vm275, %v3339, 0.0
      %v3356 = vadd.f32 %v3354, %v3355
      %v3357 = vsel %vm275, %v3340, 0.0
      %v3358 = vadd.f32 %v3356, %v3357
      %v3359 = vsel %vm275, %v3341, 0.0
      %v3360 = vadd.f32 %v3358, %v3359
      %v3361 = vsel %vm275, %v3342, 0.0
      %v3362 = vadd.f32 %v3360, %v3361
      %v3363 = vsel %vm275, %v3343, 0.0
      %v3364 = vadd.f32 %v3362, %v3363
      %v3365 = vsel %vm275, %v3344, 0.0
      %v3366 = vadd.f32 %v3364, %v3365
      %v3367 = vsel %vm275, %v3345, 0.0
      %v3368 = vadd.f32 %v3366, %v3367
      %v3369 = vrot.slane %v3368, 4
      %v3370 = vadd.f32 %v3368, %v3369
      %v3371 = vrot.slane %v3370, 2
      %v3372 = vadd.f32 %v3370, %v3371
      %v3373 = vrot.slane %v3372, 1
      %v3374 = vadd.f32 %v3372, %v3373
      %v3375 = vsel %vm275, %v3346, 0.0
      %v3376 = vsel %vm275, %v3347, 0.0
      %v3377 = vadd.f32 %v3375, %v3376
      %v3378 = vsel %vm275, %v3348, 0.0
      %v3379 = vadd.f32 %v3377, %v3378
      %v3380 = vsel %vm275, %v3349, 0.0
      %v3381 = vadd.f32 %v3379, %v3380
      %v3382 = vsel %vm275, %v3350, 0.0
      %v3383 = vadd.f32 %v3381, %v3382
      %v3384 = vsel %vm275, %v3351, 0.0
      %v3385 = vadd.f32 %v3383, %v3384
      %v3386 = vsel %vm275, %v3352, 0.0
      %v3387 = vadd.f32 %v3385, %v3386
      %v3388 = vsel %vm275, %v3353, 0.0
      %v3389 = vadd.f32 %v3387, %v3388
      %v3390 = vrot.slane %v3389, 4
      %v3391 = vadd.f32 %v3389, %v3390
      %v3392 = vrot.slane %v3391, 2
      %v3393 = vadd.f32 %v3391, %v3392
      %v3394 = vrot.slane %v3393, 1
      %v3395 = vadd.f32 %v3393, %v3394
      %v3396 = vmul.f32 %v3374, 0.015625
      %v3397 = vmul.f32 %v3395, 0.015625
      %v3398 = vld [vmem:[%s266] sm:$0xff]
      %v3399 = vld [vmem:[%s266 + $0x8] sm:$0xff]
      %v3400 = vld [vmem:[%s266 + $0x10] sm:$0xff]
      %v3401 = vld [vmem:[%s266 + $0x18] sm:$0xff]
      %v3402 = vld [vmem:[%s269] sm:$0x1]
      %v3404 = vperm.slane %v3402, 0
      %vm3408 = vcmask 1041409
      %v3409 = vsel %vm3408, %v3397, %v3396
      %v3410 = vsel %vm275, %v3409, 0
      %3412 = vmatpush.msra.mxu0 0.0
      %3413 = vmatpush.msra.mxu0 0.0
      %3414 = vmatpush.msra.mxu0 0.0
      %3415 = vmatpush.msra.mxu0 0.0
      %3416 = vmatpush.msra.mxu0 0.0
      %3417 = vmatpush.msra.mxu0 0.0
      %3418 = vmatpush.msra.mxu0 0.0
      %3419 = vmatpush.msra.mxu0 0.0
      %3420 = vmatpush.msra.mxu0 0.0
      %3421 = vmatpush.msra.mxu0 0.0
      %3422 = vmatpush.msra.mxu0 0.0
      %3423 = vmatpush.msra.mxu0 0.0
      %3424 = vmatpush.msra.mxu0 %v3401
      %3425 = vmatpush.msra.mxu0 %v3400
      %3426 = vmatpush.msra.mxu0 %v3399
      %3427 = vmatpush.msra.mxu0 %v3398
      %3428 = vmatmul.f32.gmra.mxu0 %v3410
      %v3429 = vpop.f32.mrf.mxu0
      %v3430 = vadd.f32 %v3404, %v3429
      %3431 = vdwg.mxu0
      %3432 = vst [vmem:[%s273] sm:$0x3] %v3430
      %p3433 = scmp.lt.s32.totalorder %s16, 2
      %s3434 = scalar_select %p3433, %s16, 2
      %s3435 = smul.addr %s3434, 2
      %s3436 = scalar_lea.vmem %s5, %s3435
      // Predicated region
      $region41: #{custom_model_forward.1} parent=39 // pred_check
        %p3437 = pneg %p159
      $region42: #{custom_model_forward.1} parent=39 // pred_check_branch
        %3439 = sbr.rel (%p3437) target = $region44
      $region43: #{custom_model_forward.1} parent=39 // pred_region
        _
      $region44: #{custom_model_forward.1} parent=39 // pred_fallthru
        _
    $region40: #{custom_model_forward.1} parent=5 // pred_fallthru
      _
    %p3440 = scmp.le.s32.totalorder 2, %s11
    // Predicated region
    $region45: #{custom_model_forward.1} parent=5 // pred_check
      %p3441 = pneg %p3440
    $region46: #{custom_model_forward.1} parent=5 // pred_check_branch
      %3443 = sbr.rel (%p3441) target = $region48
    $region47: #{custom_model_forward.1} parent=5 // pred_region
      %s3444 = ssub.s32 %s11, 2
      // Predicated region
      $region49: #{custom_model_forward.1} parent=47 // pred_check
        %p3445 = pneg %p165
      $region50: #{custom_model_forward.1} parent=47 // pred_check_branch
        %3447 = sbr.rel (%p3445) target = $region52
      $region51: #{custom_model_forward.1} parent=47 // pred_region
        %p3448 = scmp.lt.s32.totalorder %s17, 2
        %s3449 = scalar_select %p3448, %s17, 2
        %s3450 = smul.addr %s3449, 2
        %s3451 = scalar_lea.vmem %s5, %s3450
      $region52: #{custom_model_forward.1} parent=47 // pred_fallthru
        _
    $region48: #{custom_model_forward.1} parent=5 // pred_fallthru
      _
  $region6: #{custom_model_forward.1} parent=0 // loop_footer
    %s15 = sadd.s32 1, %s11
  $region7: #{custom_model_forward.1} parent=0 // loop_footer_branch
    %10 = sbr.rel target = $region3
  $region8: #{custom_model_forward.1} parent=0 // loop_exit
    _

</llo_original>
